<compile_context>
chip_gen: v5e
topology: v5e:2x2
jax: 0.10.0
libtpu: 0.0.40
codegen_flags: <defaults>
</compile_context>

<pallas_src>
import functools
import math

import jax
import jax.numpy as jnp
from jax import lax
from jax.experimental import pallas as pl
from jax.experimental.pallas import tpu as pltpu

HP = 128          # padded feature width (lanes)
NUM_LAYERS = 4    # en1, en2, de1, de2


def _sigmoid(x):
    # 1 EUP op (tanh) + cheap VPU ops instead of exp + reciprocal.
    return 0.5 * jnp.tanh(0.5 * x) + 0.5


def _fused_ae_kernel(x_ref, w_ih_ref, w_hh_ref, b_ref, out_ref,
                     act_sc, proj_sc, *, seq_len, batch, hp, unroll):
    """One grid step == one LSTM layer.

    x_ref    : (T*B, HP)      padded input, time-major rows [t*B : t*B+B] (resident)
    w_ih_ref : (HP, 4*HP)     this layer's W_ih^T, zero padded, bf16
    w_hh_ref : (HP, 4*HP)     this layer's W_hh^T, zero padded, bf16
    b_ref    : (1, 4*HP)      this layer's b_ih + b_hh, zero padded, f32
    out_ref  : (T*B, HP)      final output (written by every layer; layer 3 wins)
    act_sc   : (T*B, HP)      resident inter-layer activation stream (f32)
    proj_sc  : (T*B, 4*HP)    hoisted input projection for this layer (f32)
    """
    layer = pl.program_id(0)
    T, B = seq_len, batch

    # Load the padded input once into the resident activation buffer.
    @pl.when(layer == 0)
    def _():
        act_sc[...] = x_ref[...]

    # Hoisted input projection: one (T*B, HP) x (HP, 4HP) bf16 MXU matmul,
    # bias folded in here (single broadcast per layer, outside the time loop).
    proj_sc[...] = (
        jnp.dot(act_sc[...].astype(jnp.bfloat16), w_ih_ref[...],
                preferred_element_type=jnp.float32)
        + b_ref[...])

    def step(t, carry):
        h, c = carry
        row = pl.multiple_of(t * B, 8)            # sublane-aligned row offset
        gates = (proj_sc[pl.ds(row, B), :]
                 + jnp.dot(h.astype(jnp.bfloat16), w_hh_ref[...],
                           preferred_element_type=jnp.float32))
        # PyTorch gate order i, f, g, o; slices are 128-lane aligned.
        i = _sigmoid(gates[:, 0 * hp:1 * hp])
        f = _sigmoid(gates[:, 1 * hp:2 * hp])
        g = jnp.tanh(gates[:, 2 * hp:3 * hp])
        o = _sigmoid(gates[:, 3 * hp:4 * hp])
        c_new = f * c + i * g
        h_new = o * jnp.tanh(c_new)
        # Feed the next layer, and write the output stream directly
        # (layer 3's writes are the ones that survive -> no tail copy).
        act_sc[pl.ds(row, B), :] = h_new
        out_ref[pl.ds(row, B), :] = h_new
        return h_new, c_new

    zeros = jnp.zeros((B, hp), jnp.float32)
    lax.fori_loop(0, T, step, (zeros, zeros), unroll=unroll)

    # Module-level Tanh applies to en2's *output stream* only (layer index 1),
    # once over the whole buffer after the time loop (off the carry chain).
    # The recurrent carry of en2 stays un-tanh'd, matching nn.Module semantics.
    @pl.when(layer == 1)
    def _():
        act_sc[...] = jnp.tanh(act_sc[...])


# ----------------------------------------------------------------------------
# Parameter construction / padding
# ----------------------------------------------------------------------------
def init_lstm_params(key, input_size, hidden_size):
    """PyTorch-style U(-1/sqrt(H), 1/sqrt(H)) init (raw, unpadded, f32)."""
    k = 1.0 / math.sqrt(hidden_size)
    k0, k1, k2, k3 = jax.random.split(key, 4)
    w_ih = jax.random.uniform(k0, (4 * hidden_size, input_size),
                              jnp.float32, -k, k)
    w_hh = jax.random.uniform(k1, (4 * hidden_size, hidden_size),
                              jnp.float32, -k, k)
    b_ih = jax.random.uniform(k2, (4 * hidden_size,), jnp.float32, -k, k)
    b_hh = jax.random.uniform(k3, (4 * hidden_size,), jnp.float32, -k, k)
    return (w_ih, w_hh, b_ih, b_hh)


def _pad_layer(w_ih, w_hh, b_ih, b_hh):
    """Zero-pad each gate block to HP units and the input dim to HP lanes.

    Zero weight rows + zero bias for padded gate units keep the padded lanes
    of h and c at exactly 0 for the whole sequence (bf16 preserves exact
    zeros), so nothing leaks into the next layer.
    """
    four_h, in_dim = w_ih.shape
    H = four_h // 4
    assert H <= HP and in_dim <= HP and w_hh.shape[1] <= HP

    def pad_w(w):
        w = w.reshape(4, H, w.shape[-1]).astype(jnp.float32)
        w = jnp.pad(w, ((0, 0), (0, HP - H), (0, HP - w.shape[-1])))
        # (HP, 4*HP), ready for x @ W^T; bf16 matmul operand.
        return w.reshape(4 * HP, HP).T.astype(jnp.bfloat16)

    b = (b_ih + b_hh).reshape(4, H).astype(jnp.float32)
    b = jnp.pad(b, ((0, 0), (0, HP - H))).reshape(1, 4 * HP)
    return pad_w(w_ih), pad_w(w_hh), b


def prepare_params(raw):
    padded = [_pad_layer(*raw[name]) for name in ("en1", "en2", "de1", "de2")]
    return {
        "w_ih": jnp.stack([p[0] for p in padded]),   # (4, HP, 4*HP) bf16
        "w_hh": jnp.stack([p[1] for p in padded]),   # (4, HP, 4*HP) bf16
        "b":    jnp.stack([p[2] for p in padded]),   # (4, 1, 4*HP)  f32
    }


# ----------------------------------------------------------------------------
# Forward wrapper
# ----------------------------------------------------------------------------
def lstm_autoencoder_forward(x, prepared):
    """x: (T, B, input_size) -> (T, B, input_size). batch_first=False layout."""
    T, B, I = x.shape
    BP = max(8, ((B + 7) // 8) * 8)                 # pad batch to sublane count
    assert BP % 8 == 0                              # pl.multiple_of hint relies on this

    x_p = jnp.zeros((T, BP, HP), jnp.float32).at[:, :B, :I].set(x)
    x_p = x_p.reshape(T * BP, HP)                   # 2-D, lane-dense, tile-aligned

    # Full unroll for short sequences, partial unroll for long ones
    # (keeps LLO scheduling visibility without the code-size cliff).
    unroll = True if T <= 16 else 8

    kernel = functools.partial(
        _fused_ae_kernel, seq_len=T, batch=BP, hp=HP, unroll=unroll)

    grid_spec = pltpu.PrefetchScalarGridSpec(
        num_scalar_prefetch=0,
        grid=(NUM_LAYERS,),
        in_specs=[
            # Full input resident across all layers (loaded once).
            pl.BlockSpec((T * BP, HP), lambda l: (0, 0)),
            # Per-layer weight slabs: double-buffered by Pallas so the next
            # layer's weights stream in under the current layer's recurrence.
            pl.BlockSpec((None, HP, 4 * HP), lambda l: (l, 0, 0)),
            pl.BlockSpec((None, HP, 4 * HP), lambda l: (l, 0, 0)),
            pl.BlockSpec((None, 1, 4 * HP), lambda l: (l, 0, 0)),
        ],
        out_specs=pl.BlockSpec((T * BP, HP), lambda l: (0, 0)),
        scratch_shapes=[
            pltpu.VMEM((T * BP, HP), jnp.float32),       # activation stream
            pltpu.VMEM((T * BP, 4 * HP), jnp.float32),   # hoisted projection
        ],
    )

    out_p = pl.pallas_call(
        kernel,
        out_shape=jax.ShapeDtypeStruct((T * BP, HP), jnp.float32),
        grid_spec=grid_spec,
        compiler_params=pltpu.CompilerParams(
            dimension_semantics=("arbitrary",),     # layers are sequential
            # Explicit, generous-but-safe limit on all generations.  Note:
            # proj_sc is T*BP*2 KiB; for very long sequences tile the hoisted
            # projection over time instead of growing this scratch.
            vmem_limit_bytes=32 * 1024 * 1024),
    )(x_p, prepared["w_ih"], prepared["w_hh"], prepared["b"])

    return out_p.reshape(T, BP, HP)[:, :B, :I]


# ----------------------------------------------------------------------------
# Pure-JAX reference (for correctness check)
# ----------------------------------------------------------------------------
def _lstm_ref(x, w_ih, w_hh, b_ih, b_hh):
    T, B, _ = x.shape
    H = w_ih.shape[0] // 4

    def step(carry, x_t):
        h, c = carry
        gates = (jnp.dot(x_t, w_ih.T, precision=lax.Precision.HIGHEST)
                 + jnp.dot(h, w_hh.T, precision=lax.Precision.HIGHEST)
                 + b_ih + b_hh)
        i, f, g, o = jnp.split(gates, 4, axis=-1)
        c = jax.nn.sigmoid(f) * c + jax.nn.sigmoid(i) * jnp.tanh(g)
        h = jax.nn.sigmoid(o) * jnp.tanh(c)
        return (h, c), h

    init = (jnp.zeros((B, H), jnp.float32), jnp.zeros((B, H), jnp.float32))
    _, ys = lax.scan(step, init, x)
    return ys


def lstm_autoencoder_ref(x, raw):
    h = _lstm_ref(x, *raw["en1"])
    h = jnp.tanh(_lstm_ref(h, *raw["en2"]))
    h = _lstm_ref(h, *raw["de1"])
    return _lstm_ref(h, *raw["de2"])


if __name__ == "__main__":
    INPUT_SIZE = 16
    HIDDEN_SIZE = 32
    SEQ_LEN = 8
    BATCH = 2

    key = jax.random.PRNGKey(0)
    kx, kp = jax.random.split(key)
    # batch_first=False: (seq, batch, feature)
    x = jax.random.normal(kx, (SEQ_LEN, BATCH, INPUT_SIZE), jnp.float32)

    ks = jax.random.split(kp, 4)
    raw = {
        "en1": init_lstm_params(ks[0], INPUT_SIZE, 128),
        "en2": init_lstm_params(ks[1], 128, HIDDEN_SIZE),
        "de1": init_lstm_params(ks[2], HIDDEN_SIZE, 128),
        "de2": init_lstm_params(ks[3], 128, INPUT_SIZE),
    }
    prepared = prepare_params(raw)

    out = jax.jit(lstm_autoencoder_forward)(x, prepared)
    out = jax.block_until_ready(out)
    assert out.shape == (SEQ_LEN, BATCH, INPUT_SIZE), out.shape
    assert bool(jnp.all(jnp.isfinite(out)))

    ref = jax.block_until_ready(jax.jit(lstm_autoencoder_ref)(x, raw))
    # Tolerance loosened vs. the f32 HIGHEST reference because matmul
    # operands are bf16 (elementwise math stays f32).
    assert float(jnp.max(jnp.abs(out - ref))) < 2.5e-2

    print("KERNEL_OK")
</pallas_src>

<mosaic_0001>
module attributes {stable_mosaic.version = 11 : i64} {
  func.func @_fused_ae_kernel(%arg0: i32, %arg1: memref<64x128xf32, #tpu.memory_space<vmem>>, %arg2: memref<1x128x512xbf16, #tpu.memory_space<vmem>>, %arg3: memref<1x128x512xbf16, #tpu.memory_space<vmem>>, %arg4: memref<1x1x512xf32, #tpu.memory_space<vmem>>, %arg5: memref<64x128xf32, #tpu.memory_space<vmem>>, %arg6: memref<64x128xf32, #tpu.memory_space<vmem>>, %arg7: memref<64x512xf32, #tpu.memory_space<vmem>>) attributes {dimension_semantics = [#tpu.dimension_semantics<arbitrary>], iteration_bounds = array<i64: 4>, scalar_prefetch = 0 : i64, scratch_operands = 2 : i64, tpu.core_type = #tpu.core_type<tc>, window_params = [{pipeline_mode = #tpu.pipeline_mode<synchronous>, transform_indices = @transform_0, window_bounds = array<i64: 64, 128>}, {transform_indices = @transform_1, window_bounds = array<i64: 1, 128, 512>}, {transform_indices = @transform_2, window_bounds = array<i64: 1, 128, 512>}, {transform_indices = @transform_3, window_bounds = array<i64: 1, 1, 512>}, {pipeline_mode = #tpu.pipeline_mode<synchronous>, transform_indices = @transform_4, window_bounds = array<i64: 64, 128>}]} {
    %c0_i32 = arith.constant 0 : i32
    %0 = arith.cmpi eq, %arg0, %c0_i32 : i32
    %1 = arith.extui %0 : i1 to i32
    %c0_i32_0 = arith.constant 0 : i32
    %2 = arith.cmpi ne, %1, %c0_i32_0 : i32
    scf.if %2 {
      %c0_150 = arith.constant 0 : index
      %c0_151 = arith.constant 0 : index
      %369 = vector.load %arg1[%c0_150, %c0_151] : memref<64x128xf32, #tpu.memory_space<vmem>>, vector<64x128xf32>
      %c0_152 = arith.constant 0 : index
      %c0_153 = arith.constant 0 : index
      %370 = vector.load %arg6[%c0_152, %c0_153] : memref<64x128xf32, #tpu.memory_space<vmem>>, vector<64x128xf32>
      tpu.vector_store %arg6[%c0_152, %c0_153], %369 {strides = array<i32>} : memref<64x128xf32, #tpu.memory_space<vmem>>, vector<64x128xf32>,
    } else {
    }
    %c0 = arith.constant 0 : index
    %c0_1 = arith.constant 0 : index
    %3 = vector.load %arg6[%c0, %c0_1] : memref<64x128xf32, #tpu.memory_space<vmem>>, vector<64x128xf32>
    %4 = arith.truncf %3 : vector<64x128xf32> to vector<64x128xbf16>
    %c0_2 = arith.constant 0 : index
    %c0_3 = arith.constant 0 : index
    %c0_4 = arith.constant 0 : index
    %5 = vector.load %arg2[%c0_2, %c0_3, %c0_4] : memref<1x128x512xbf16, #tpu.memory_space<vmem>>, vector<1x128x512xbf16>
    %6 = vector.shape_cast %5 : vector<1x128x512xbf16> to vector<128x512xbf16>
    %cst = arith.constant dense<0.000000e+00> : vector<64x512xf32>
    %7 = tpu.matmul %4, %6, %cst {dimension_numbers = #tpu.dot_dimension_numbers<[1], [0], [0], [1], [0, 0, 1, 1], [], []>} : vector<64x128xbf16>, vector<128x512xbf16>, vector<64x512xf32> -> vector<64x512xf32>
    %c0_5 = arith.constant 0 : index
    %c0_6 = arith.constant 0 : index
    %c0_7 = arith.constant 0 : index
    %8 = vector.load %arg4[%c0_5, %c0_6, %c0_7] : memref<1x1x512xf32, #tpu.memory_space<vmem>>, vector<1x1x512xf32>
    %9 = vector.shape_cast %8 : vector<1x1x512xf32> to vector<1x512xf32>
    %10 = vector.broadcast %9 : vector<1x512xf32> to vector<64x512xf32>
    %11 = arith.addf %7, %10 : vector<64x512xf32>
    %c0_8 = arith.constant 0 : index
    %c0_9 = arith.constant 0 : index
    %12 = vector.load %arg7[%c0_8, %c0_9] : memref<64x512xf32, #tpu.memory_space<vmem>>, vector<64x512xf32>
    tpu.vector_store %arg7[%c0_8, %c0_9], %11 {strides = array<i32>} : memref<64x512xf32, #tpu.memory_space<vmem>>, vector<64x512xf32>,
    %cst_10 = arith.constant 0.000000e+00 : f32
    %13 = vector.broadcast %cst_10 : f32 to vector<8x128xf32>
    %c0_i32_11 = arith.constant 0 : i32
    %c8_i32 = arith.constant 8 : i32
    %14 = arith.muli %c0_i32_11, %c8_i32 : i32
    %15 = tpu.assume_multiple %14, 8 : i32
    %16 = arith.index_cast %15 : i32 to index
    %c0_12 = arith.constant 0 : index
    %17 = vector.load %arg7[%16, %c0_12] : memref<64x512xf32, #tpu.memory_space<vmem>>, vector<8x512xf32>
    %18 = arith.truncf %13 : vector<8x128xf32> to vector<8x128xbf16>
    %c0_13 = arith.constant 0 : index
    %c0_14 = arith.constant 0 : index
    %c0_15 = arith.constant 0 : index
    %19 = vector.load %arg3[%c0_13, %c0_14, %c0_15] : memref<1x128x512xbf16, #tpu.memory_space<vmem>>, vector<1x128x512xbf16>
    %20 = vector.shape_cast %19 : vector<1x128x512xbf16> to vector<128x512xbf16>
    %cst_16 = arith.constant dense<0.000000e+00> : vector<8x512xf32>
    %21 = tpu.matmul %18, %20, %cst_16 {dimension_numbers = #tpu.dot_dimension_numbers<[1], [0], [0], [1], [0, 0, 1, 1], [], []>} : vector<8x128xbf16>, vector<128x512xbf16>, vector<8x512xf32> -> vector<8x512xf32>
    %22 = arith.addf %17, %21 : vector<8x512xf32>
    %23 = vector.extract_strided_slice %22 {offsets = [0, 0], sizes = [8, 128], strides = [1, 1]} : vector<8x512xf32> to vector<8x128xf32>
    %cst_17 = arith.constant 5.000000e-01 : f32
    %24 = vector.broadcast %cst_17 : f32 to vector<8x128xf32>
    %25 = arith.mulf %24, %23 : vector<8x128xf32>
    %26 = math.tanh %25 : vector<8x128xf32>
    %cst_18 = arith.constant 5.000000e-01 : f32
    %27 = vector.broadcast %cst_18 : f32 to vector<8x128xf32>
    %28 = arith.mulf %27, %26 : vector<8x128xf32>
    %cst_19 = arith.constant 5.000000e-01 : f32
    %29 = vector.broadcast %cst_19 : f32 to vector<8x128xf32>
    %30 = arith.addf %28, %29 : vector<8x128xf32>
    %31 = vector.extract_strided_slice %22 {offsets = [0, 128], sizes = [8, 128], strides = [1, 1]} : vector<8x512xf32> to vector<8x128xf32>
    %cst_20 = arith.constant 5.000000e-01 : f32
    %32 = vector.broadcast %cst_20 : f32 to vector<8x128xf32>
    %33 = arith.mulf %32, %31 : vector<8x128xf32>
    %34 = math.tanh %33 : vector<8x128xf32>
    %cst_21 = arith.constant 5.000000e-01 : f32
    %35 = vector.broadcast %cst_21 : f32 to vector<8x128xf32>
    %36 = arith.mulf %35, %34 : vector<8x128xf32>
    %cst_22 = arith.constant 5.000000e-01 : f32
    %37 = vector.broadcast %cst_22 : f32 to vector<8x128xf32>
    %38 = arith.addf %36, %37 : vector<8x128xf32>
    %39 = vector.extract_strided_slice %22 {offsets = [0, 256], sizes = [8, 128], strides = [1, 1]} : vector<8x512xf32> to vector<8x128xf32>
    %40 = math.tanh %39 : vector<8x128xf32>
    %41 = vector.extract_strided_slice %22 {offsets = [0, 384], sizes = [8, 128], strides = [1, 1]} : vector<8x512xf32> to vector<8x128xf32>
    %cst_23 = arith.constant 5.000000e-01 : f32
    %42 = vector.broadcast %cst_23 : f32 to vector<8x128xf32>
    %43 = arith.mulf %42, %41 : vector<8x128xf32>
    %44 = math.tanh %43 : vector<8x128xf32>
    %cst_24 = arith.constant 5.000000e-01 : f32
    %45 = vector.broadcast %cst_24 : f32 to vector<8x128xf32>
    %46 = arith.mulf %45, %44 : vector<8x128xf32>
    %cst_25 = arith.constant 5.000000e-01 : f32
    %47 = vector.broadcast %cst_25 : f32 to vector<8x128xf32>
    %48 = arith.addf %46, %47 : vector<8x128xf32>
    %49 = arith.mulf %38, %13 : vector<8x128xf32>
    %50 = arith.mulf %30, %40 : vector<8x128xf32>
    %51 = arith.addf %49, %50 : vector<8x128xf32>
    %52 = math.tanh %51 : vector<8x128xf32>
    %53 = arith.mulf %48, %52 : vector<8x128xf32>
    %54 = arith.index_cast %15 : i32 to index
    %c0_26 = arith.constant 0 : index
    %55 = vector.load %arg6[%54, %c0_26] : memref<64x128xf32, #tpu.memory_space<vmem>>, vector<8x128xf32>
    tpu.vector_store %arg6[%54, %c0_26], %53 {strides = array<i32>} : memref<64x128xf32, #tpu.memory_space<vmem>>, vector<8x128xf32>,
    %56 = arith.index_cast %15 : i32 to index
    %c0_27 = arith.constant 0 : index
    %57 = vector.load %arg5[%56, %c0_27] : memref<64x128xf32, #tpu.memory_space<vmem>>, vector<8x128xf32>
    tpu.vector_store %arg5[%56, %c0_27], %53 {strides = array<i32>} : memref<64x128xf32, #tpu.memory_space<vmem>>, vector<8x128xf32>,
    %c1_i32 = arith.constant 1 : i32
    %c8_i32_28 = arith.constant 8 : i32
    %58 = arith.muli %c1_i32, %c8_i32_28 : i32
    %59 = tpu.assume_multiple %58, 8 : i32
    %60 = arith.index_cast %59 : i32 to index
    %c0_29 = arith.constant 0 : index
    %61 = vector.load %arg7[%60, %c0_29] : memref<64x512xf32, #tpu.memory_space<vmem>>, vector<8x512xf32>
    %62 = arith.truncf %53 : vector<8x128xf32> to vector<8x128xbf16>
    %c0_30 = arith.constant 0 : index
    %c0_31 = arith.constant 0 : index
    %c0_32 = arith.constant 0 : index
    %63 = vector.load %arg3[%c0_30, %c0_31, %c0_32] : memref<1x128x512xbf16, #tpu.memory_space<vmem>>, vector<1x128x512xbf16>
    %64 = vector.shape_cast %63 : vector<1x128x512xbf16> to vector<128x512xbf16>
    %cst_33 = arith.constant dense<0.000000e+00> : vector<8x512xf32>
    %65 = tpu.matmul %62, %64, %cst_33 {dimension_numbers = #tpu.dot_dimension_numbers<[1], [0], [0], [1], [0, 0, 1, 1], [], []>} : vector<8x128xbf16>, vector<128x512xbf16>, vector<8x512xf32> -> vector<8x512xf32>
    %66 = arith.addf %61, %65 : vector<8x512xf32>
    %67 = vector.extract_strided_slice %66 {offsets = [0, 0], sizes = [8, 128], strides = [1, 1]} : vector<8x512xf32> to vector<8x128xf32>
    %cst_34 = arith.constant 5.000000e-01 : f32
    %68 = vector.broadcast %cst_34 : f32 to vector<8x128xf32>
    %69 = arith.mulf %68, %67 : vector<8x128xf32>
    %70 = math.tanh %69 : vector<8x128xf32>
    %cst_35 = arith.constant 5.000000e-01 : f32
    %71 = vector.broadcast %cst_35 : f32 to vector<8x128xf32>
    %72 = arith.mulf %71, %70 : vector<8x128xf32>
    %cst_36 = arith.constant 5.000000e-01 : f32
    %73 = vector.broadcast %cst_36 : f32 to vector<8x128xf32>
    %74 = arith.addf %72, %73 : vector<8x128xf32>
    %75 = vector.extract_strided_slice %66 {offsets = [0, 128], sizes = [8, 128], strides = [1, 1]} : vector<8x512xf32> to vector<8x128xf32>
    %cst_37 = arith.constant 5.000000e-01 : f32
    %76 = vector.broadcast %cst_37 : f32 to vector<8x128xf32>
    %77 = arith.mulf %76, %75 : vector<8x128xf32>
    %78 = math.tanh %77 : vector<8x128xf32>
    %cst_38 = arith.constant 5.000000e-01 : f32
    %79 = vector.broadcast %cst_38 : f32 to vector<8x128xf32>
    %80 = arith.mulf %79, %78 : vector<8x128xf32>
    %cst_39 = arith.constant 5.000000e-01 : f32
    %81 = vector.broadcast %cst_39 : f32 to vector<8x128xf32>
    %82 = arith.addf %80, %81 : vector<8x128xf32>
    %83 = vector.extract_strided_slice %66 {offsets = [0, 256], sizes = [8, 128], strides = [1, 1]} : vector<8x512xf32> to vector<8x128xf32>
    %84 = math.tanh %83 : vector<8x128xf32>
    %85 = vector.extract_strided_slice %66 {offsets = [0, 384], sizes = [8, 128], strides = [1, 1]} : vector<8x512xf32> to vector<8x128xf32>
    %cst_40 = arith.constant 5.000000e-01 : f32
    %86 = vector.broadcast %cst_40 : f32 to vector<8x128xf32>
    %87 = arith.mulf %86, %85 : vector<8x128xf32>
    %88 = math.tanh %87 : vector<8x128xf32>
    %cst_41 = arith.constant 5.000000e-01 : f32
    %89 = vector.broadcast %cst_41 : f32 to vector<8x128xf32>
    %90 = arith.mulf %89, %88 : vector<8x128xf32>
    %cst_42 = arith.constant 5.000000e-01 : f32
    %91 = vector.broadcast %cst_42 : f32 to vector<8x128xf32>
    %92 = arith.addf %90, %91 : vector<8x128xf32>
    %93 = arith.mulf %82, %51 : vector<8x128xf32>
    %94 = arith.mulf %74, %84 : vector<8x128xf32>
    %95 = arith.addf %93, %94 : vector<8x128xf32>
    %96 = math.tanh %95 : vector<8x128xf32>
    %97 = arith.mulf %92, %96 : vector<8x128xf32>
    %98 = arith.index_cast %59 : i32 to index
    %c0_43 = arith.constant 0 : index
    %99 = vector.load %arg6[%98, %c0_43] : memref<64x128xf32, #tpu.memory_space<vmem>>, vector<8x128xf32>
    tpu.vector_store %arg6[%98, %c0_43], %97 {strides = array<i32>} : memref<64x128xf32, #tpu.memory_space<vmem>>, vector<8x128xf32>,
    %100 = arith.index_cast %59 : i32 to index
    %c0_44 = arith.constant 0 : index
    %101 = vector.load %arg5[%100, %c0_44] : memref<64x128xf32, #tpu.memory_space<vmem>>, vector<8x128xf32>
    tpu.vector_store %arg5[%100, %c0_44], %97 {strides = array<i32>} : memref<64x128xf32, #tpu.memory_space<vmem>>, vector<8x128xf32>,
    %c2_i32 = arith.constant 2 : i32
    %c8_i32_45 = arith.constant 8 : i32
    %102 = arith.muli %c2_i32, %c8_i32_45 : i32
    %103 = tpu.assume_multiple %102, 8 : i32
    %104 = arith.index_cast %103 : i32 to index
    %c0_46 = arith.constant 0 : index
    %105 = vector.load %arg7[%104, %c0_46] : memref<64x512xf32, #tpu.memory_space<vmem>>, vector<8x512xf32>
    %106 = arith.truncf %97 : vector<8x128xf32> to vector<8x128xbf16>
    %c0_47 = arith.constant 0 : index
    %c0_48 = arith.constant 0 : index
    %c0_49 = arith.constant 0 : index
    %107 = vector.load %arg3[%c0_47, %c0_48, %c0_49] : memref<1x128x512xbf16, #tpu.memory_space<vmem>>, vector<1x128x512xbf16>
    %108 = vector.shape_cast %107 : vector<1x128x512xbf16> to vector<128x512xbf16>
    %cst_50 = arith.constant dense<0.000000e+00> : vector<8x512xf32>
    %109 = tpu.matmul %106, %108, %cst_50 {dimension_numbers = #tpu.dot_dimension_numbers<[1], [0], [0], [1], [0, 0, 1, 1], [], []>} : vector<8x128xbf16>, vector<128x512xbf16>, vector<8x512xf32> -> vector<8x512xf32>
    %110 = arith.addf %105, %109 : vector<8x512xf32>
    %111 = vector.extract_strided_slice %110 {offsets = [0, 0], sizes = [8, 128], strides = [1, 1]} : vector<8x512xf32> to vector<8x128xf32>
    %cst_51 = arith.constant 5.000000e-01 : f32
    %112 = vector.broadcast %cst_51 : f32 to vector<8x128xf32>
    %113 = arith.mulf %112, %111 : vector<8x128xf32>
    %114 = math.tanh %113 : vector<8x128xf32>
    %cst_52 = arith.constant 5.000000e-01 : f32
    %115 = vector.broadcast %cst_52 : f32 to vector<8x128xf32>
    %116 = arith.mulf %115, %114 : vector<8x128xf32>
    %cst_53 = arith.constant 5.000000e-01 : f32
    %117 = vector.broadcast %cst_53 : f32 to vector<8x128xf32>
    %118 = arith.addf %116, %117 : vector<8x128xf32>
    %119 = vector.extract_strided_slice %110 {offsets = [0, 128], sizes = [8, 128], strides = [1, 1]} : vector<8x512xf32> to vector<8x128xf32>
    %cst_54 = arith.constant 5.000000e-01 : f32
    %120 = vector.broadcast %cst_54 : f32 to vector<8x128xf32>
    %121 = arith.mulf %120, %119 : vector<8x128xf32>
    %122 = math.tanh %121 : vector<8x128xf32>
    %cst_55 = arith.constant 5.000000e-01 : f32
    %123 = vector.broadcast %cst_55 : f32 to vector<8x128xf32>
    %124 = arith.mulf %123, %122 : vector<8x128xf32>
    %cst_56 = arith.constant 5.000000e-01 : f32
    %125 = vector.broadcast %cst_56 : f32 to vector<8x128xf32>
    %126 = arith.addf %124, %125 : vector<8x128xf32>
    %127 = vector.extract_strided_slice %110 {offsets = [0, 256], sizes = [8, 128], strides = [1, 1]} : vector<8x512xf32> to vector<8x128xf32>
    %128 = math.tanh %127 : vector<8x128xf32>
    %129 = vector.extract_strided_slice %110 {offsets = [0, 384], sizes = [8, 128], strides = [1, 1]} : vector<8x512xf32> to vector<8x128xf32>
    %cst_57 = arith.constant 5.000000e-01 : f32
    %130 = vector.broadcast %cst_57 : f32 to vector<8x128xf32>
    %131 = arith.mulf %130, %129 : vector<8x128xf32>
    %132 = math.tanh %131 : vector<8x128xf32>
    %cst_58 = arith.constant 5.000000e-01 : f32
    %133 = vector.broadcast %cst_58 : f32 to vector<8x128xf32>
    %134 = arith.mulf %133, %132 : vector<8x128xf32>
    %cst_59 = arith.constant 5.000000e-01 : f32
    %135 = vector.broadcast %cst_59 : f32 to vector<8x128xf32>
    %136 = arith.addf %134, %135 : vector<8x128xf32>
    %137 = arith.mulf %126, %95 : vector<8x128xf32>
    %138 = arith.mulf %118, %128 : vector<8x128xf32>
    %139 = arith.addf %137, %138 : vector<8x128xf32>
    %140 = math.tanh %139 : vector<8x128xf32>
    %141 = arith.mulf %136, %140 : vector<8x128xf32>
    %142 = arith.index_cast %103 : i32 to index
    %c0_60 = arith.constant 0 : index
    %143 = vector.load %arg6[%142, %c0_60] : memref<64x128xf32, #tpu.memory_space<vmem>>, vector<8x128xf32>
    tpu.vector_store %arg6[%142, %c0_60], %141 {strides = array<i32>} : memref<64x128xf32, #tpu.memory_space<vmem>>, vector<8x128xf32>,
    %144 = arith.index_cast %103 : i32 to index
    %c0_61 = arith.constant 0 : index
    %145 = vector.load %arg5[%144, %c0_61] : memref<64x128xf32, #tpu.memory_space<vmem>>, vector<8x128xf32>
    tpu.vector_store %arg5[%144, %c0_61], %141 {strides = array<i32>} : memref<64x128xf32, #tpu.memory_space<vmem>>, vector<8x128xf32>,
    %c3_i32 = arith.constant 3 : i32
    %c8_i32_62 = arith.constant 8 : i32
    %146 = arith.muli %c3_i32, %c8_i32_62 : i32
    %147 = tpu.assume_multiple %146, 8 : i32
    %148 = arith.index_cast %147 : i32 to index
    %c0_63 = arith.constant 0 : index
    %149 = vector.load %arg7[%148, %c0_63] : memref<64x512xf32, #tpu.memory_space<vmem>>, vector<8x512xf32>
    %150 = arith.truncf %141 : vector<8x128xf32> to vector<8x128xbf16>
    %c0_64 = arith.constant 0 : index
    %c0_65 = arith.constant 0 : index
    %c0_66 = arith.constant 0 : index
    %151 = vector.load %arg3[%c0_64, %c0_65, %c0_66] : memref<1x128x512xbf16, #tpu.memory_space<vmem>>, vector<1x128x512xbf16>
    %152 = vector.shape_cast %151 : vector<1x128x512xbf16> to vector<128x512xbf16>
    %cst_67 = arith.constant dense<0.000000e+00> : vector<8x512xf32>
    %153 = tpu.matmul %150, %152, %cst_67 {dimension_numbers = #tpu.dot_dimension_numbers<[1], [0], [0], [1], [0, 0, 1, 1], [], []>} : vector<8x128xbf16>, vector<128x512xbf16>, vector<8x512xf32> -> vector<8x512xf32>
    %154 = arith.addf %149, %153 : vector<8x512xf32>
    %155 = vector.extract_strided_slice %154 {offsets = [0, 0], sizes = [8, 128], strides = [1, 1]} : vector<8x512xf32> to vector<8x128xf32>
    %cst_68 = arith.constant 5.000000e-01 : f32
    %156 = vector.broadcast %cst_68 : f32 to vector<8x128xf32>
    %157 = arith.mulf %156, %155 : vector<8x128xf32>
    %158 = math.tanh %157 : vector<8x128xf32>
    %cst_69 = arith.constant 5.000000e-01 : f32
    %159 = vector.broadcast %cst_69 : f32 to vector<8x128xf32>
    %160 = arith.mulf %159, %158 : vector<8x128xf32>
    %cst_70 = arith.constant 5.000000e-01 : f32
    %161 = vector.broadcast %cst_70 : f32 to vector<8x128xf32>
    %162 = arith.addf %160, %161 : vector<8x128xf32>
    %163 = vector.extract_strided_slice %154 {offsets = [0, 128], sizes = [8, 128], strides = [1, 1]} : vector<8x512xf32> to vector<8x128xf32>
    %cst_71 = arith.constant 5.000000e-01 : f32
    %164 = vector.broadcast %cst_71 : f32 to vector<8x128xf32>
    %165 = arith.mulf %164, %163 : vector<8x128xf32>
    %166 = math.tanh %165 : vector<8x128xf32>
    %cst_72 = arith.constant 5.000000e-01 : f32
    %167 = vector.broadcast %cst_72 : f32 to vector<8x128xf32>
    %168 = arith.mulf %167, %166 : vector<8x128xf32>
    %cst_73 = arith.constant 5.000000e-01 : f32
    %169 = vector.broadcast %cst_73 : f32 to vector<8x128xf32>
    %170 = arith.addf %168, %169 : vector<8x128xf32>
    %171 = vector.extract_strided_slice %154 {offsets = [0, 256], sizes = [8, 128], strides = [1, 1]} : vector<8x512xf32> to vector<8x128xf32>
    %172 = math.tanh %171 : vector<8x128xf32>
    %173 = vector.extract_strided_slice %154 {offsets = [0, 384], sizes = [8, 128], strides = [1, 1]} : vector<8x512xf32> to vector<8x128xf32>
    %cst_74 = arith.constant 5.000000e-01 : f32
    %174 = vector.broadcast %cst_74 : f32 to vector<8x128xf32>
    %175 = arith.mulf %174, %173 : vector<8x128xf32>
    %176 = math.tanh %175 : vector<8x128xf32>
    %cst_75 = arith.constant 5.000000e-01 : f32
    %177 = vector.broadcast %cst_75 : f32 to vector<8x128xf32>
    %178 = arith.mulf %177, %176 : vector<8x128xf32>
    %cst_76 = arith.constant 5.000000e-01 : f32
    %179 = vector.broadcast %cst_76 : f32 to vector<8x128xf32>
    %180 = arith.addf %178, %179 : vector<8x128xf32>
    %181 = arith.mulf %170, %139 : vector<8x128xf32>
    %182 = arith.mulf %162, %172 : vector<8x128xf32>
    %183 = arith.addf %181, %182 : vector<8x128xf32>
    %184 = math.tanh %183 : vector<8x128xf32>
    %185 = arith.mulf %180, %184 : vector<8x128xf32>
    %186 = arith.index_cast %147 : i32 to index
    %c0_77 = arith.constant 0 : index
    %187 = vector.load %arg6[%186, %c0_77] : memref<64x128xf32, #tpu.memory_space<vmem>>, vector<8x128xf32>
    tpu.vector_store %arg6[%186, %c0_77], %185 {strides = array<i32>} : memref<64x128xf32, #tpu.memory_space<vmem>>, vector<8x128xf32>,
    %188 = arith.index_cast %147 : i32 to index
    %c0_78 = arith.constant 0 : index
    %189 = vector.load %arg5[%188, %c0_78] : memref<64x128xf32, #tpu.memory_space<vmem>>, vector<8x128xf32>
    tpu.vector_store %arg5[%188, %c0_78], %185 {strides = array<i32>} : memref<64x128xf32, #tpu.memory_space<vmem>>, vector<8x128xf32>,
    %c4_i32 = arith.constant 4 : i32
    %c8_i32_79 = arith.constant 8 : i32
    %190 = arith.muli %c4_i32, %c8_i32_79 : i32
    %191 = tpu.assume_multiple %190, 8 : i32
    %192 = arith.index_cast %191 : i32 to index
    %c0_80 = arith.constant 0 : index
    %193 = vector.load %arg7[%192, %c0_80] : memref<64x512xf32, #tpu.memory_space<vmem>>, vector<8x512xf32>
    %194 = arith.truncf %185 : vector<8x128xf32> to vector<8x128xbf16>
    %c0_81 = arith.constant 0 : index
    %c0_82 = arith.constant 0 : index
    %c0_83 = arith.constant 0 : index
    %195 = vector.load %arg3[%c0_81, %c0_82, %c0_83] : memref<1x128x512xbf16, #tpu.memory_space<vmem>>, vector<1x128x512xbf16>
    %196 = vector.shape_cast %195 : vector<1x128x512xbf16> to vector<128x512xbf16>
    %cst_84 = arith.constant dense<0.000000e+00> : vector<8x512xf32>
    %197 = tpu.matmul %194, %196, %cst_84 {dimension_numbers = #tpu.dot_dimension_numbers<[1], [0], [0], [1], [0, 0, 1, 1], [], []>} : vector<8x128xbf16>, vector<128x512xbf16>, vector<8x512xf32> -> vector<8x512xf32>
    %198 = arith.addf %193, %197 : vector<8x512xf32>
    %199 = vector.extract_strided_slice %198 {offsets = [0, 0], sizes = [8, 128], strides = [1, 1]} : vector<8x512xf32> to vector<8x128xf32>
    %cst_85 = arith.constant 5.000000e-01 : f32
    %200 = vector.broadcast %cst_85 : f32 to vector<8x128xf32>
    %201 = arith.mulf %200, %199 : vector<8x128xf32>
    %202 = math.tanh %201 : vector<8x128xf32>
    %cst_86 = arith.constant 5.000000e-01 : f32
    %203 = vector.broadcast %cst_86 : f32 to vector<8x128xf32>
    %204 = arith.mulf %203, %202 : vector<8x128xf32>
    %cst_87 = arith.constant 5.000000e-01 : f32
    %205 = vector.broadcast %cst_87 : f32 to vector<8x128xf32>
    %206 = arith.addf %204, %205 : vector<8x128xf32>
    %207 = vector.extract_strided_slice %198 {offsets = [0, 128], sizes = [8, 128], strides = [1, 1]} : vector<8x512xf32> to vector<8x128xf32>
    %cst_88 = arith.constant 5.000000e-01 : f32
    %208 = vector.broadcast %cst_88 : f32 to vector<8x128xf32>
    %209 = arith.mulf %208, %207 : vector<8x128xf32>
    %210 = math.tanh %209 : vector<8x128xf32>
    %cst_89 = arith.constant 5.000000e-01 : f32
    %211 = vector.broadcast %cst_89 : f32 to vector<8x128xf32>
    %212 = arith.mulf %211, %210 : vector<8x128xf32>
    %cst_90 = arith.constant 5.000000e-01 : f32
    %213 = vector.broadcast %cst_90 : f32 to vector<8x128xf32>
    %214 = arith.addf %212, %213 : vector<8x128xf32>
    %215 = vector.extract_strided_slice %198 {offsets = [0, 256], sizes = [8, 128], strides = [1, 1]} : vector<8x512xf32> to vector<8x128xf32>
    %216 = math.tanh %215 : vector<8x128xf32>
    %217 = vector.extract_strided_slice %198 {offsets = [0, 384], sizes = [8, 128], strides = [1, 1]} : vector<8x512xf32> to vector<8x128xf32>
    %cst_91 = arith.constant 5.000000e-01 : f32
    %218 = vector.broadcast %cst_91 : f32 to vector<8x128xf32>
    %219 = arith.mulf %218, %217 : vector<8x128xf32>
    %220 = math.tanh %219 : vector<8x128xf32>
    %cst_92 = arith.constant 5.000000e-01 : f32
    %221 = vector.broadcast %cst_92 : f32 to vector<8x128xf32>
    %222 = arith.mulf %221, %220 : vector<8x128xf32>
    %cst_93 = arith.constant 5.000000e-01 : f32
    %223 = vector.broadcast %cst_93 : f32 to vector<8x128xf32>
    %224 = arith.addf %222, %223 : vector<8x128xf32>
    %225 = arith.mulf %214, %183 : vector<8x128xf32>
    %226 = arith.mulf %206, %216 : vector<8x128xf32>
    %227 = arith.addf %225, %226 : vector<8x128xf32>
    %228 = math.tanh %227 : vector<8x128xf32>
    %229 = arith.mulf %224, %228 : vector<8x128xf32>
    %230 = arith.index_cast %191 : i32 to index
    %c0_94 = arith.constant 0 : index
    %231 = vector.load %arg6[%230, %c0_94] : memref<64x128xf32, #tpu.memory_space<vmem>>, vector<8x128xf32>
    tpu.vector_store %arg6[%230, %c0_94], %229 {strides = array<i32>} : memref<64x128xf32, #tpu.memory_space<vmem>>, vector<8x128xf32>,
    %232 = arith.index_cast %191 : i32 to index
    %c0_95 = arith.constant 0 : index
    %233 = vector.load %arg5[%232, %c0_95] : memref<64x128xf32, #tpu.memory_space<vmem>>, vector<8x128xf32>
    tpu.vector_store %arg5[%232, %c0_95], %229 {strides = array<i32>} : memref<64x128xf32, #tpu.memory_space<vmem>>, vector<8x128xf32>,
    %c5_i32 = arith.constant 5 : i32
    %c8_i32_96 = arith.constant 8 : i32
    %234 = arith.muli %c5_i32, %c8_i32_96 : i32
    %235 = tpu.assume_multiple %234, 8 : i32
    %236 = arith.index_cast %235 : i32 to index
    %c0_97 = arith.constant 0 : index
    %237 = vector.load %arg7[%236, %c0_97] : memref<64x512xf32, #tpu.memory_space<vmem>>, vector<8x512xf32>
    %238 = arith.truncf %229 : vector<8x128xf32> to vector<8x128xbf16>
    %c0_98 = arith.constant 0 : index
    %c0_99 = arith.constant 0 : index
    %c0_100 = arith.constant 0 : index
    %239 = vector.load %arg3[%c0_98, %c0_99, %c0_100] : memref<1x128x512xbf16, #tpu.memory_space<vmem>>, vector<1x128x512xbf16>
    %240 = vector.shape_cast %239 : vector<1x128x512xbf16> to vector<128x512xbf16>
    %cst_101 = arith.constant dense<0.000000e+00> : vector<8x512xf32>
    %241 = tpu.matmul %238, %240, %cst_101 {dimension_numbers = #tpu.dot_dimension_numbers<[1], [0], [0], [1], [0, 0, 1, 1], [], []>} : vector<8x128xbf16>, vector<128x512xbf16>, vector<8x512xf32> -> vector<8x512xf32>
    %242 = arith.addf %237, %241 : vector<8x512xf32>
    %243 = vector.extract_strided_slice %242 {offsets = [0, 0], sizes = [8, 128], strides = [1, 1]} : vector<8x512xf32> to vector<8x128xf32>
    %cst_102 = arith.constant 5.000000e-01 : f32
    %244 = vector.broadcast %cst_102 : f32 to vector<8x128xf32>
    %245 = arith.mulf %244, %243 : vector<8x128xf32>
    %246 = math.tanh %245 : vector<8x128xf32>
    %cst_103 = arith.constant 5.000000e-01 : f32
    %247 = vector.broadcast %cst_103 : f32 to vector<8x128xf32>
    %248 = arith.mulf %247, %246 : vector<8x128xf32>
    %cst_104 = arith.constant 5.000000e-01 : f32
    %249 = vector.broadcast %cst_104 : f32 to vector<8x128xf32>
    %250 = arith.addf %248, %249 : vector<8x128xf32>
    %251 = vector.extract_strided_slice %242 {offsets = [0, 128], sizes = [8, 128], strides = [1, 1]} : vector<8x512xf32> to vector<8x128xf32>
    %cst_105 = arith.constant 5.000000e-01 : f32
    %252 = vector.broadcast %cst_105 : f32 to vector<8x128xf32>
    %253 = arith.mulf %252, %251 : vector<8x128xf32>
    %254 = math.tanh %253 : vector<8x128xf32>
    %cst_106 = arith.constant 5.000000e-01 : f32
    %255 = vector.broadcast %cst_106 : f32 to vector<8x128xf32>
    %256 = arith.mulf %255, %254 : vector<8x128xf32>
    %cst_107 = arith.constant 5.000000e-01 : f32
    %257 = vector.broadcast %cst_107 : f32 to vector<8x128xf32>
    %258 = arith.addf %256, %257 : vector<8x128xf32>
    %259 = vector.extract_strided_slice %242 {offsets = [0, 256], sizes = [8, 128], strides = [1, 1]} : vector<8x512xf32> to vector<8x128xf32>
    %260 = math.tanh %259 : vector<8x128xf32>
    %261 = vector.extract_strided_slice %242 {offsets = [0, 384], sizes = [8, 128], strides = [1, 1]} : vector<8x512xf32> to vector<8x128xf32>
    %cst_108 = arith.constant 5.000000e-01 : f32
    %262 = vector.broadcast %cst_108 : f32 to vector<8x128xf32>
    %263 = arith.mulf %262, %261 : vector<8x128xf32>
    %264 = math.tanh %263 : vector<8x128xf32>
    %cst_109 = arith.constant 5.000000e-01 : f32
    %265 = vector.broadcast %cst_109 : f32 to vector<8x128xf32>
    %266 = arith.mulf %265, %264 : vector<8x128xf32>
    %cst_110 = arith.constant 5.000000e-01 : f32
    %267 = vector.broadcast %cst_110 : f32 to vector<8x128xf32>
    %268 = arith.addf %266, %267 : vector<8x128xf32>
    %269 = arith.mulf %258, %227 : vector<8x128xf32>
    %270 = arith.mulf %250, %260 : vector<8x128xf32>
    %271 = arith.addf %269, %270 : vector<8x128xf32>
    %272 = math.tanh %271 : vector<8x128xf32>
    %273 = arith.mulf %268, %272 : vector<8x128xf32>
    %274 = arith.index_cast %235 : i32 to index
    %c0_111 = arith.constant 0 : index
    %275 = vector.load %arg6[%274, %c0_111] : memref<64x128xf32, #tpu.memory_space<vmem>>, vector<8x128xf32>
    tpu.vector_store %arg6[%274, %c0_111], %273 {strides = array<i32>} : memref<64x128xf32, #tpu.memory_space<vmem>>, vector<8x128xf32>,
    %276 = arith.index_cast %235 : i32 to index
    %c0_112 = arith.constant 0 : index
    %277 = vector.load %arg5[%276, %c0_112] : memref<64x128xf32, #tpu.memory_space<vmem>>, vector<8x128xf32>
    tpu.vector_store %arg5[%276, %c0_112], %273 {strides = array<i32>} : memref<64x128xf32, #tpu.memory_space<vmem>>, vector<8x128xf32>,
    %c6_i32 = arith.constant 6 : i32
    %c8_i32_113 = arith.constant 8 : i32
    %278 = arith.muli %c6_i32, %c8_i32_113 : i32
    %279 = tpu.assume_multiple %278, 8 : i32
    %280 = arith.index_cast %279 : i32 to index
    %c0_114 = arith.constant 0 : index
    %281 = vector.load %arg7[%280, %c0_114] : memref<64x512xf32, #tpu.memory_space<vmem>>, vector<8x512xf32>
    %282 = arith.truncf %273 : vector<8x128xf32> to vector<8x128xbf16>
    %c0_115 = arith.constant 0 : index
    %c0_116 = arith.constant 0 : index
    %c0_117 = arith.constant 0 : index
    %283 = vector.load %arg3[%c0_115, %c0_116, %c0_117] : memref<1x128x512xbf16, #tpu.memory_space<vmem>>, vector<1x128x512xbf16>
    %284 = vector.shape_cast %283 : vector<1x128x512xbf16> to vector<128x512xbf16>
    %cst_118 = arith.constant dense<0.000000e+00> : vector<8x512xf32>
    %285 = tpu.matmul %282, %284, %cst_118 {dimension_numbers = #tpu.dot_dimension_numbers<[1], [0], [0], [1], [0, 0, 1, 1], [], []>} : vector<8x128xbf16>, vector<128x512xbf16>, vector<8x512xf32> -> vector<8x512xf32>
    %286 = arith.addf %281, %285 : vector<8x512xf32>
    %287 = vector.extract_strided_slice %286 {offsets = [0, 0], sizes = [8, 128], strides = [1, 1]} : vector<8x512xf32> to vector<8x128xf32>
    %cst_119 = arith.constant 5.000000e-01 : f32
    %288 = vector.broadcast %cst_119 : f32 to vector<8x128xf32>
    %289 = arith.mulf %288, %287 : vector<8x128xf32>
    %290 = math.tanh %289 : vector<8x128xf32>
    %cst_120 = arith.constant 5.000000e-01 : f32
    %291 = vector.broadcast %cst_120 : f32 to vector<8x128xf32>
    %292 = arith.mulf %291, %290 : vector<8x128xf32>
    %cst_121 = arith.constant 5.000000e-01 : f32
    %293 = vector.broadcast %cst_121 : f32 to vector<8x128xf32>
    %294 = arith.addf %292, %293 : vector<8x128xf32>
    %295 = vector.extract_strided_slice %286 {offsets = [0, 128], sizes = [8, 128], strides = [1, 1]} : vector<8x512xf32> to vector<8x128xf32>
    %cst_122 = arith.constant 5.000000e-01 : f32
    %296 = vector.broadcast %cst_122 : f32 to vector<8x128xf32>
    %297 = arith.mulf %296, %295 : vector<8x128xf32>
    %298 = math.tanh %297 : vector<8x128xf32>
    %cst_123 = arith.constant 5.000000e-01 : f32
    %299 = vector.broadcast %cst_123 : f32 to vector<8x128xf32>
    %300 = arith.mulf %299, %298 : vector<8x128xf32>
    %cst_124 = arith.constant 5.000000e-01 : f32
    %301 = vector.broadcast %cst_124 : f32 to vector<8x128xf32>
    %302 = arith.addf %300, %301 : vector<8x128xf32>
    %303 = vector.extract_strided_slice %286 {offsets = [0, 256], sizes = [8, 128], strides = [1, 1]} : vector<8x512xf32> to vector<8x128xf32>
    %304 = math.tanh %303 : vector<8x128xf32>
    %305 = vector.extract_strided_slice %286 {offsets = [0, 384], sizes = [8, 128], strides = [1, 1]} : vector<8x512xf32> to vector<8x128xf32>
    %cst_125 = arith.constant 5.000000e-01 : f32
    %306 = vector.broadcast %cst_125 : f32 to vector<8x128xf32>
    %307 = arith.mulf %306, %305 : vector<8x128xf32>
    %308 = math.tanh %307 : vector<8x128xf32>
    %cst_126 = arith.constant 5.000000e-01 : f32
    %309 = vector.broadcast %cst_126 : f32 to vector<8x128xf32>
    %310 = arith.mulf %309, %308 : vector<8x128xf32>
    %cst_127 = arith.constant 5.000000e-01 : f32
    %311 = vector.broadcast %cst_127 : f32 to vector<8x128xf32>
    %312 = arith.addf %310, %311 : vector<8x128xf32>
    %313 = arith.mulf %302, %271 : vector<8x128xf32>
    %314 = arith.mulf %294, %304 : vector<8x128xf32>
    %315 = arith.addf %313, %314 : vector<8x128xf32>
    %316 = math.tanh %315 : vector<8x128xf32>
    %317 = arith.mulf %312, %316 : vector<8x128xf32>
    %318 = arith.index_cast %279 : i32 to index
    %c0_128 = arith.constant 0 : index
    %319 = vector.load %arg6[%318, %c0_128] : memref<64x128xf32, #tpu.memory_space<vmem>>, vector<8x128xf32>
    tpu.vector_store %arg6[%318, %c0_128], %317 {strides = array<i32>} : memref<64x128xf32, #tpu.memory_space<vmem>>, vector<8x128xf32>,
    %320 = arith.index_cast %279 : i32 to index
    %c0_129 = arith.constant 0 : index
    %321 = vector.load %arg5[%320, %c0_129] : memref<64x128xf32, #tpu.memory_space<vmem>>, vector<8x128xf32>
    tpu.vector_store %arg5[%320, %c0_129], %317 {strides = array<i32>} : memref<64x128xf32, #tpu.memory_space<vmem>>, vector<8x128xf32>,
    %c7_i32 = arith.constant 7 : i32
    %c8_i32_130 = arith.constant 8 : i32
    %322 = arith.muli %c7_i32, %c8_i32_130 : i32
    %323 = tpu.assume_multiple %322, 8 : i32
    %324 = arith.index_cast %323 : i32 to index
    %c0_131 = arith.constant 0 : index
    %325 = vector.load %arg7[%324, %c0_131] : memref<64x512xf32, #tpu.memory_space<vmem>>, vector<8x512xf32>
    %326 = arith.truncf %317 : vector<8x128xf32> to vector<8x128xbf16>
    %c0_132 = arith.constant 0 : index
    %c0_133 = arith.constant 0 : index
    %c0_134 = arith.constant 0 : index
    %327 = vector.load %arg3[%c0_132, %c0_133, %c0_134] : memref<1x128x512xbf16, #tpu.memory_space<vmem>>, vector<1x128x512xbf16>
    %328 = vector.shape_cast %327 : vector<1x128x512xbf16> to vector<128x512xbf16>
    %cst_135 = arith.constant dense<0.000000e+00> : vector<8x512xf32>
    %329 = tpu.matmul %326, %328, %cst_135 {dimension_numbers = #tpu.dot_dimension_numbers<[1], [0], [0], [1], [0, 0, 1, 1], [], []>} : vector<8x128xbf16>, vector<128x512xbf16>, vector<8x512xf32> -> vector<8x512xf32>
    %330 = arith.addf %325, %329 : vector<8x512xf32>
    %331 = vector.extract_strided_slice %330 {offsets = [0, 0], sizes = [8, 128], strides = [1, 1]} : vector<8x512xf32> to vector<8x128xf32>
    %cst_136 = arith.constant 5.000000e-01 : f32
    %332 = vector.broadcast %cst_136 : f32 to vector<8x128xf32>
    %333 = arith.mulf %332, %331 : vector<8x128xf32>
    %334 = math.tanh %333 : vector<8x128xf32>
    %cst_137 = arith.constant 5.000000e-01 : f32
    %335 = vector.broadcast %cst_137 : f32 to vector<8x128xf32>
    %336 = arith.mulf %335, %334 : vector<8x128xf32>
    %cst_138 = arith.constant 5.000000e-01 : f32
    %337 = vector.broadcast %cst_138 : f32 to vector<8x128xf32>
    %338 = arith.addf %336, %337 : vector<8x128xf32>
    %339 = vector.extract_strided_slice %330 {offsets = [0, 128], sizes = [8, 128], strides = [1, 1]} : vector<8x512xf32> to vector<8x128xf32>
    %cst_139 = arith.constant 5.000000e-01 : f32
    %340 = vector.broadcast %cst_139 : f32 to vector<8x128xf32>
    %341 = arith.mulf %340, %339 : vector<8x128xf32>
    %342 = math.tanh %341 : vector<8x128xf32>
    %cst_140 = arith.constant 5.000000e-01 : f32
    %343 = vector.broadcast %cst_140 : f32 to vector<8x128xf32>
    %344 = arith.mulf %343, %342 : vector<8x128xf32>
    %cst_141 = arith.constant 5.000000e-01 : f32
    %345 = vector.broadcast %cst_141 : f32 to vector<8x128xf32>
    %346 = arith.addf %344, %345 : vector<8x128xf32>
    %347 = vector.extract_strided_slice %330 {offsets = [0, 256], sizes = [8, 128], strides = [1, 1]} : vector<8x512xf32> to vector<8x128xf32>
    %348 = math.tanh %347 : vector<8x128xf32>
    %349 = vector.extract_strided_slice %330 {offsets = [0, 384], sizes = [8, 128], strides = [1, 1]} : vector<8x512xf32> to vector<8x128xf32>
    %cst_142 = arith.constant 5.000000e-01 : f32
    %350 = vector.broadcast %cst_142 : f32 to vector<8x128xf32>
    %351 = arith.mulf %350, %349 : vector<8x128xf32>
    %352 = math.tanh %351 : vector<8x128xf32>
    %cst_143 = arith.constant 5.000000e-01 : f32
    %353 = vector.broadcast %cst_143 : f32 to vector<8x128xf32>
    %354 = arith.mulf %353, %352 : vector<8x128xf32>
    %cst_144 = arith.constant 5.000000e-01 : f32
    %355 = vector.broadcast %cst_144 : f32 to vector<8x128xf32>
    %356 = arith.addf %354, %355 : vector<8x128xf32>
    %357 = arith.mulf %346, %315 : vector<8x128xf32>
    %358 = arith.mulf %338, %348 : vector<8x128xf32>
    %359 = arith.addf %357, %358 : vector<8x128xf32>
    %360 = math.tanh %359 : vector<8x128xf32>
    %361 = arith.mulf %356, %360 : vector<8x128xf32>
    %362 = arith.index_cast %323 : i32 to index
    %c0_145 = arith.constant 0 : index
    %363 = vector.load %arg6[%362, %c0_145] : memref<64x128xf32, #tpu.memory_space<vmem>>, vector<8x128xf32>
    tpu.vector_store %arg6[%362, %c0_145], %361 {strides = array<i32>} : memref<64x128xf32, #tpu.memory_space<vmem>>, vector<8x128xf32>,
    %364 = arith.index_cast %323 : i32 to index
    %c0_146 = arith.constant 0 : index
    %365 = vector.load %arg5[%364, %c0_146] : memref<64x128xf32, #tpu.memory_space<vmem>>, vector<8x128xf32>
    tpu.vector_store %arg5[%364, %c0_146], %361 {strides = array<i32>} : memref<64x128xf32, #tpu.memory_space<vmem>>, vector<8x128xf32>,
    %c8_i32_147 = arith.constant 8 : i32
    %c1_i32_148 = arith.constant 1 : i32
    %366 = arith.cmpi eq, %arg0, %c1_i32_148 : i32
    %367 = arith.extui %366 : i1 to i32
    %c0_i32_149 = arith.constant 0 : i32
    %368 = arith.cmpi ne, %367, %c0_i32_149 : i32
    scf.if %368 {
      %c0_150 = arith.constant 0 : index
      %c0_151 = arith.constant 0 : index
      %369 = vector.load %arg6[%c0_150, %c0_151] : memref<64x128xf32, #tpu.memory_space<vmem>>, vector<64x128xf32>
      %370 = math.tanh %369 : vector<64x128xf32>
      %c0_152 = arith.constant 0 : index
      %c0_153 = arith.constant 0 : index
      %371 = vector.load %arg6[%c0_152, %c0_153] : memref<64x128xf32, #tpu.memory_space<vmem>>, vector<64x128xf32>
      tpu.vector_store %arg6[%c0_152, %c0_153], %370 {strides = array<i32>} : memref<64x128xf32, #tpu.memory_space<vmem>>, vector<64x128xf32>,
    } else {
    }
    return
  }
  func.func @transform_0(%arg0: i32) -> (i32, i32) {
    %c0_i32 = arith.constant 0 : i32
    %c0_i32_0 = arith.constant 0 : i32
    %c0_i32_1 = arith.constant 0 : i32
    return %c0_i32, %c0_i32_0 : i32, i32
  }
  func.func @transform_1(%arg0: i32) -> (i32, i32, i32) {
    %c0_i32 = arith.constant 0 : i32
    %c0_i32_0 = arith.constant 0 : i32
    %c0_i32_1 = arith.constant 0 : i32
    return %arg0, %c0_i32, %c0_i32_0 : i32, i32, i32
  }
  func.func @transform_2(%arg0: i32) -> (i32, i32, i32) {
    %c0_i32 = arith.constant 0 : i32
    %c0_i32_0 = arith.constant 0 : i32
    %c0_i32_1 = arith.constant 0 : i32
    return %arg0, %c0_i32, %c0_i32_0 : i32, i32, i32
  }
  func.func @transform_3(%arg0: i32) -> (i32, i32, i32) {
    %c0_i32 = arith.constant 0 : i32
    %c0_i32_0 = arith.constant 0 : i32
    %c0_i32_1 = arith.constant 0 : i32
    return %arg0, %c0_i32, %c0_i32_0 : i32, i32, i32
  }
  func.func @transform_4(%arg0: i32) -> (i32, i32) {
    %c0_i32 = arith.constant 0 : i32
    %c0_i32_0 = arith.constant 0 : i32
    %c0_i32_1 = arith.constant 0 : i32
    return %c0_i32, %c0_i32_0 : i32, i32
  }
}

</mosaic_0001>

<llo_original>
// kernel: lstm_autoencoder_forward.1
$region0: #{lstm_autoencoder_forward.1}
  #allocation0 [shape = 'u32[]', space=smem, size = 0x4, offset = 0x4, fixed_abs, tag = 'smem constant byte address 0x4 - core index']
  #allocation1 [shape = 'u32[72,128]{1,0:T(1,128)}', space=vmem, size = 0x9000, scoped, tag = 'internal scratch']
  #allocation2 [shape = 'f32[64,128]{1,0:T(8,128)}', space=vmem, size = 0x8000, scoped, tag = 'scratch operand']
  #allocation3 [shape = 'f32[64,512]{1,0:T(8,128)}', space=vmem, size = 0x20000, scoped, tag = 'scratch operand']
  %s0 = inlined_call_operand.vmem [shape: f32[64,128], index: 0, kind: input, shape index: {}]
  %s1 = inlined_call_operand.hbm [shape: bf16[4,128,512], index: 1, kind: input, shape index: {}]
  %s2 = inlined_call_operand.hbm [shape: bf16[4,128,512], index: 2, kind: input, shape index: {}]
  %s3 = inlined_call_operand.vmem [shape: f32[4,1,512], index: 3, kind: input, shape index: {}]
  %s4 = inlined_call_operand.vmem [shape: f32[64,128], index: 4, kind: output, shape index: {}]
  %s5 = sld [smem:[#allocation0]]
  $region65: #{lstm_autoencoder_forward.1} parent=0
    _
  %s7 = ssub.s32 1, %s5
  %s8 = scalar_select 0, %s7, %s5
  $region1: #{lstm_autoencoder_forward.1} parent=0
    #allocation4 [shape = 'u8[262144]{0}', space=vmem, size = 0x40000, scoped, tag = 'input window, operand 1']
    #allocation5 [shape = 's32[2]{0}', space=sflag, size = 0x8, scoped, tag = 'scoped memory for lstm_autoencoder_forward.1']
    #allocation6 [shape = 'u8[262144]{0}', space=vmem, size = 0x40000, scoped, tag = 'input window, operand 2']
    #allocation7 [shape = 's32[2]{0}', space=sflag, size = 0x8, scoped, tag = 'scoped memory for lstm_autoencoder_forward.1']
    %9 = vsyncpa [#allocation5], 0
    %s10 = scalar_lea.sflag [#allocation5], 1
    %11 = vsyncpa %s10, 0
    %12 = vsyncpa [#allocation7], 0
    %s13 = scalar_lea.sflag [#allocation7], 1
    %14 = vsyncpa %s13, 0
    loop: start=0, step=1, limit=6
    $region2: #{lstm_autoencoder_forward.1} parent=1 // loop_pre_header
      _
    $region3: #{lstm_autoencoder_forward.1} parent=1 // loop_header
      %s16 = sphi 0, %s20
      %p17 = scmp.ge.s32.totalorder %s16, 6
      %s24 = sphi 0, %s24
      %s26 = sphi 0, %s24
      %s27 = sphi 0, %s26
      %s41 = sphi 0, %s27
      %s47 = sphi 0, %s49
      %s50 = sphi 0, %s47
      %s51 = sphi 0, %s50
      %s67 = sphi 0, %s51
      %s73 = sphi 0, %s75
      %s76 = sphi 0, %s73
      %s77 = sphi 0, %s76
      %s93 = sphi 0, %s77
      %s99 = sphi 0, %s101
      %s102 = sphi 0, %s99
      %s103 = sphi 0, %s102
      %s119 = sphi 0, %s103
      %s123 = sphi 0, %s123
      %s125 = sphi 0, %s123
      %s126 = sphi 0, %s125
      %s140 = sphi 0, %s126
    $region4: #{lstm_autoencoder_forward.1} parent=1 // loop_header_branch
      %19 = sbr.rel (%p17) target = $region8
    $region5: #{lstm_autoencoder_forward.1} parent=1 // loop_body
      %s21 = ssub.s32 %s16, 1
      %s22 = ssub.s32 %s16, 2
      %s23 = sadd.s32 %s16, 1
      %s25 = sadd.s32 %s24, 1
      %p28 = scmp.eq.s32.totalorder %s16, 3
      %p29 = scmp.ne.s32.totalorder %s24, %s26
      %p30 = scmp.eq.s32.totalorder %s16, 0
      %p31 = por %p29, %p30
      %p32 = scmp.ne.s32.totalorder %s24, %s26
      %p33 = scmp.eq.s32.totalorder %s21, 3
      %p34 = por %p32, %p33
      %p35 = scmp.ne.s32.totalorder %s26, %s27
      %p36 = scmp.eq.s32.totalorder %s21, 0
      %p37 = por %p35, %p36
      %p38 = scmp.ne.s32.totalorder %s26, %s27
      %p39 = scmp.eq.s32.totalorder %s22, 3
      %p40 = por %p38, %p39
      %p42 = scmp.ne.s32.totalorder %s27, %s41
      %p43 = scmp.eq.s32.totalorder %s22, 0
      %p44 = por %p42, %p43
      %s45 = ssub.s32 %s16, %s23
      %p46 = scmp.eq.s32.totalorder %s45, 0
      %s48 = sadd.s32 %s47, 1
      %s49 = scalar_select %p46, %s47, %s48
      %p52 = pneg %p46
      %p53 = scmp.eq.s32.totalorder %s16, 3
      %p54 = por %p52, %p53
      %p55 = scmp.ne.s32.totalorder %s47, %s50
      %p56 = scmp.eq.s32.totalorder %s16, 0
      %p57 = por %p55, %p56
      %p58 = scmp.ne.s32.totalorder %s47, %s50
      %p59 = scmp.eq.s32.totalorder %s21, 3
      %p60 = por %p58, %p59
      %p61 = scmp.ne.s32.totalorder %s50, %s51
      %p62 = scmp.eq.s32.totalorder %s21, 0
      %p63 = por %p61, %p62
      %p64 = scmp.ne.s32.totalorder %s50, %s51
      %p65 = scmp.eq.s32.totalorder %s22, 3
      %p66 = por %p64, %p65
      %p68 = scmp.ne.s32.totalorder %s51, %s67
      %p69 = scmp.eq.s32.totalorder %s22, 0
      %p70 = por %p68, %p69
      %s71 = ssub.s32 %s16, %s23
      %p72 = scmp.eq.s32.totalorder %s71, 0
      %s74 = sadd.s32 %s73, 1
      %s75 = scalar_select %p72, %s73, %s74
      %p78 = pneg %p72
      %p79 = scmp.eq.s32.totalorder %s16, 3
      %p80 = por %p78, %p79
      %p81 = scmp.ne.s32.totalorder %s73, %s76
      %p82 = scmp.eq.s32.totalorder %s16, 0
      %p83 = por %p81, %p82
      %p84 = scmp.ne.s32.totalorder %s73, %s76
      %p85 = scmp.eq.s32.totalorder %s21, 3
      %p86 = por %p84, %p85
      %p87 = scmp.ne.s32.totalorder %s76, %s77
      %p88 = scmp.eq.s32.totalorder %s21, 0
      %p89 = por %p87, %p88
      %p90 = scmp.ne.s32.totalorder %s76, %s77
      %p91 = scmp.eq.s32.totalorder %s22, 3
      %p92 = por %p90, %p91
      %p94 = scmp.ne.s32.totalorder %s77, %s93
      %p95 = scmp.eq.s32.totalorder %s22, 0
      %p96 = por %p94, %p95
      %s97 = ssub.s32 %s16, %s23
      %p98 = scmp.eq.s32.totalorder %s97, 0
      %s100 = sadd.s32 %s99, 1
      %s101 = scalar_select %p98, %s99, %s100
      %p104 = pneg %p98
      %p105 = scmp.eq.s32.totalorder %s16, 3
      %p106 = por %p104, %p105
      %p107 = scmp.ne.s32.totalorder %s99, %s102
      %p108 = scmp.eq.s32.totalorder %s16, 0
      %p109 = por %p107, %p108
      %p110 = scmp.ne.s32.totalorder %s99, %s102
      %p111 = scmp.eq.s32.totalorder %s21, 3
      %p112 = por %p110, %p111
      %p113 = scmp.ne.s32.totalorder %s102, %s103
      %p114 = scmp.eq.s32.totalorder %s21, 0
      %p115 = por %p113, %p114
      %p116 = scmp.ne.s32.totalorder %s102, %s103
      %p117 = scmp.eq.s32.totalorder %s22, 3
      %p118 = por %p116, %p117
      %p120 = scmp.ne.s32.totalorder %s103, %s119
      %p121 = scmp.eq.s32.totalorder %s22, 0
      %p122 = por %p120, %p121
      %s124 = sadd.s32 %s123, 1
      %p127 = scmp.eq.s32.totalorder %s16, 3
      %p128 = scmp.ne.s32.totalorder %s123, %s125
      %p129 = scmp.eq.s32.totalorder %s16, 0
      %p130 = por %p128, %p129
      %p131 = scmp.ne.s32.totalorder %s123, %s125
      %p132 = scmp.eq.s32.totalorder %s21, 3
      %p133 = por %p131, %p132
      %p134 = scmp.ne.s32.totalorder %s125, %s126
      %p135 = scmp.eq.s32.totalorder %s21, 0
      %p136 = por %p134, %p135
      %p137 = scmp.ne.s32.totalorder %s125, %s126
      %p138 = scmp.eq.s32.totalorder %s22, 3
      %p139 = por %p137, %p138
      %p141 = scmp.ne.s32.totalorder %s126, %s140
      %p142 = scmp.eq.s32.totalorder %s22, 0
      %p143 = por %p141, %p142
      %p144 = scmp.le.s32.totalorder 1, %s16
      %p145 = scmp.lt.s32.totalorder %s16, 5
      %p146 = pnand %p144, %p145
      %p147 = pneg %p146
      // Predicated region
      $region9: #{lstm_autoencoder_forward.1} parent=5 // pred_check
        _
      $region10: #{lstm_autoencoder_forward.1} parent=5 // pred_check_branch
        %149 = sbr.rel (%p146) target = $region12
      $region11: #{lstm_autoencoder_forward.1} parent=5 // pred_region
        %s150 = ssub.s32 %s16, 1
        // Predicated region
        $region13: #{lstm_autoencoder_forward.1} parent=11 // pred_check
          %p151 = pneg %p37
        $region14: #{lstm_autoencoder_forward.1} parent=11 // pred_check_branch
          %153 = sbr.rel (%p151) target = $region16
        $region15: #{lstm_autoencoder_forward.1} parent=11 // pred_region
          _
        $region16: #{lstm_autoencoder_forward.1} parent=11 // pred_fallthru
          _
      $region12: #{lstm_autoencoder_forward.1} parent=5 // pred_fallthru
        _
      %p154 = scmp.lt.s32.totalorder %s16, 4
      // Predicated region
      $region17: #{lstm_autoencoder_forward.1} parent=5 // pred_check
        %p155 = pneg %p154
      $region18: #{lstm_autoencoder_forward.1} parent=5 // pred_check_branch
        %157 = sbr.rel (%p155) target = $region20
      $region19: #{lstm_autoencoder_forward.1} parent=5 // pred_region
        // Predicated region
        $region21: #{lstm_autoencoder_forward.1} parent=19 // pred_check
          %p158 = pneg %p57
        $region22: #{lstm_autoencoder_forward.1} parent=19 // pred_check_branch
          %160 = sbr.rel (%p158) target = $region24
        $region23: #{lstm_autoencoder_forward.1} parent=19 // pred_region
          %s161 = sand.u32 %s47, 1
          %s162 = scalar_lea.sflag [#allocation5], %s161
          %s163 = sand.u32 %s47, 1
          %s164 = smul.addr %s163, 256
          %s165 = scalar_lea.vmem [#allocation4], %s164
          %167 = vsyncadd %s162, 0
          %s168 = smul.addr %s16, 64
          %s169 = smul.addr %s168, 4
          %s170 = scalar_lea.hbm %s1, %s169
          %s171 = sshll.u32 %s170, 4
          %s172 = int_to_ptr.hbm [resolvable:$true] %s171
          %s173 = sshll.u32 %s165, 4
          %s174 = int_to_ptr.vmem [resolvable:$true] %s173
          %179 = dma.hbm_to_vmem [thread:$0]  %s172, 4096, %s174, %s162, 256, 256, 16
        $region24: #{lstm_autoencoder_forward.1} parent=19 // pred_fallthru
          _
        // Predicated region
        $region25: #{lstm_autoencoder_forward.1} parent=19 // pred_check
          %p180 = pneg %p83
        $region26: #{lstm_autoencoder_forward.1} parent=19 // pred_check_branch
          %182 = sbr.rel (%p180) target = $region28
        $region27: #{lstm_autoencoder_forward.1} parent=19 // pred_region
          %s183 = sand.u32 %s73, 1
          %s184 = scalar_lea.sflag [#allocation7], %s183
          %s185 = sand.u32 %s73, 1
          %s186 = smul.addr %s185, 256
          %s187 = scalar_lea.vmem [#allocation6], %s186
          %189 = vsyncadd %s184, 0
          %s190 = smul.addr %s16, 64
          %s191 = smul.addr %s190, 4
          %s192 = scalar_lea.hbm %s2, %s191
          %s193 = sshll.u32 %s192, 4
          %s194 = int_to_ptr.hbm [resolvable:$true] %s193
          %s195 = sshll.u32 %s187, 4
          %s196 = int_to_ptr.vmem [resolvable:$true] %s195
          %201 = dma.hbm_to_vmem [thread:$0]  %s194, 4096, %s196, %s184, 256, 256, 16
        $region28: #{lstm_autoencoder_forward.1} parent=19 // pred_fallthru
          _
        // Predicated region
        $region29: #{lstm_autoencoder_forward.1} parent=19 // pred_check
          %p202 = pneg %p109
        $region30: #{lstm_autoencoder_forward.1} parent=19 // pred_check_branch
          %204 = sbr.rel (%p202) target = $region32
        $region31: #{lstm_autoencoder_forward.1} parent=19 // pred_region
          %p205 = scmp.lt.s32.totalorder %s16, 3
          %s206 = scalar_select %p205, %s16, 3
          %s207 = smul.addr %s206, 4
          %s208 = scalar_lea.vmem %s3, %s207
        $region32: #{lstm_autoencoder_forward.1} parent=19 // pred_fallthru
          _
      $region20: #{lstm_autoencoder_forward.1} parent=5 // pred_fallthru
        _
      %p209 = scmp.le.s32.totalorder 1, %s16
      %p210 = scmp.lt.s32.totalorder %s16, 5
      %p211 = pnand %p209, %p210
      %p212 = pneg %p211
      // Predicated region
      $region33: #{lstm_autoencoder_forward.1} parent=5 // pred_check
        _
      $region34: #{lstm_autoencoder_forward.1} parent=5 // pred_check_branch
        %214 = sbr.rel (%p211) target = $region36
      $region35: #{lstm_autoencoder_forward.1} parent=5 // pred_region
        %s215 = ssub.s32 %s16, 1
        %s216 = sand.u32 %s50, 1
        %s217 = scalar_lea.sflag [#allocation5], %s216
        %s218 = sand.u32 %s50, 1
        %s219 = smul.addr %s218, 256
        %s220 = scalar_lea.vmem [#allocation4], %s219
        // Predicated region
        $region37: #{lstm_autoencoder_forward.1} parent=35 // pred_check
          %p221 = pneg %p63
        $region38: #{lstm_autoencoder_forward.1} parent=35 // pred_check_branch
          %223 = sbr.rel (%p221) target = $region40
        $region39: #{lstm_autoencoder_forward.1} parent=35 // pred_region
          %225 = dma.done %s217, 4096
        $region40: #{lstm_autoencoder_forward.1} parent=35 // pred_fallthru
          _
        %s226 = sand.u32 %s76, 1
        %s227 = scalar_lea.sflag [#allocation7], %s226
        %s228 = sand.u32 %s76, 1
        %s229 = smul.addr %s228, 256
        %s230 = scalar_lea.vmem [#allocation6], %s229
        // Predicated region
        $region41: #{lstm_autoencoder_forward.1} parent=35 // pred_check
          %p231 = pneg %p89
        $region42: #{lstm_autoencoder_forward.1} parent=35 // pred_check_branch
          %233 = sbr.rel (%p231) target = $region44
        $region43: #{lstm_autoencoder_forward.1} parent=35 // pred_region
          %235 = dma.done %s227, 4096
        $region44: #{lstm_autoencoder_forward.1} parent=35 // pred_fallthru
          _
        %p236 = pneg %p37
        %p237 = pneg %p34
        %s238 = sand.u32 %s50, 1
        %s239 = scalar_lea.sflag [#allocation5], %s238
        %s240 = sand.u32 %s50, 1
        %s241 = smul.addr %s240, 256
        %s242 = scalar_lea.vmem [#allocation4], %s241
        %p243 = pneg %p63
        %p244 = pneg %p60
        %s245 = sand.u32 %s76, 1
        %s246 = scalar_lea.sflag [#allocation7], %s245
        %s247 = sand.u32 %s76, 1
        %s248 = smul.addr %s247, 256
        %s249 = scalar_lea.vmem [#allocation6], %s248
        %p250 = pneg %p89
        %p251 = pneg %p86
        %p252 = scmp.lt.s32.totalorder %s21, 3
        %s253 = scalar_select %p252, %s21, 3
        %s254 = smul.addr %s253, 4
        %s255 = scalar_lea.vmem %s3, %s254
        %p256 = pneg %p115
        %p257 = pneg %p112
        %p258 = pneg %p136
        %p259 = pneg %p133
        %p260 = scmp.lt.s32.totalorder %s21, 3
        %s261 = scalar_select %p260, %s21, 3
        %s262 = smul.addr %s261, 4
        %s263 = scalar_lea.vmem %s3, %s262
        %p265 = scmp.eq.s32.totalorder %s21, 0
        // Predicated region
        $region45: #{lstm_autoencoder_forward.1} parent=35 // pred_check
          %p266 = pneg %p265
        $region46: #{lstm_autoencoder_forward.1} parent=35 // pred_check_branch
          %268 = sbr.rel (%p266) target = $region48
        $region47: #{lstm_autoencoder_forward.1} parent=35 // pred_region
          %v269 = vld [vmem:[%s0] sm:$0xff]
          %v270 = vld [vmem:[%s0 + $0x8] sm:$0xff]
          %v271 = vld [vmem:[%s0 + $0x10] sm:$0xff]
          %v272 = vld [vmem:[%s0 + $0x18] sm:$0xff]
          %v273 = vld [vmem:[%s0 + $0x20] sm:$0xff]
          %v274 = vld [vmem:[%s0 + $0x28] sm:$0xff]
          %v275 = vld [vmem:[%s0 + $0x30] sm:$0xff]
          %v276 = vld [vmem:[%s0 + $0x38] sm:$0xff]
          %277 = vst [vmem:[#allocation2] sm:$0xff] %v269
          %278 = vst [vmem:[#allocation2 + $0x8] sm:$0xff] %v270
          %279 = vst [vmem:[#allocation2 + $0x10] sm:$0xff] %v271
          %280 = vst [vmem:[#allocation2 + $0x18] sm:$0xff] %v272
          %281 = vst [vmem:[#allocation2 + $0x20] sm:$0xff] %v273
          %282 = vst [vmem:[#allocation2 + $0x28] sm:$0xff] %v274
          %283 = vst [vmem:[#allocation2 + $0x30] sm:$0xff] %v275
          %284 = vst [vmem:[#allocation2 + $0x38] sm:$0xff] %v276
        $region48: #{lstm_autoencoder_forward.1} parent=35 // pred_fallthru
          _
        %v285 = vld [vmem:[#allocation2] sm:$0xff]
        %v286 = vld [vmem:[#allocation2 + $0x8] sm:$0xff]
        %v287 = vld [vmem:[#allocation2 + $0x10] sm:$0xff]
        %v288 = vld [vmem:[#allocation2 + $0x18] sm:$0xff]
        %v289 = vld [vmem:[#allocation2 + $0x20] sm:$0xff]
        %v290 = vld [vmem:[#allocation2 + $0x28] sm:$0xff]
        %v291 = vld [vmem:[#allocation2 + $0x30] sm:$0xff]
        %v292 = vld [vmem:[#allocation2 + $0x38] sm:$0xff]
        %v293 = vpack.c.bf16 %v286, %v285
        %v294 = vpack.c.bf16 %v288, %v287
        %v295 = vpack.c.bf16 %v290, %v289
        %v296 = vpack.c.bf16 %v292, %v291
        %v297 = vld [vmem:[%s220] sm:$0xff]
        %v298 = vld [vmem:[%s220 + $0x8] sm:$0xff]
        %v299 = vld [vmem:[%s220 + $0x10] sm:$0xff]
        %v300 = vld [vmem:[%s220 + $0x18] sm:$0xff]
        %v301 = vld [vmem:[%s220 + $0x20] sm:$0xff]
        %v302 = vld [vmem:[%s220 + $0x28] sm:$0xff]
        %v303 = vld [vmem:[%s220 + $0x30] sm:$0xff]
        %v304 = vld [vmem:[%s220 + $0x38] sm:$0xff]
        %v305 = vld [vmem:[%s220 + $0x40] sm:$0xff]
        %v306 = vld [vmem:[%s220 + $0x48] sm:$0xff]
        %v307 = vld [vmem:[%s220 + $0x50] sm:$0xff]
        %v308 = vld [vmem:[%s220 + $0x58] sm:$0xff]
        %v309 = vld [vmem:[%s220 + $0x60] sm:$0xff]
        %v310 = vld [vmem:[%s220 + $0x68] sm:$0xff]
        %v311 = vld [vmem:[%s220 + $0x70] sm:$0xff]
        %v312 = vld [vmem:[%s220 + $0x78] sm:$0xff]
        %v313 = vld [vmem:[%s220 + $0x80] sm:$0xff]
        %v314 = vld [vmem:[%s220 + $0x88] sm:$0xff]
        %v315 = vld [vmem:[%s220 + $0x90] sm:$0xff]
        %v316 = vld [vmem:[%s220 + $0x98] sm:$0xff]
        %v317 = vld [vmem:[%s220 + $0xa0] sm:$0xff]
        %v318 = vld [vmem:[%s220 + $0xa8] sm:$0xff]
        %v319 = vld [vmem:[%s220 + $0xb0] sm:$0xff]
        %v320 = vld [vmem:[%s220 + $0xb8] sm:$0xff]
        %v321 = vld [vmem:[%s220 + $0xc0] sm:$0xff]
        %v322 = vld [vmem:[%s220 + $0xc8] sm:$0xff]
        %v323 = vld [vmem:[%s220 + $0xd0] sm:$0xff]
        %v324 = vld [vmem:[%s220 + $0xd8] sm:$0xff]
        %v325 = vld [vmem:[%s220 + $0xe0] sm:$0xff]
        %v326 = vld [vmem:[%s220 + $0xe8] sm:$0xff]
        %v327 = vld [vmem:[%s220 + $0xf0] sm:$0xff]
        %v328 = vld [vmem:[%s220 + $0xf8] sm:$0xff]
        %v329 = vld [vmem:[%s263] sm:$0xf]
        %v331 = vperm.slane %v329, 0
        %v332 = vperm.slane %v329, 1
        %v333 = vperm.slane %v329, 2
        %v334 = vperm.slane %v329, 3
        %v371 = vunpack.c.l.b16 %v297
        %v372 = vunpack.c.h.b16 %v297
        %v373 = vunpack.c.l.b16 %v298
        %v374 = vunpack.c.h.b16 %v298
        %v375 = vunpack.c.l.b16 %v299
        %v376 = vunpack.c.h.b16 %v299
        %v377 = vunpack.c.l.b16 %v300
        %v378 = vunpack.c.h.b16 %v300
        %v379 = vunpack.c.l.b16 %v301
        %v380 = vunpack.c.h.b16 %v301
        %v381 = vunpack.c.l.b16 %v302
        %v382 = vunpack.c.h.b16 %v302
        %v383 = vunpack.c.l.b16 %v303
        %v384 = vunpack.c.h.b16 %v303
        %v385 = vunpack.c.l.b16 %v304
        %v386 = vunpack.c.h.b16 %v304
        %v387 = vunpack.c.l.b16 %v305
        %v388 = vunpack.c.h.b16 %v305
        %v389 = vunpack.c.l.b16 %v306
        %v390 = vunpack.c.h.b16 %v306
        %v391 = vunpack.c.l.b16 %v307
        %v392 = vunpack.c.h.b16 %v307
        %v393 = vunpack.c.l.b16 %v308
        %v394 = vunpack.c.h.b16 %v308
        %v395 = vunpack.c.l.b16 %v309
        %v396 = vunpack.c.h.b16 %v309
        %v397 = vunpack.c.l.b16 %v310
        %v398 = vunpack.c.h.b16 %v310
        %v399 = vunpack.c.l.b16 %v311
        %v400 = vunpack.c.h.b16 %v311
        %v401 = vunpack.c.l.b16 %v312
        %v402 = vunpack.c.h.b16 %v312
        %v403 = vunpack.c.l.b16 %v313
        %v404 = vunpack.c.h.b16 %v313
        %v405 = vunpack.c.l.b16 %v314
        %v406 = vunpack.c.h.b16 %v314
        %v407 = vunpack.c.l.b16 %v315
        %v408 = vunpack.c.h.b16 %v315
        %v409 = vunpack.c.l.b16 %v316
        %v410 = vunpack.c.h.b16 %v316
        %v411 = vunpack.c.l.b16 %v317
        %v412 = vunpack.c.h.b16 %v317
        %v413 = vunpack.c.l.b16 %v318
        %v414 = vunpack.c.h.b16 %v318
        %v415 = vunpack.c.l.b16 %v319
        %v416 = vunpack.c.h.b16 %v319
        %v417 = vunpack.c.l.b16 %v320
        %v418 = vunpack.c.h.b16 %v320
        %v419 = vunpack.c.l.b16 %v321
        %v420 = vunpack.c.h.b16 %v321
        %v421 = vunpack.c.l.b16 %v322
        %v422 = vunpack.c.h.b16 %v322
        %v423 = vunpack.c.l.b16 %v323
        %v424 = vunpack.c.h.b16 %v323
        %v425 = vunpack.c.l.b16 %v324
        %v426 = vunpack.c.h.b16 %v324
        %v427 = vunpack.c.l.b16 %v325
        %v428 = vunpack.c.h.b16 %v325
        %v429 = vunpack.c.l.b16 %v326
        %v430 = vunpack.c.h.b16 %v326
        %v431 = vunpack.c.l.b16 %v327
        %v432 = vunpack.c.h.b16 %v327
        %v433 = vunpack.c.l.b16 %v328
        %v434 = vunpack.c.h.b16 %v328
        %v435 = vpack.c.b16 %v375, %v371
        %v436 = vpack.c.b16 %v376, %v372
        %v437 = vpack.c.b16 %v377, %v373
        %v438 = vpack.c.b16 %v378, %v374
        %v439 = vpack.c.b16 %v383, %v379
        %v440 = vpack.c.b16 %v384, %v380
        %v441 = vpack.c.b16 %v385, %v381
        %v442 = vpack.c.b16 %v386, %v382
        %v443 = vpack.c.b16 %v391, %v387
        %v444 = vpack.c.b16 %v392, %v388
        %v445 = vpack.c.b16 %v393, %v389
        %v446 = vpack.c.b16 %v394, %v390
        %v447 = vpack.c.b16 %v399, %v395
        %v448 = vpack.c.b16 %v400, %v396
        %v449 = vpack.c.b16 %v401, %v397
        %v450 = vpack.c.b16 %v402, %v398
        %v451 = vpack.c.b16 %v407, %v403
        %v452 = vpack.c.b16 %v408, %v404
        %v453 = vpack.c.b16 %v409, %v405
        %v454 = vpack.c.b16 %v410, %v406
        %v455 = vpack.c.b16 %v415, %v411
        %v456 = vpack.c.b16 %v416, %v412
        %v457 = vpack.c.b16 %v417, %v413
        %v458 = vpack.c.b16 %v418, %v414
        %v459 = vpack.c.b16 %v423, %v419
        %v460 = vpack.c.b16 %v424, %v420
        %v461 = vpack.c.b16 %v425, %v421
        %v462 = vpack.c.b16 %v426, %v422
        %v463 = vpack.c.b16 %v431, %v427
        %v464 = vpack.c.b16 %v432, %v428
        %v465 = vpack.c.b16 %v433, %v429
        %v466 = vpack.c.b16 %v434, %v430
        %499 = vmatpush.bf16.msra.mxu0 %v463
        %500 = vmatpush.bf16.msra.mxu0 %v459
        %501 = vmatpush.bf16.msra.mxu0 %v455
        %502 = vmatpush.bf16.msra.mxu0 %v451
        %503 = vmatpush.bf16.msra.mxu0 %v447
        %504 = vmatpush.bf16.msra.mxu0 %v443
        %505 = vmatpush.bf16.msra.mxu0 %v439
        %506 = vmatpush.bf16.msra.mxu0 %v435
        %507 = vmatmul.bf16.gmra.mxu0 %v293
        %v508 = vpop.f32.mrf.mxu0
        %v509 = vadd.f32 %v331, %v508
        %v510 = vpop.f32.mrf.mxu0
        %v511 = vadd.f32 %v331, %v510
        %512 = vmatmul.bf16.gmra.mxu0 %v294
        %v513 = vpop.f32.mrf.mxu0
        %v514 = vadd.f32 %v331, %v513
        %v515 = vpop.f32.mrf.mxu0
        %v516 = vadd.f32 %v331, %v515
        %517 = vmatmul.bf16.gmra.mxu0 %v295
        %v518 = vpop.f32.mrf.mxu0
        %v519 = vadd.f32 %v331, %v518
        %v520 = vpop.f32.mrf.mxu0
        %v521 = vadd.f32 %v331, %v520
        %522 = vmatmul.bf16.gmra.mxu0 %v296
        %v523 = vpop.f32.mrf.mxu0
        %v524 = vadd.f32 %v331, %v523
        %v525 = vpop.f32.mrf.mxu0
        %v526 = vadd.f32 %v331, %v525
        %527 = vdwg.mxu0
        %528 = vmatpush.bf16.msra.mxu0 %v464
        %529 = vmatpush.bf16.msra.mxu0 %v460
        %530 = vmatpush.bf16.msra.mxu0 %v456
        %531 = vmatpush.bf16.msra.mxu0 %v452
        %532 = vmatpush.bf16.msra.mxu0 %v448
        %533 = vmatpush.bf16.msra.mxu0 %v444
        %534 = vmatpush.bf16.msra.mxu0 %v440
        %535 = vmatpush.bf16.msra.mxu0 %v436
        %536 = vmatmul.bf16.gmra.mxu0 %v293
        %v537 = vpop.f32.mrf.mxu0
        %v538 = vadd.f32 %v332, %v537
        %v539 = vpop.f32.mrf.mxu0
        %v540 = vadd.f32 %v332, %v539
        %541 = vmatmul.bf16.gmra.mxu0 %v294
        %v542 = vpop.f32.mrf.mxu0
        %v543 = vadd.f32 %v332, %v542
        %v544 = vpop.f32.mrf.mxu0
        %v545 = vadd.f32 %v332, %v544
        %546 = vmatmul.bf16.gmra.mxu0 %v295
        %v547 = vpop.f32.mrf.mxu0
        %v548 = vadd.f32 %v332, %v547
        %v549 = vpop.f32.mrf.mxu0
        %v550 = vadd.f32 %v332, %v549
        %551 = vmatmul.bf16.gmra.mxu0 %v296
        %v552 = vpop.f32.mrf.mxu0
        %v553 = vadd.f32 %v332, %v552
        %v554 = vpop.f32.mrf.mxu0
        %v555 = vadd.f32 %v332, %v554
        %556 = vdwg.mxu0
        %557 = vmatpush.bf16.msra.mxu0 %v465
        %558 = vmatpush.bf16.msra.mxu0 %v461
        %559 = vmatpush.bf16.msra.mxu0 %v457
        %560 = vmatpush.bf16.msra.mxu0 %v453
        %561 = vmatpush.bf16.msra.mxu0 %v449
        %562 = vmatpush.bf16.msra.mxu0 %v445
        %563 = vmatpush.bf16.msra.mxu0 %v441
        %564 = vmatpush.bf16.msra.mxu0 %v437
        %565 = vmatmul.bf16.gmra.mxu0 %v293
        %v566 = vpop.f32.mrf.mxu0
        %v567 = vadd.f32 %v333, %v566
        %v568 = vpop.f32.mrf.mxu0
        %v569 = vadd.f32 %v333, %v568
        %570 = vmatmul.bf16.gmra.mxu0 %v294
        %v571 = vpop.f32.mrf.mxu0
        %v572 = vadd.f32 %v333, %v571
        %v573 = vpop.f32.mrf.mxu0
        %v574 = vadd.f32 %v333, %v573
        %575 = vmatmul.bf16.gmra.mxu0 %v295
        %v576 = vpop.f32.mrf.mxu0
        %v577 = vadd.f32 %v333, %v576
        %v578 = vpop.f32.mrf.mxu0
        %v579 = vadd.f32 %v333, %v578
        %580 = vmatmul.bf16.gmra.mxu0 %v296
        %v581 = vpop.f32.mrf.mxu0
        %v582 = vadd.f32 %v333, %v581
        %v583 = vpop.f32.mrf.mxu0
        %v584 = vadd.f32 %v333, %v583
        %585 = vdwg.mxu0
        %586 = vmatpush.bf16.msra.mxu0 %v466
        %587 = vmatpush.bf16.msra.mxu0 %v462
        %588 = vmatpush.bf16.msra.mxu0 %v458
        %589 = vmatpush.bf16.msra.mxu0 %v454
        %590 = vmatpush.bf16.msra.mxu0 %v450
        %591 = vmatpush.bf16.msra.mxu0 %v446
        %592 = vmatpush.bf16.msra.mxu0 %v442
        %593 = vmatpush.bf16.msra.mxu0 %v438
        %594 = vmatmul.bf16.gmra.mxu0 %v293
        %v595 = vpop.f32.mrf.mxu0
        %v596 = vadd.f32 %v334, %v595
        %v597 = vpop.f32.mrf.mxu0
        %v598 = vadd.f32 %v334, %v597
        %599 = vmatmul.bf16.gmra.mxu0 %v294
        %v600 = vpop.f32.mrf.mxu0
        %v601 = vadd.f32 %v334, %v600
        %v602 = vpop.f32.mrf.mxu0
        %v603 = vadd.f32 %v334, %v602
        %604 = vmatmul.bf16.gmra.mxu0 %v295
        %v605 = vpop.f32.mrf.mxu0
        %v606 = vadd.f32 %v334, %v605
        %v607 = vpop.f32.mrf.mxu0
        %v608 = vadd.f32 %v334, %v607
        %609 = vmatmul.bf16.gmra.mxu0 %v296
        %v610 = vpop.f32.mrf.mxu0
        %v611 = vadd.f32 %v334, %v610
        %v612 = vpop.f32.mrf.mxu0
        %v613 = vadd.f32 %v334, %v612
        %614 = vdwg.mxu0
        %615 = vst [vmem:[#allocation3] sm:$0xff] %v509
        %616 = vst [vmem:[#allocation3 + $0x8] sm:$0xff] %v538
        %617 = vst [vmem:[#allocation3 + $0x10] sm:$0xff] %v567
        %618 = vst [vmem:[#allocation3 + $0x18] sm:$0xff] %v596
        %619 = vst [vmem:[#allocation3 + $0x20] sm:$0xff] %v511
        %620 = vst [vmem:[#allocation3 + $0x28] sm:$0xff] %v540
        %621 = vst [vmem:[#allocation3 + $0x30] sm:$0xff] %v569
        %622 = vst [vmem:[#allocation3 + $0x38] sm:$0xff] %v598
        %623 = vst [vmem:[#allocation3 + $0x40] sm:$0xff] %v514
        %624 = vst [vmem:[#allocation3 + $0x48] sm:$0xff] %v543
        %625 = vst [vmem:[#allocation3 + $0x50] sm:$0xff] %v572
        %626 = vst [vmem:[#allocation3 + $0x58] sm:$0xff] %v601
        %627 = vst [vmem:[#allocation3 + $0x60] sm:$0xff] %v516
        %628 = vst [vmem:[#allocation3 + $0x68] sm:$0xff] %v545
        %629 = vst [vmem:[#allocation3 + $0x70] sm:$0xff] %v574
        %630 = vst [vmem:[#allocation3 + $0x78] sm:$0xff] %v603
        %631 = vst [vmem:[#allocation3 + $0x80] sm:$0xff] %v519
        %632 = vst [vmem:[#allocation3 + $0x88] sm:$0xff] %v548
        %633 = vst [vmem:[#allocation3 + $0x90] sm:$0xff] %v577
        %634 = vst [vmem:[#allocation3 + $0x98] sm:$0xff] %v606
        %635 = vst [vmem:[#allocation3 + $0xa0] sm:$0xff] %v521
        %636 = vst [vmem:[#allocation3 + $0xa8] sm:$0xff] %v550
        %637 = vst [vmem:[#allocation3 + $0xb0] sm:$0xff] %v579
        %638 = vst [vmem:[#allocation3 + $0xb8] sm:$0xff] %v608
        %639 = vst [vmem:[#allocation3 + $0xc0] sm:$0xff] %v524
        %640 = vst [vmem:[#allocation3 + $0xc8] sm:$0xff] %v553
        %641 = vst [vmem:[#allocation3 + $0xd0] sm:$0xff] %v582
        %642 = vst [vmem:[#allocation3 + $0xd8] sm:$0xff] %v611
        %643 = vst [vmem:[#allocation3 + $0xe0] sm:$0xff] %v526
        %644 = vst [vmem:[#allocation3 + $0xe8] sm:$0xff] %v555
        %645 = vst [vmem:[#allocation3 + $0xf0] sm:$0xff] %v584
        %646 = vst [vmem:[#allocation3 + $0xf8] sm:$0xff] %v613
        %s647 = smul.u32 0, 4
        %s648 = smul.addr %s647, 8
        %s649 = scalar_lea.vmem [#allocation3], %s648
        %v650 = vld [vmem:[%s649] sm:$0xff]
        %v651 = vld [vmem:[%s649 + $0x8] sm:$0xff]
        %v652 = vld [vmem:[%s649 + $0x10] sm:$0xff]
        %v653 = vld [vmem:[%s649 + $0x18] sm:$0xff]
        %v654 = vld [vmem:[%s230] sm:$0xff]
        %v655 = vld [vmem:[%s230 + $0x8] sm:$0xff]
        %v656 = vld [vmem:[%s230 + $0x10] sm:$0xff]
        %v657 = vld [vmem:[%s230 + $0x18] sm:$0xff]
        %v658 = vld [vmem:[%s230 + $0x20] sm:$0xff]
        %v659 = vld [vmem:[%s230 + $0x28] sm:$0xff]
        %v660 = vld [vmem:[%s230 + $0x30] sm:$0xff]
        %v661 = vld [vmem:[%s230 + $0x38] sm:$0xff]
        %v662 = vld [vmem:[%s230 + $0x40] sm:$0xff]
        %v663 = vld [vmem:[%s230 + $0x48] sm:$0xff]
        %v664 = vld [vmem:[%s230 + $0x50] sm:$0xff]
        %v665 = vld [vmem:[%s230 + $0x58] sm:$0xff]
        %v666 = vld [vmem:[%s230 + $0x60] sm:$0xff]
        %v667 = vld [vmem:[%s230 + $0x68] sm:$0xff]
        %v668 = vld [vmem:[%s230 + $0x70] sm:$0xff]
        %v669 = vld [vmem:[%s230 + $0x78] sm:$0xff]
        %v670 = vld [vmem:[%s230 + $0x80] sm:$0xff]
        %v671 = vld [vmem:[%s230 + $0x88] sm:$0xff]
        %v672 = vld [vmem:[%s230 + $0x90] sm:$0xff]
        %v673 = vld [vmem:[%s230 + $0x98] sm:$0xff]
        %v674 = vld [vmem:[%s230 + $0xa0] sm:$0xff]
        %v675 = vld [vmem:[%s230 + $0xa8] sm:$0xff]
        %v676 = vld [vmem:[%s230 + $0xb0] sm:$0xff]
        %v677 = vld [vmem:[%s230 + $0xb8] sm:$0xff]
        %v678 = vld [vmem:[%s230 + $0xc0] sm:$0xff]
        %v679 = vld [vmem:[%s230 + $0xc8] sm:$0xff]
        %v680 = vld [vmem:[%s230 + $0xd0] sm:$0xff]
        %v681 = vld [vmem:[%s230 + $0xd8] sm:$0xff]
        %v682 = vld [vmem:[%s230 + $0xe0] sm:$0xff]
        %v683 = vld [vmem:[%s230 + $0xe8] sm:$0xff]
        %v684 = vld [vmem:[%s230 + $0xf0] sm:$0xff]
        %v685 = vld [vmem:[%s230 + $0xf8] sm:$0xff]
        %v718 = vunpack.c.l.b16 %v654
        %v719 = vunpack.c.h.b16 %v654
        %v720 = vunpack.c.l.b16 %v655
        %v721 = vunpack.c.h.b16 %v655
        %v722 = vunpack.c.l.b16 %v656
        %v723 = vunpack.c.h.b16 %v656
        %v724 = vunpack.c.l.b16 %v657
        %v725 = vunpack.c.h.b16 %v657
        %v726 = vunpack.c.l.b16 %v658
        %v727 = vunpack.c.h.b16 %v658
        %v728 = vunpack.c.l.b16 %v659
        %v729 = vunpack.c.h.b16 %v659
        %v730 = vunpack.c.l.b16 %v660
        %v731 = vunpack.c.h.b16 %v660
        %v732 = vunpack.c.l.b16 %v661
        %v733 = vunpack.c.h.b16 %v661
        %v734 = vunpack.c.l.b16 %v662
        %v735 = vunpack.c.h.b16 %v662
        %v736 = vunpack.c.l.b16 %v663
        %v737 = vunpack.c.h.b16 %v663
        %v738 = vunpack.c.l.b16 %v664
        %v739 = vunpack.c.h.b16 %v664
        %v740 = vunpack.c.l.b16 %v665
        %v741 = vunpack.c.h.b16 %v665
        %v742 = vunpack.c.l.b16 %v666
        %v743 = vunpack.c.h.b16 %v666
        %v744 = vunpack.c.l.b16 %v667
        %v745 = vunpack.c.h.b16 %v667
        %v746 = vunpack.c.l.b16 %v668
        %v747 = vunpack.c.h.b16 %v668
        %v748 = vunpack.c.l.b16 %v669
        %v749 = vunpack.c.h.b16 %v669
        %v750 = vunpack.c.l.b16 %v670
        %v751 = vunpack.c.h.b16 %v670
        %v752 = vunpack.c.l.b16 %v671
        %v753 = vunpack.c.h.b16 %v671
        %v754 = vunpack.c.l.b16 %v672
        %v755 = vunpack.c.h.b16 %v672
        %v756 = vunpack.c.l.b16 %v673
        %v757 = vunpack.c.h.b16 %v673
        %v758 = vunpack.c.l.b16 %v674
        %v759 = vunpack.c.h.b16 %v674
        %v760 = vunpack.c.l.b16 %v675
        %v761 = vunpack.c.h.b16 %v675
        %v762 = vunpack.c.l.b16 %v676
        %v763 = vunpack.c.h.b16 %v676
        %v764 = vunpack.c.l.b16 %v677
        %v765 = vunpack.c.h.b16 %v677
        %v766 = vunpack.c.l.b16 %v678
        %v767 = vunpack.c.h.b16 %v678
        %v768 = vunpack.c.l.b16 %v679
        %v769 = vunpack.c.h.b16 %v679
        %v770 = vunpack.c.l.b16 %v680
        %v771 = vunpack.c.h.b16 %v680
        %v772 = vunpack.c.l.b16 %v681
        %v773 = vunpack.c.h.b16 %v681
        %v774 = vunpack.c.l.b16 %v682
        %v775 = vunpack.c.h.b16 %v682
        %v776 = vunpack.c.l.b16 %v683
        %v777 = vunpack.c.h.b16 %v683
        %v778 = vunpack.c.l.b16 %v684
        %v779 = vunpack.c.h.b16 %v684
        %v780 = vunpack.c.l.b16 %v685
        %v781 = vunpack.c.h.b16 %v685
        %v782 = vpack.c.b16 %v722, %v718
        %v783 = vpack.c.b16 %v723, %v719
        %v784 = vpack.c.b16 %v724, %v720
        %v785 = vpack.c.b16 %v725, %v721
        %v786 = vpack.c.b16 %v730, %v726
        %v787 = vpack.c.b16 %v731, %v727
        %v788 = vpack.c.b16 %v732, %v728
        %v789 = vpack.c.b16 %v733, %v729
        %v790 = vpack.c.b16 %v738, %v734
        %v791 = vpack.c.b16 %v739, %v735
        %v792 = vpack.c.b16 %v740, %v736
        %v793 = vpack.c.b16 %v741, %v737
        %v794 = vpack.c.b16 %v746, %v742
        %v795 = vpack.c.b16 %v747, %v743
        %v796 = vpack.c.b16 %v748, %v744
        %v797 = vpack.c.b16 %v749, %v745
        %v798 = vpack.c.b16 %v754, %v750
        %v799 = vpack.c.b16 %v755, %v751
        %v800 = vpack.c.b16 %v756, %v752
        %v801 = vpack.c.b16 %v757, %v753
        %v802 = vpack.c.b16 %v762, %v758
        %v803 = vpack.c.b16 %v763, %v759
        %v804 = vpack.c.b16 %v764, %v760
        %v805 = vpack.c.b16 %v765, %v761
        %v806 = vpack.c.b16 %v770, %v766
        %v807 = vpack.c.b16 %v771, %v767
        %v808 = vpack.c.b16 %v772, %v768
        %v809 = vpack.c.b16 %v773, %v769
        %v810 = vpack.c.b16 %v778, %v774
        %v811 = vpack.c.b16 %v779, %v775
        %v812 = vpack.c.b16 %v780, %v776
        %v813 = vpack.c.b16 %v781, %v777
        %846 = vmatpush.bf16.msra.mxu0 %v810
        %847 = vmatpush.bf16.msra.mxu0 %v806
        %848 = vmatpush.bf16.msra.mxu0 %v802
        %849 = vmatpush.bf16.msra.mxu0 %v798
        %850 = vmatpush.bf16.msra.mxu0 %v794
        %851 = vmatpush.bf16.msra.mxu0 %v790
        %852 = vmatpush.bf16.msra.mxu0 %v786
        %853 = vmatpush.bf16.msra.mxu0 %v782
        %854 = vmatmul.bf16.gmra.mxu0 0
        %v855 = vpop.f32.mrf.mxu0
        %v856 = vadd.f32 0.0, %v855
        %v857 = vpop.f32.mrf.mxu0
        %858 = vdwg.mxu0
        %859 = vmatpush.bf16.msra.mxu0 %v811
        %860 = vmatpush.bf16.msra.mxu0 %v807
        %861 = vmatpush.bf16.msra.mxu0 %v803
        %862 = vmatpush.bf16.msra.mxu0 %v799
        %863 = vmatpush.bf16.msra.mxu0 %v795
        %864 = vmatpush.bf16.msra.mxu0 %v791
        %865 = vmatpush.bf16.msra.mxu0 %v787
        %866 = vmatpush.bf16.msra.mxu0 %v783
        %867 = vmatmul.bf16.gmra.mxu0 0
        %v868 = vpop.f32.mrf.mxu0
        %v869 = vadd.f32 0.0, %v868
        %v870 = vpop.f32.mrf.mxu0
        %871 = vdwg.mxu0
        %872 = vmatpush.bf16.msra.mxu0 %v812
        %873 = vmatpush.bf16.msra.mxu0 %v808
        %874 = vmatpush.bf16.msra.mxu0 %v804
        %875 = vmatpush.bf16.msra.mxu0 %v800
        %876 = vmatpush.bf16.msra.mxu0 %v796
        %877 = vmatpush.bf16.msra.mxu0 %v792
        %878 = vmatpush.bf16.msra.mxu0 %v788
        %879 = vmatpush.bf16.msra.mxu0 %v784
        %880 = vmatmul.bf16.gmra.mxu0 0
        %v881 = vpop.f32.mrf.mxu0
        %v882 = vadd.f32 0.0, %v881
        %v883 = vpop.f32.mrf.mxu0
        %884 = vdwg.mxu0
        %885 = vmatpush.bf16.msra.mxu0 %v813
        %886 = vmatpush.bf16.msra.mxu0 %v809
        %887 = vmatpush.bf16.msra.mxu0 %v805
        %888 = vmatpush.bf16.msra.mxu0 %v801
        %889 = vmatpush.bf16.msra.mxu0 %v797
        %890 = vmatpush.bf16.msra.mxu0 %v793
        %891 = vmatpush.bf16.msra.mxu0 %v789
        %892 = vmatpush.bf16.msra.mxu0 %v785
        %893 = vmatmul.bf16.gmra.mxu0 0
        %v894 = vpop.f32.mrf.mxu0
        %v895 = vadd.f32 0.0, %v894
        %v896 = vpop.f32.mrf.mxu0
        %897 = vdwg.mxu0
        %v898 = vadd.f32 %v650, %v856
        %v899 = vadd.f32 %v651, %v869
        %v900 = vadd.f32 %v652, %v882
        %v901 = vadd.f32 %v653, %v895
        %v902 = vmul.f32 %v898, 0.5
        %v903 = vtanh.pop %v902
        %v904 = vmul.f32 %v903, 0.5
        %v905 = vadd.f32 %v904, 0.5
        %v906 = vmul.f32 %v899, 0.5
        %v907 = vtanh.pop %v906
        %v908 = vmul.f32 %v907, 0.5
        %v909 = vadd.f32 %v908, 0.5
        %v910 = vtanh.pop %v900
        %v911 = vmul.f32 %v901, 0.5
        %v912 = vtanh.pop %v911
        %v913 = vmul.f32 %v912, 0.5
        %v914 = vadd.f32 %v913, 0.5
        %v915 = vmul.f32 %v909, 0.0
        %v916 = vmul.f32 %v905, %v910
        %v917 = vadd.f32 %v915, %v916
        %v918 = vtanh.pop %v917
        %v919 = vmul.f32 %v914, %v918
        %920 = vst [vmem:[#allocation2] sm:$0xff] %v919
        %921 = vst [vmem:[%s4] sm:$0xff] %v919
        %s922 = smul.u32 1, 4
        %s923 = smul.addr %s922, 8
        %s924 = scalar_lea.vmem [#allocation3], %s923
        %v925 = vld [vmem:[%s924] sm:$0xff]
        %v926 = vld [vmem:[%s924 + $0x8] sm:$0xff]
        %v927 = vld [vmem:[%s924 + $0x10] sm:$0xff]
        %v928 = vld [vmem:[%s924 + $0x18] sm:$0xff]
        %v929 = vpack.c.bf16 %v919, %v919
        %v930 = vld [vmem:[%s230] sm:$0xff]
        %v931 = vld [vmem:[%s230 + $0x8] sm:$0xff]
        %v932 = vld [vmem:[%s230 + $0x10] sm:$0xff]
        %v933 = vld [vmem:[%s230 + $0x18] sm:$0xff]
        %v934 = vld [vmem:[%s230 + $0x20] sm:$0xff]
        %v935 = vld [vmem:[%s230 + $0x28] sm:$0xff]
        %v936 = vld [vmem:[%s230 + $0x30] sm:$0xff]
        %v937 = vld [vmem:[%s230 + $0x38] sm:$0xff]
        %v938 = vld [vmem:[%s230 + $0x40] sm:$0xff]
        %v939 = vld [vmem:[%s230 + $0x48] sm:$0xff]
        %v940 = vld [vmem:[%s230 + $0x50] sm:$0xff]
        %v941 = vld [vmem:[%s230 + $0x58] sm:$0xff]
        %v942 = vld [vmem:[%s230 + $0x60] sm:$0xff]
        %v943 = vld [vmem:[%s230 + $0x68] sm:$0xff]
        %v944 = vld [vmem:[%s230 + $0x70] sm:$0xff]
        %v945 = vld [vmem:[%s230 + $0x78] sm:$0xff]
        %v946 = vld [vmem:[%s230 + $0x80] sm:$0xff]
        %v947 = vld [vmem:[%s230 + $0x88] sm:$0xff]
        %v948 = vld [vmem:[%s230 + $0x90] sm:$0xff]
        %v949 = vld [vmem:[%s230 + $0x98] sm:$0xff]
        %v950 = vld [vmem:[%s230 + $0xa0] sm:$0xff]
        %v951 = vld [vmem:[%s230 + $0xa8] sm:$0xff]
        %v952 = vld [vmem:[%s230 + $0xb0] sm:$0xff]
        %v953 = vld [vmem:[%s230 + $0xb8] sm:$0xff]
        %v954 = vld [vmem:[%s230 + $0xc0] sm:$0xff]
        %v955 = vld [vmem:[%s230 + $0xc8] sm:$0xff]
        %v956 = vld [vmem:[%s230 + $0xd0] sm:$0xff]
        %v957 = vld [vmem:[%s230 + $0xd8] sm:$0xff]
        %v958 = vld [vmem:[%s230 + $0xe0] sm:$0xff]
        %v959 = vld [vmem:[%s230 + $0xe8] sm:$0xff]
        %v960 = vld [vmem:[%s230 + $0xf0] sm:$0xff]
        %v961 = vld [vmem:[%s230 + $0xf8] sm:$0xff]
        %v994 = vunpack.c.l.b16 %v930
        %v995 = vunpack.c.h.b16 %v930
        %v996 = vunpack.c.l.b16 %v931
        %v997 = vunpack.c.h.b16 %v931
        %v998 = vunpack.c.l.b16 %v932
        %v999 = vunpack.c.h.b16 %v932
        %v1000 = vunpack.c.l.b16 %v933
        %v1001 = vunpack.c.h.b16 %v933
        %v1002 = vunpack.c.l.b16 %v934
        %v1003 = vunpack.c.h.b16 %v934
        %v1004 = vunpack.c.l.b16 %v935
        %v1005 = vunpack.c.h.b16 %v935
        %v1006 = vunpack.c.l.b16 %v936
        %v1007 = vunpack.c.h.b16 %v936
        %v1008 = vunpack.c.l.b16 %v937
        %v1009 = vunpack.c.h.b16 %v937
        %v1010 = vunpack.c.l.b16 %v938
        %v1011 = vunpack.c.h.b16 %v938
        %v1012 = vunpack.c.l.b16 %v939
        %v1013 = vunpack.c.h.b16 %v939
        %v1014 = vunpack.c.l.b16 %v940
        %v1015 = vunpack.c.h.b16 %v940
        %v1016 = vunpack.c.l.b16 %v941
        %v1017 = vunpack.c.h.b16 %v941
        %v1018 = vunpack.c.l.b16 %v942
        %v1019 = vunpack.c.h.b16 %v942
        %v1020 = vunpack.c.l.b16 %v943
        %v1021 = vunpack.c.h.b16 %v943
        %v1022 = vunpack.c.l.b16 %v944
        %v1023 = vunpack.c.h.b16 %v944
        %v1024 = vunpack.c.l.b16 %v945
        %v1025 = vunpack.c.h.b16 %v945
        %v1026 = vunpack.c.l.b16 %v946
        %v1027 = vunpack.c.h.b16 %v946
        %v1028 = vunpack.c.l.b16 %v947
        %v1029 = vunpack.c.h.b16 %v947
        %v1030 = vunpack.c.l.b16 %v948
        %v1031 = vunpack.c.h.b16 %v948
        %v1032 = vunpack.c.l.b16 %v949
        %v1033 = vunpack.c.h.b16 %v949
        %v1034 = vunpack.c.l.b16 %v950
        %v1035 = vunpack.c.h.b16 %v950
        %v1036 = vunpack.c.l.b16 %v951
        %v1037 = vunpack.c.h.b16 %v951
        %v1038 = vunpack.c.l.b16 %v952
        %v1039 = vunpack.c.h.b16 %v952
        %v1040 = vunpack.c.l.b16 %v953
        %v1041 = vunpack.c.h.b16 %v953
        %v1042 = vunpack.c.l.b16 %v954
        %v1043 = vunpack.c.h.b16 %v954
        %v1044 = vunpack.c.l.b16 %v955
        %v1045 = vunpack.c.h.b16 %v955
        %v1046 = vunpack.c.l.b16 %v956
        %v1047 = vunpack.c.h.b16 %v956
        %v1048 = vunpack.c.l.b16 %v957
        %v1049 = vunpack.c.h.b16 %v957
        %v1050 = vunpack.c.l.b16 %v958
        %v1051 = vunpack.c.h.b16 %v958
        %v1052 = vunpack.c.l.b16 %v959
        %v1053 = vunpack.c.h.b16 %v959
        %v1054 = vunpack.c.l.b16 %v960
        %v1055 = vunpack.c.h.b16 %v960
        %v1056 = vunpack.c.l.b16 %v961
        %v1057 = vunpack.c.h.b16 %v961
        %v1058 = vpack.c.b16 %v998, %v994
        %v1059 = vpack.c.b16 %v999, %v995
        %v1060 = vpack.c.b16 %v1000, %v996
        %v1061 = vpack.c.b16 %v1001, %v997
        %v1062 = vpack.c.b16 %v1006, %v1002
        %v1063 = vpack.c.b16 %v1007, %v1003
        %v1064 = vpack.c.b16 %v1008, %v1004
        %v1065 = vpack.c.b16 %v1009, %v1005
        %v1066 = vpack.c.b16 %v1014, %v1010
        %v1067 = vpack.c.b16 %v1015, %v1011
        %v1068 = vpack.c.b16 %v1016, %v1012
        %v1069 = vpack.c.b16 %v1017, %v1013
        %v1070 = vpack.c.b16 %v1022, %v1018
        %v1071 = vpack.c.b16 %v1023, %v1019
        %v1072 = vpack.c.b16 %v1024, %v1020
        %v1073 = vpack.c.b16 %v1025, %v1021
        %v1074 = vpack.c.b16 %v1030, %v1026
        %v1075 = vpack.c.b16 %v1031, %v1027
        %v1076 = vpack.c.b16 %v1032, %v1028
        %v1077 = vpack.c.b16 %v1033, %v1029
        %v1078 = vpack.c.b16 %v1038, %v1034
        %v1079 = vpack.c.b16 %v1039, %v1035
        %v1080 = vpack.c.b16 %v1040, %v1036
        %v1081 = vpack.c.b16 %v1041, %v1037
        %v1082 = vpack.c.b16 %v1046, %v1042
        %v1083 = vpack.c.b16 %v1047, %v1043
        %v1084 = vpack.c.b16 %v1048, %v1044
        %v1085 = vpack.c.b16 %v1049, %v1045
        %v1086 = vpack.c.b16 %v1054, %v1050
        %v1087 = vpack.c.b16 %v1055, %v1051
        %v1088 = vpack.c.b16 %v1056, %v1052
        %v1089 = vpack.c.b16 %v1057, %v1053
        %1122 = vmatpush.bf16.msra.mxu0 %v1086
        %1123 = vmatpush.bf16.msra.mxu0 %v1082
        %1124 = vmatpush.bf16.msra.mxu0 %v1078
        %1125 = vmatpush.bf16.msra.mxu0 %v1074
        %1126 = vmatpush.bf16.msra.mxu0 %v1070
        %1127 = vmatpush.bf16.msra.mxu0 %v1066
        %1128 = vmatpush.bf16.msra.mxu0 %v1062
        %1129 = vmatpush.bf16.msra.mxu0 %v1058
        %1130 = vmatmul.bf16.gmra.mxu0 %v929
        %v1131 = vpop.f32.mrf.mxu0
        %v1132 = vadd.f32 0.0, %v1131
        %v1133 = vpop.f32.mrf.mxu0
        %1134 = vdwg.mxu0
        %1135 = vmatpush.bf16.msra.mxu0 %v1087
        %1136 = vmatpush.bf16.msra.mxu0 %v1083
        %1137 = vmatpush.bf16.msra.mxu0 %v1079
        %1138 = vmatpush.bf16.msra.mxu0 %v1075
        %1139 = vmatpush.bf16.msra.mxu0 %v1071
        %1140 = vmatpush.bf16.msra.mxu0 %v1067
        %1141 = vmatpush.bf16.msra.mxu0 %v1063
        %1142 = vmatpush.bf16.msra.mxu0 %v1059
        %1143 = vmatmul.bf16.gmra.mxu0 %v929
        %v1144 = vpop.f32.mrf.mxu0
        %v1145 = vadd.f32 0.0, %v1144
        %v1146 = vpop.f32.mrf.mxu0
        %1147 = vdwg.mxu0
        %1148 = vmatpush.bf16.msra.mxu0 %v1088
        %1149 = vmatpush.bf16.msra.mxu0 %v1084
        %1150 = vmatpush.bf16.msra.mxu0 %v1080
        %1151 = vmatpush.bf16.msra.mxu0 %v1076
        %1152 = vmatpush.bf16.msra.mxu0 %v1072
        %1153 = vmatpush.bf16.msra.mxu0 %v1068
        %1154 = vmatpush.bf16.msra.mxu0 %v1064
        %1155 = vmatpush.bf16.msra.mxu0 %v1060
        %1156 = vmatmul.bf16.gmra.mxu0 %v929
        %v1157 = vpop.f32.mrf.mxu0
        %v1158 = vadd.f32 0.0, %v1157
        %v1159 = vpop.f32.mrf.mxu0
        %1160 = vdwg.mxu0
        %1161 = vmatpush.bf16.msra.mxu0 %v1089
        %1162 = vmatpush.bf16.msra.mxu0 %v1085
        %1163 = vmatpush.bf16.msra.mxu0 %v1081
        %1164 = vmatpush.bf16.msra.mxu0 %v1077
        %1165 = vmatpush.bf16.msra.mxu0 %v1073
        %1166 = vmatpush.bf16.msra.mxu0 %v1069
        %1167 = vmatpush.bf16.msra.mxu0 %v1065
        %1168 = vmatpush.bf16.msra.mxu0 %v1061
        %1169 = vmatmul.bf16.gmra.mxu0 %v929
        %v1170 = vpop.f32.mrf.mxu0
        %v1171 = vadd.f32 0.0, %v1170
        %v1172 = vpop.f32.mrf.mxu0
        %1173 = vdwg.mxu0
        %v1174 = vadd.f32 %v925, %v1132
        %v1175 = vadd.f32 %v926, %v1145
        %v1176 = vadd.f32 %v927, %v1158
        %v1177 = vadd.f32 %v928, %v1171
        %v1178 = vmul.f32 %v1174, 0.5
        %v1179 = vtanh.pop %v1178
        %v1180 = vmul.f32 %v1179, 0.5
        %v1181 = vadd.f32 %v1180, 0.5
        %v1182 = vmul.f32 %v1175, 0.5
        %v1183 = vtanh.pop %v1182
        %v1184 = vmul.f32 %v1183, 0.5
        %v1185 = vadd.f32 %v1184, 0.5
        %v1186 = vtanh.pop %v1176
        %v1187 = vmul.f32 %v1177, 0.5
        %v1188 = vtanh.pop %v1187
        %v1189 = vmul.f32 %v1188, 0.5
        %v1190 = vadd.f32 %v1189, 0.5
        %v1191 = vmul.f32 %v1185, %v917
        %v1192 = vmul.f32 %v1181, %v1186
        %v1193 = vadd.f32 %v1191, %v1192
        %v1194 = vtanh.pop %v1193
        %v1195 = vmul.f32 %v1190, %v1194
        %s1196 = scalar_lea.vmem [#allocation2], 8
        %1197 = vst [vmem:[%s1196] sm:$0xff] %v1195
        %s1198 = scalar_lea.vmem %s4, 8
        %1199 = vst [vmem:[%s1198] sm:$0xff] %v1195
        %s1200 = smul.u32 2, 4
        %s1201 = smul.addr %s1200, 8
        %s1202 = scalar_lea.vmem [#allocation3], %s1201
        %v1203 = vld [vmem:[%s1202] sm:$0xff]
        %v1204 = vld [vmem:[%s1202 + $0x8] sm:$0xff]
        %v1205 = vld [vmem:[%s1202 + $0x10] sm:$0xff]
        %v1206 = vld [vmem:[%s1202 + $0x18] sm:$0xff]
        %v1207 = vpack.c.bf16 %v1195, %v1195
        %v1208 = vld [vmem:[%s230] sm:$0xff]
        %v1209 = vld [vmem:[%s230 + $0x8] sm:$0xff]
        %v1210 = vld [vmem:[%s230 + $0x10] sm:$0xff]
        %v1211 = vld [vmem:[%s230 + $0x18] sm:$0xff]
        %v1212 = vld [vmem:[%s230 + $0x20] sm:$0xff]
        %v1213 = vld [vmem:[%s230 + $0x28] sm:$0xff]
        %v1214 = vld [vmem:[%s230 + $0x30] sm:$0xff]
        %v1215 = vld [vmem:[%s230 + $0x38] sm:$0xff]
        %v1216 = vld [vmem:[%s230 + $0x40] sm:$0xff]
        %v1217 = vld [vmem:[%s230 + $0x48] sm:$0xff]
        %v1218 = vld [vmem:[%s230 + $0x50] sm:$0xff]
        %v1219 = vld [vmem:[%s230 + $0x58] sm:$0xff]
        %v1220 = vld [vmem:[%s230 + $0x60] sm:$0xff]
        %v1221 = vld [vmem:[%s230 + $0x68] sm:$0xff]
        %v1222 = vld [vmem:[%s230 + $0x70] sm:$0xff]
        %v1223 = vld [vmem:[%s230 + $0x78] sm:$0xff]
        %v1224 = vld [vmem:[%s230 + $0x80] sm:$0xff]
        %v1225 = vld [vmem:[%s230 + $0x88] sm:$0xff]
        %v1226 = vld [vmem:[%s230 + $0x90] sm:$0xff]
        %v1227 = vld [vmem:[%s230 + $0x98] sm:$0xff]
        %v1228 = vld [vmem:[%s230 + $0xa0] sm:$0xff]
        %v1229 = vld [vmem:[%s230 + $0xa8] sm:$0xff]
        %v1230 = vld [vmem:[%s230 + $0xb0] sm:$0xff]
        %v1231 = vld [vmem:[%s230 + $0xb8] sm:$0xff]
        %v1232 = vld [vmem:[%s230 + $0xc0] sm:$0xff]
        %v1233 = vld [vmem:[%s230 + $0xc8] sm:$0xff]
        %v1234 = vld [vmem:[%s230 + $0xd0] sm:$0xff]
        %v1235 = vld [vmem:[%s230 + $0xd8] sm:$0xff]
        %v1236 = vld [vmem:[%s230 + $0xe0] sm:$0xff]
        %v1237 = vld [vmem:[%s230 + $0xe8] sm:$0xff]
        %v1238 = vld [vmem:[%s230 + $0xf0] sm:$0xff]
        %v1239 = vld [vmem:[%s230 + $0xf8] sm:$0xff]
        %v1272 = vunpack.c.l.b16 %v1208
        %v1273 = vunpack.c.h.b16 %v1208
        %v1274 = vunpack.c.l.b16 %v1209
        %v1275 = vunpack.c.h.b16 %v1209
        %v1276 = vunpack.c.l.b16 %v1210
        %v1277 = vunpack.c.h.b16 %v1210
        %v1278 = vunpack.c.l.b16 %v1211
        %v1279 = vunpack.c.h.b16 %v1211
        %v1280 = vunpack.c.l.b16 %v1212
        %v1281 = vunpack.c.h.b16 %v1212
        %v1282 = vunpack.c.l.b16 %v1213
        %v1283 = vunpack.c.h.b16 %v1213
        %v1284 = vunpack.c.l.b16 %v1214
        %v1285 = vunpack.c.h.b16 %v1214
        %v1286 = vunpack.c.l.b16 %v1215
        %v1287 = vunpack.c.h.b16 %v1215
        %v1288 = vunpack.c.l.b16 %v1216
        %v1289 = vunpack.c.h.b16 %v1216
        %v1290 = vunpack.c.l.b16 %v1217
        %v1291 = vunpack.c.h.b16 %v1217
        %v1292 = vunpack.c.l.b16 %v1218
        %v1293 = vunpack.c.h.b16 %v1218
        %v1294 = vunpack.c.l.b16 %v1219
        %v1295 = vunpack.c.h.b16 %v1219
        %v1296 = vunpack.c.l.b16 %v1220
        %v1297 = vunpack.c.h.b16 %v1220
        %v1298 = vunpack.c.l.b16 %v1221
        %v1299 = vunpack.c.h.b16 %v1221
        %v1300 = vunpack.c.l.b16 %v1222
        %v1301 = vunpack.c.h.b16 %v1222
        %v1302 = vunpack.c.l.b16 %v1223
        %v1303 = vunpack.c.h.b16 %v1223
        %v1304 = vunpack.c.l.b16 %v1224
        %v1305 = vunpack.c.h.b16 %v1224
        %v1306 = vunpack.c.l.b16 %v1225
        %v1307 = vunpack.c.h.b16 %v1225
        %v1308 = vunpack.c.l.b16 %v1226
        %v1309 = vunpack.c.h.b16 %v1226
        %v1310 = vunpack.c.l.b16 %v1227
        %v1311 = vunpack.c.h.b16 %v1227
        %v1312 = vunpack.c.l.b16 %v1228
        %v1313 = vunpack.c.h.b16 %v1228
        %v1314 = vunpack.c.l.b16 %v1229
        %v1315 = vunpack.c.h.b16 %v1229
        %v1316 = vunpack.c.l.b16 %v1230
        %v1317 = vunpack.c.h.b16 %v1230
        %v1318 = vunpack.c.l.b16 %v1231
        %v1319 = vunpack.c.h.b16 %v1231
        %v1320 = vunpack.c.l.b16 %v1232
        %v1321 = vunpack.c.h.b16 %v1232
        %v1322 = vunpack.c.l.b16 %v1233
        %v1323 = vunpack.c.h.b16 %v1233
        %v1324 = vunpack.c.l.b16 %v1234
        %v1325 = vunpack.c.h.b16 %v1234
        %v1326 = vunpack.c.l.b16 %v1235
        %v1327 = vunpack.c.h.b16 %v1235
        %v1328 = vunpack.c.l.b16 %v1236
        %v1329 = vunpack.c.h.b16 %v1236
        %v1330 = vunpack.c.l.b16 %v1237
        %v1331 = vunpack.c.h.b16 %v1237
        %v1332 = vunpack.c.l.b16 %v1238
        %v1333 = vunpack.c.h.b16 %v1238
        %v1334 = vunpack.c.l.b16 %v1239
        %v1335 = vunpack.c.h.b16 %v1239
        %v1336 = vpack.c.b16 %v1276, %v1272
        %v1337 = vpack.c.b16 %v1277, %v1273
        %v1338 = vpack.c.b16 %v1278, %v1274
        %v1339 = vpack.c.b16 %v1279, %v1275
        %v1340 = vpack.c.b16 %v1284, %v1280
        %v1341 = vpack.c.b16 %v1285, %v1281
        %v1342 = vpack.c.b16 %v1286, %v1282
        %v1343 = vpack.c.b16 %v1287, %v1283
        %v1344 = vpack.c.b16 %v1292, %v1288
        %v1345 = vpack.c.b16 %v1293, %v1289
        %v1346 = vpack.c.b16 %v1294, %v1290
        %v1347 = vpack.c.b16 %v1295, %v1291
        %v1348 = vpack.c.b16 %v1300, %v1296
        %v1349 = vpack.c.b16 %v1301, %v1297
        %v1350 = vpack.c.b16 %v1302, %v1298
        %v1351 = vpack.c.b16 %v1303, %v1299
        %v1352 = vpack.c.b16 %v1308, %v1304
        %v1353 = vpack.c.b16 %v1309, %v1305
        %v1354 = vpack.c.b16 %v1310, %v1306
        %v1355 = vpack.c.b16 %v1311, %v1307
        %v1356 = vpack.c.b16 %v1316, %v1312
        %v1357 = vpack.c.b16 %v1317, %v1313
        %v1358 = vpack.c.b16 %v1318, %v1314
        %v1359 = vpack.c.b16 %v1319, %v1315
        %v1360 = vpack.c.b16 %v1324, %v1320
        %v1361 = vpack.c.b16 %v1325, %v1321
        %v1362 = vpack.c.b16 %v1326, %v1322
        %v1363 = vpack.c.b16 %v1327, %v1323
        %v1364 = vpack.c.b16 %v1332, %v1328
        %v1365 = vpack.c.b16 %v1333, %v1329
        %v1366 = vpack.c.b16 %v1334, %v1330
        %v1367 = vpack.c.b16 %v1335, %v1331
        %1400 = vmatpush.bf16.msra.mxu0 %v1364
        %1401 = vmatpush.bf16.msra.mxu0 %v1360
        %1402 = vmatpush.bf16.msra.mxu0 %v1356
        %1403 = vmatpush.bf16.msra.mxu0 %v1352
        %1404 = vmatpush.bf16.msra.mxu0 %v1348
        %1405 = vmatpush.bf16.msra.mxu0 %v1344
        %1406 = vmatpush.bf16.msra.mxu0 %v1340
        %1407 = vmatpush.bf16.msra.mxu0 %v1336
        %1408 = vmatmul.bf16.gmra.mxu0 %v1207
        %v1409 = vpop.f32.mrf.mxu0
        %v1410 = vadd.f32 0.0, %v1409
        %v1411 = vpop.f32.mrf.mxu0
        %1412 = vdwg.mxu0
        %1413 = vmatpush.bf16.msra.mxu0 %v1365
        %1414 = vmatpush.bf16.msra.mxu0 %v1361
        %1415 = vmatpush.bf16.msra.mxu0 %v1357
        %1416 = vmatpush.bf16.msra.mxu0 %v1353
        %1417 = vmatpush.bf16.msra.mxu0 %v1349
        %1418 = vmatpush.bf16.msra.mxu0 %v1345
        %1419 = vmatpush.bf16.msra.mxu0 %v1341
        %1420 = vmatpush.bf16.msra.mxu0 %v1337
        %1421 = vmatmul.bf16.gmra.mxu0 %v1207
        %v1422 = vpop.f32.mrf.mxu0
        %v1423 = vadd.f32 0.0, %v1422
        %v1424 = vpop.f32.mrf.mxu0
        %1425 = vdwg.mxu0
        %1426 = vmatpush.bf16.msra.mxu0 %v1366
        %1427 = vmatpush.bf16.msra.mxu0 %v1362
        %1428 = vmatpush.bf16.msra.mxu0 %v1358
        %1429 = vmatpush.bf16.msra.mxu0 %v1354
        %1430 = vmatpush.bf16.msra.mxu0 %v1350
        %1431 = vmatpush.bf16.msra.mxu0 %v1346
        %1432 = vmatpush.bf16.msra.mxu0 %v1342
        %1433 = vmatpush.bf16.msra.mxu0 %v1338
        %1434 = vmatmul.bf16.gmra.mxu0 %v1207
        %v1435 = vpop.f32.mrf.mxu0
        %v1436 = vadd.f32 0.0, %v1435
        %v1437 = vpop.f32.mrf.mxu0
        %1438 = vdwg.mxu0
        %1439 = vmatpush.bf16.msra.mxu0 %v1367
        %1440 = vmatpush.bf16.msra.mxu0 %v1363
        %1441 = vmatpush.bf16.msra.mxu0 %v1359
        %1442 = vmatpush.bf16.msra.mxu0 %v1355
        %1443 = vmatpush.bf16.msra.mxu0 %v1351
        %1444 = vmatpush.bf16.msra.mxu0 %v1347
        %1445 = vmatpush.bf16.msra.mxu0 %v1343
        %1446 = vmatpush.bf16.msra.mxu0 %v1339
        %1447 = vmatmul.bf16.gmra.mxu0 %v1207
        %v1448 = vpop.f32.mrf.mxu0
        %v1449 = vadd.f32 0.0, %v1448
        %v1450 = vpop.f32.mrf.mxu0
        %1451 = vdwg.mxu0
        %v1452 = vadd.f32 %v1203, %v1410
        %v1453 = vadd.f32 %v1204, %v1423
        %v1454 = vadd.f32 %v1205, %v1436
        %v1455 = vadd.f32 %v1206, %v1449
        %v1456 = vmul.f32 %v1452, 0.5
        %v1457 = vtanh.pop %v1456
        %v1458 = vmul.f32 %v1457, 0.5
        %v1459 = vadd.f32 %v1458, 0.5
        %v1460 = vmul.f32 %v1453, 0.5
        %v1461 = vtanh.pop %v1460
        %v1462 = vmul.f32 %v1461, 0.5
        %v1463 = vadd.f32 %v1462, 0.5
        %v1464 = vtanh.pop %v1454
        %v1465 = vmul.f32 %v1455, 0.5
        %v1466 = vtanh.pop %v1465
        %v1467 = vmul.f32 %v1466, 0.5
        %v1468 = vadd.f32 %v1467, 0.5
        %v1469 = vmul.f32 %v1463, %v1193
        %v1470 = vmul.f32 %v1459, %v1464
        %v1471 = vadd.f32 %v1469, %v1470
        %v1472 = vtanh.pop %v1471
        %v1473 = vmul.f32 %v1468, %v1472
        %s1474 = scalar_lea.vmem [#allocation2], 16
        %1475 = vst [vmem:[%s1474] sm:$0xff] %v1473
        %s1476 = scalar_lea.vmem %s4, 16
        %1477 = vst [vmem:[%s1476] sm:$0xff] %v1473
        %s1478 = smul.u32 3, 4
        %s1479 = smul.addr %s1478, 8
        %s1480 = scalar_lea.vmem [#allocation3], %s1479
        %v1481 = vld [vmem:[%s1480] sm:$0xff]
        %v1482 = vld [vmem:[%s1480 + $0x8] sm:$0xff]
        %v1483 = vld [vmem:[%s1480 + $0x10] sm:$0xff]
        %v1484 = vld [vmem:[%s1480 + $0x18] sm:$0xff]
        %v1485 = vpack.c.bf16 %v1473, %v1473
        %v1486 = vld [vmem:[%s230] sm:$0xff]
        %v1487 = vld [vmem:[%s230 + $0x8] sm:$0xff]
        %v1488 = vld [vmem:[%s230 + $0x10] sm:$0xff]
        %v1489 = vld [vmem:[%s230 + $0x18] sm:$0xff]
        %v1490 = vld [vmem:[%s230 + $0x20] sm:$0xff]
        %v1491 = vld [vmem:[%s230 + $0x28] sm:$0xff]
        %v1492 = vld [vmem:[%s230 + $0x30] sm:$0xff]
        %v1493 = vld [vmem:[%s230 + $0x38] sm:$0xff]
        %v1494 = vld [vmem:[%s230 + $0x40] sm:$0xff]
        %v1495 = vld [vmem:[%s230 + $0x48] sm:$0xff]
        %v1496 = vld [vmem:[%s230 + $0x50] sm:$0xff]
        %v1497 = vld [vmem:[%s230 + $0x58] sm:$0xff]
        %v1498 = vld [vmem:[%s230 + $0x60] sm:$0xff]
        %v1499 = vld [vmem:[%s230 + $0x68] sm:$0xff]
        %v1500 = vld [vmem:[%s230 + $0x70] sm:$0xff]
        %v1501 = vld [vmem:[%s230 + $0x78] sm:$0xff]
        %v1502 = vld [vmem:[%s230 + $0x80] sm:$0xff]
        %v1503 = vld [vmem:[%s230 + $0x88] sm:$0xff]
        %v1504 = vld [vmem:[%s230 + $0x90] sm:$0xff]
        %v1505 = vld [vmem:[%s230 + $0x98] sm:$0xff]
        %v1506 = vld [vmem:[%s230 + $0xa0] sm:$0xff]
        %v1507 = vld [vmem:[%s230 + $0xa8] sm:$0xff]
        %v1508 = vld [vmem:[%s230 + $0xb0] sm:$0xff]
        %v1509 = vld [vmem:[%s230 + $0xb8] sm:$0xff]
        %v1510 = vld [vmem:[%s230 + $0xc0] sm:$0xff]
        %v1511 = vld [vmem:[%s230 + $0xc8] sm:$0xff]
        %v1512 = vld [vmem:[%s230 + $0xd0] sm:$0xff]
        %v1513 = vld [vmem:[%s230 + $0xd8] sm:$0xff]
        %v1514 = vld [vmem:[%s230 + $0xe0] sm:$0xff]
        %v1515 = vld [vmem:[%s230 + $0xe8] sm:$0xff]
        %v1516 = vld [vmem:[%s230 + $0xf0] sm:$0xff]
        %v1517 = vld [vmem:[%s230 + $0xf8] sm:$0xff]
        %v1550 = vunpack.c.l.b16 %v1486
        %v1551 = vunpack.c.h.b16 %v1486
        %v1552 = vunpack.c.l.b16 %v1487
        %v1553 = vunpack.c.h.b16 %v1487
        %v1554 = vunpack.c.l.b16 %v1488
        %v1555 = vunpack.c.h.b16 %v1488
        %v1556 = vunpack.c.l.b16 %v1489
        %v1557 = vunpack.c.h.b16 %v1489
        %v1558 = vunpack.c.l.b16 %v1490
        %v1559 = vunpack.c.h.b16 %v1490
        %v1560 = vunpack.c.l.b16 %v1491
        %v1561 = vunpack.c.h.b16 %v1491
        %v1562 = vunpack.c.l.b16 %v1492
        %v1563 = vunpack.c.h.b16 %v1492
        %v1564 = vunpack.c.l.b16 %v1493
        %v1565 = vunpack.c.h.b16 %v1493
        %v1566 = vunpack.c.l.b16 %v1494
        %v1567 = vunpack.c.h.b16 %v1494
        %v1568 = vunpack.c.l.b16 %v1495
        %v1569 = vunpack.c.h.b16 %v1495
        %v1570 = vunpack.c.l.b16 %v1496
        %v1571 = vunpack.c.h.b16 %v1496
        %v1572 = vunpack.c.l.b16 %v1497
        %v1573 = vunpack.c.h.b16 %v1497
        %v1574 = vunpack.c.l.b16 %v1498
        %v1575 = vunpack.c.h.b16 %v1498
        %v1576 = vunpack.c.l.b16 %v1499
        %v1577 = vunpack.c.h.b16 %v1499
        %v1578 = vunpack.c.l.b16 %v1500
        %v1579 = vunpack.c.h.b16 %v1500
        %v1580 = vunpack.c.l.b16 %v1501
        %v1581 = vunpack.c.h.b16 %v1501
        %v1582 = vunpack.c.l.b16 %v1502
        %v1583 = vunpack.c.h.b16 %v1502
        %v1584 = vunpack.c.l.b16 %v1503
        %v1585 = vunpack.c.h.b16 %v1503
        %v1586 = vunpack.c.l.b16 %v1504
        %v1587 = vunpack.c.h.b16 %v1504
        %v1588 = vunpack.c.l.b16 %v1505
        %v1589 = vunpack.c.h.b16 %v1505
        %v1590 = vunpack.c.l.b16 %v1506
        %v1591 = vunpack.c.h.b16 %v1506
        %v1592 = vunpack.c.l.b16 %v1507
        %v1593 = vunpack.c.h.b16 %v1507
        %v1594 = vunpack.c.l.b16 %v1508
        %v1595 = vunpack.c.h.b16 %v1508
        %v1596 = vunpack.c.l.b16 %v1509
        %v1597 = vunpack.c.h.b16 %v1509
        %v1598 = vunpack.c.l.b16 %v1510
        %v1599 = vunpack.c.h.b16 %v1510
        %v1600 = vunpack.c.l.b16 %v1511
        %v1601 = vunpack.c.h.b16 %v1511
        %v1602 = vunpack.c.l.b16 %v1512
        %v1603 = vunpack.c.h.b16 %v1512
        %v1604 = vunpack.c.l.b16 %v1513
        %v1605 = vunpack.c.h.b16 %v1513
        %v1606 = vunpack.c.l.b16 %v1514
        %v1607 = vunpack.c.h.b16 %v1514
        %v1608 = vunpack.c.l.b16 %v1515
        %v1609 = vunpack.c.h.b16 %v1515
        %v1610 = vunpack.c.l.b16 %v1516
        %v1611 = vunpack.c.h.b16 %v1516
        %v1612 = vunpack.c.l.b16 %v1517
        %v1613 = vunpack.c.h.b16 %v1517
        %v1614 = vpack.c.b16 %v1554, %v1550
        %v1615 = vpack.c.b16 %v1555, %v1551
        %v1616 = vpack.c.b16 %v1556, %v1552
        %v1617 = vpack.c.b16 %v1557, %v1553
        %v1618 = vpack.c.b16 %v1562, %v1558
        %v1619 = vpack.c.b16 %v1563, %v1559
        %v1620 = vpack.c.b16 %v1564, %v1560
        %v1621 = vpack.c.b16 %v1565, %v1561
        %v1622 = vpack.c.b16 %v1570, %v1566
        %v1623 = vpack.c.b16 %v1571, %v1567
        %v1624 = vpack.c.b16 %v1572, %v1568
        %v1625 = vpack.c.b16 %v1573, %v1569
        %v1626 = vpack.c.b16 %v1578, %v1574
        %v1627 = vpack.c.b16 %v1579, %v1575
        %v1628 = vpack.c.b16 %v1580, %v1576
        %v1629 = vpack.c.b16 %v1581, %v1577
        %v1630 = vpack.c.b16 %v1586, %v1582
        %v1631 = vpack.c.b16 %v1587, %v1583
        %v1632 = vpack.c.b16 %v1588, %v1584
        %v1633 = vpack.c.b16 %v1589, %v1585
        %v1634 = vpack.c.b16 %v1594, %v1590
        %v1635 = vpack.c.b16 %v1595, %v1591
        %v1636 = vpack.c.b16 %v1596, %v1592
        %v1637 = vpack.c.b16 %v1597, %v1593
        %v1638 = vpack.c.b16 %v1602, %v1598
        %v1639 = vpack.c.b16 %v1603, %v1599
        %v1640 = vpack.c.b16 %v1604, %v1600
        %v1641 = vpack.c.b16 %v1605, %v1601
        %v1642 = vpack.c.b16 %v1610, %v1606
        %v1643 = vpack.c.b16 %v1611, %v1607
        %v1644 = vpack.c.b16 %v1612, %v1608
        %v1645 = vpack.c.b16 %v1613, %v1609
        %1678 = vmatpush.bf16.msra.mxu0 %v1642
        %1679 = vmatpush.bf16.msra.mxu0 %v1638
        %1680 = vmatpush.bf16.msra.mxu0 %v1634
        %1681 = vmatpush.bf16.msra.mxu0 %v1630
        %1682 = vmatpush.bf16.msra.mxu0 %v1626
        %1683 = vmatpush.bf16.msra.mxu0 %v1622
        %1684 = vmatpush.bf16.msra.mxu0 %v1618
        %1685 = vmatpush.bf16.msra.mxu0 %v1614
        %1686 = vmatmul.bf16.gmra.mxu0 %v1485
        %v1687 = vpop.f32.mrf.mxu0
        %v1688 = vadd.f32 0.0, %v1687
        %v1689 = vpop.f32.mrf.mxu0
        %1690 = vdwg.mxu0
        %1691 = vmatpush.bf16.msra.mxu0 %v1643
        %1692 = vmatpush.bf16.msra.mxu0 %v1639
        %1693 = vmatpush.bf16.msra.mxu0 %v1635
        %1694 = vmatpush.bf16.msra.mxu0 %v1631
        %1695 = vmatpush.bf16.msra.mxu0 %v1627
        %1696 = vmatpush.bf16.msra.mxu0 %v1623
        %1697 = vmatpush.bf16.msra.mxu0 %v1619
        %1698 = vmatpush.bf16.msra.mxu0 %v1615
        %1699 = vmatmul.bf16.gmra.mxu0 %v1485
        %v1700 = vpop.f32.mrf.mxu0
        %v1701 = vadd.f32 0.0, %v1700
        %v1702 = vpop.f32.mrf.mxu0
        %1703 = vdwg.mxu0
        %1704 = vmatpush.bf16.msra.mxu0 %v1644
        %1705 = vmatpush.bf16.msra.mxu0 %v1640
        %1706 = vmatpush.bf16.msra.mxu0 %v1636
        %1707 = vmatpush.bf16.msra.mxu0 %v1632
        %1708 = vmatpush.bf16.msra.mxu0 %v1628
        %1709 = vmatpush.bf16.msra.mxu0 %v1624
        %1710 = vmatpush.bf16.msra.mxu0 %v1620
        %1711 = vmatpush.bf16.msra.mxu0 %v1616
        %1712 = vmatmul.bf16.gmra.mxu0 %v1485
        %v1713 = vpop.f32.mrf.mxu0
        %v1714 = vadd.f32 0.0, %v1713
        %v1715 = vpop.f32.mrf.mxu0
        %1716 = vdwg.mxu0
        %1717 = vmatpush.bf16.msra.mxu0 %v1645
        %1718 = vmatpush.bf16.msra.mxu0 %v1641
        %1719 = vmatpush.bf16.msra.mxu0 %v1637
        %1720 = vmatpush.bf16.msra.mxu0 %v1633
        %1721 = vmatpush.bf16.msra.mxu0 %v1629
        %1722 = vmatpush.bf16.msra.mxu0 %v1625
        %1723 = vmatpush.bf16.msra.mxu0 %v1621
        %1724 = vmatpush.bf16.msra.mxu0 %v1617
        %1725 = vmatmul.bf16.gmra.mxu0 %v1485
        %v1726 = vpop.f32.mrf.mxu0
        %v1727 = vadd.f32 0.0, %v1726
        %v1728 = vpop.f32.mrf.mxu0
        %1729 = vdwg.mxu0
        %v1730 = vadd.f32 %v1481, %v1688
        %v1731 = vadd.f32 %v1482, %v1701
        %v1732 = vadd.f32 %v1483, %v1714
        %v1733 = vadd.f32 %v1484, %v1727
        %v1734 = vmul.f32 %v1730, 0.5
        %v1735 = vtanh.pop %v1734
        %v1736 = vmul.f32 %v1735, 0.5
        %v1737 = vadd.f32 %v1736, 0.5
        %v1738 = vmul.f32 %v1731, 0.5
        %v1739 = vtanh.pop %v1738
        %v1740 = vmul.f32 %v1739, 0.5
        %v1741 = vadd.f32 %v1740, 0.5
        %v1742 = vtanh.pop %v1732
        %v1743 = vmul.f32 %v1733, 0.5
        %v1744 = vtanh.pop %v1743
        %v1745 = vmul.f32 %v1744, 0.5
        %v1746 = vadd.f32 %v1745, 0.5
        %v1747 = vmul.f32 %v1741, %v1471
        %v1748 = vmul.f32 %v1737, %v1742
        %v1749 = vadd.f32 %v1747, %v1748
        %v1750 = vtanh.pop %v1749
        %v1751 = vmul.f32 %v1746, %v1750
        %s1752 = scalar_lea.vmem [#allocation2], 24
        %1753 = vst [vmem:[%s1752] sm:$0xff] %v1751
        %s1754 = scalar_lea.vmem %s4, 24
        %1755 = vst [vmem:[%s1754] sm:$0xff] %v1751
        %s1756 = smul.u32 4, 4
        %s1757 = smul.addr %s1756, 8
        %s1758 = scalar_lea.vmem [#allocation3], %s1757
        %v1759 = vld [vmem:[%s1758] sm:$0xff]
        %v1760 = vld [vmem:[%s1758 + $0x8] sm:$0xff]
        %v1761 = vld [vmem:[%s1758 + $0x10] sm:$0xff]
        %v1762 = vld [vmem:[%s1758 + $0x18] sm:$0xff]
        %v1763 = vpack.c.bf16 %v1751, %v1751
        %v1764 = vld [vmem:[%s230] sm:$0xff]
        %v1765 = vld [vmem:[%s230 + $0x8] sm:$0xff]
        %v1766 = vld [vmem:[%s230 + $0x10] sm:$0xff]
        %v1767 = vld [vmem:[%s230 + $0x18] sm:$0xff]
        %v1768 = vld [vmem:[%s230 + $0x20] sm:$0xff]
        %v1769 = vld [vmem:[%s230 + $0x28] sm:$0xff]
        %v1770 = vld [vmem:[%s230 + $0x30] sm:$0xff]
        %v1771 = vld [vmem:[%s230 + $0x38] sm:$0xff]
        %v1772 = vld [vmem:[%s230 + $0x40] sm:$0xff]
        %v1773 = vld [vmem:[%s230 + $0x48] sm:$0xff]
        %v1774 = vld [vmem:[%s230 + $0x50] sm:$0xff]
        %v1775 = vld [vmem:[%s230 + $0x58] sm:$0xff]
        %v1776 = vld [vmem:[%s230 + $0x60] sm:$0xff]
        %v1777 = vld [vmem:[%s230 + $0x68] sm:$0xff]
        %v1778 = vld [vmem:[%s230 + $0x70] sm:$0xff]
        %v1779 = vld [vmem:[%s230 + $0x78] sm:$0xff]
        %v1780 = vld [vmem:[%s230 + $0x80] sm:$0xff]
        %v1781 = vld [vmem:[%s230 + $0x88] sm:$0xff]
        %v1782 = vld [vmem:[%s230 + $0x90] sm:$0xff]
        %v1783 = vld [vmem:[%s230 + $0x98] sm:$0xff]
        %v1784 = vld [vmem:[%s230 + $0xa0] sm:$0xff]
        %v1785 = vld [vmem:[%s230 + $0xa8] sm:$0xff]
        %v1786 = vld [vmem:[%s230 + $0xb0] sm:$0xff]
        %v1787 = vld [vmem:[%s230 + $0xb8] sm:$0xff]
        %v1788 = vld [vmem:[%s230 + $0xc0] sm:$0xff]
        %v1789 = vld [vmem:[%s230 + $0xc8] sm:$0xff]
        %v1790 = vld [vmem:[%s230 + $0xd0] sm:$0xff]
        %v1791 = vld [vmem:[%s230 + $0xd8] sm:$0xff]
        %v1792 = vld [vmem:[%s230 + $0xe0] sm:$0xff]
        %v1793 = vld [vmem:[%s230 + $0xe8] sm:$0xff]
        %v1794 = vld [vmem:[%s230 + $0xf0] sm:$0xff]
        %v1795 = vld [vmem:[%s230 + $0xf8] sm:$0xff]
        %v1828 = vunpack.c.l.b16 %v1764
        %v1829 = vunpack.c.h.b16 %v1764
        %v1830 = vunpack.c.l.b16 %v1765
        %v1831 = vunpack.c.h.b16 %v1765
        %v1832 = vunpack.c.l.b16 %v1766
        %v1833 = vunpack.c.h.b16 %v1766
        %v1834 = vunpack.c.l.b16 %v1767
        %v1835 = vunpack.c.h.b16 %v1767
        %v1836 = vunpack.c.l.b16 %v1768
        %v1837 = vunpack.c.h.b16 %v1768
        %v1838 = vunpack.c.l.b16 %v1769
        %v1839 = vunpack.c.h.b16 %v1769
        %v1840 = vunpack.c.l.b16 %v1770
        %v1841 = vunpack.c.h.b16 %v1770
        %v1842 = vunpack.c.l.b16 %v1771
        %v1843 = vunpack.c.h.b16 %v1771
        %v1844 = vunpack.c.l.b16 %v1772
        %v1845 = vunpack.c.h.b16 %v1772
        %v1846 = vunpack.c.l.b16 %v1773
        %v1847 = vunpack.c.h.b16 %v1773
        %v1848 = vunpack.c.l.b16 %v1774
        %v1849 = vunpack.c.h.b16 %v1774
        %v1850 = vunpack.c.l.b16 %v1775
        %v1851 = vunpack.c.h.b16 %v1775
        %v1852 = vunpack.c.l.b16 %v1776
        %v1853 = vunpack.c.h.b16 %v1776
        %v1854 = vunpack.c.l.b16 %v1777
        %v1855 = vunpack.c.h.b16 %v1777
        %v1856 = vunpack.c.l.b16 %v1778
        %v1857 = vunpack.c.h.b16 %v1778
        %v1858 = vunpack.c.l.b16 %v1779
        %v1859 = vunpack.c.h.b16 %v1779
        %v1860 = vunpack.c.l.b16 %v1780
        %v1861 = vunpack.c.h.b16 %v1780
        %v1862 = vunpack.c.l.b16 %v1781
        %v1863 = vunpack.c.h.b16 %v1781
        %v1864 = vunpack.c.l.b16 %v1782
        %v1865 = vunpack.c.h.b16 %v1782
        %v1866 = vunpack.c.l.b16 %v1783
        %v1867 = vunpack.c.h.b16 %v1783
        %v1868 = vunpack.c.l.b16 %v1784
        %v1869 = vunpack.c.h.b16 %v1784
        %v1870 = vunpack.c.l.b16 %v1785
        %v1871 = vunpack.c.h.b16 %v1785
        %v1872 = vunpack.c.l.b16 %v1786
        %v1873 = vunpack.c.h.b16 %v1786
        %v1874 = vunpack.c.l.b16 %v1787
        %v1875 = vunpack.c.h.b16 %v1787
        %v1876 = vunpack.c.l.b16 %v1788
        %v1877 = vunpack.c.h.b16 %v1788
        %v1878 = vunpack.c.l.b16 %v1789
        %v1879 = vunpack.c.h.b16 %v1789
        %v1880 = vunpack.c.l.b16 %v1790
        %v1881 = vunpack.c.h.b16 %v1790
        %v1882 = vunpack.c.l.b16 %v1791
        %v1883 = vunpack.c.h.b16 %v1791
        %v1884 = vunpack.c.l.b16 %v1792
        %v1885 = vunpack.c.h.b16 %v1792
        %v1886 = vunpack.c.l.b16 %v1793
        %v1887 = vunpack.c.h.b16 %v1793
        %v1888 = vunpack.c.l.b16 %v1794
        %v1889 = vunpack.c.h.b16 %v1794
        %v1890 = vunpack.c.l.b16 %v1795
        %v1891 = vunpack.c.h.b16 %v1795
        %v1892 = vpack.c.b16 %v1832, %v1828
        %v1893 = vpack.c.b16 %v1833, %v1829
        %v1894 = vpack.c.b16 %v1834, %v1830
        %v1895 = vpack.c.b16 %v1835, %v1831
        %v1896 = vpack.c.b16 %v1840, %v1836
        %v1897 = vpack.c.b16 %v1841, %v1837
        %v1898 = vpack.c.b16 %v1842, %v1838
        %v1899 = vpack.c.b16 %v1843, %v1839
        %v1900 = vpack.c.b16 %v1848, %v1844
        %v1901 = vpack.c.b16 %v1849, %v1845
        %v1902 = vpack.c.b16 %v1850, %v1846
        %v1903 = vpack.c.b16 %v1851, %v1847
        %v1904 = vpack.c.b16 %v1856, %v1852
        %v1905 = vpack.c.b16 %v1857, %v1853
        %v1906 = vpack.c.b16 %v1858, %v1854
        %v1907 = vpack.c.b16 %v1859, %v1855
        %v1908 = vpack.c.b16 %v1864, %v1860
        %v1909 = vpack.c.b16 %v1865, %v1861
        %v1910 = vpack.c.b16 %v1866, %v1862
        %v1911 = vpack.c.b16 %v1867, %v1863
        %v1912 = vpack.c.b16 %v1872, %v1868
        %v1913 = vpack.c.b16 %v1873, %v1869
        %v1914 = vpack.c.b16 %v1874, %v1870
        %v1915 = vpack.c.b16 %v1875, %v1871
        %v1916 = vpack.c.b16 %v1880, %v1876
        %v1917 = vpack.c.b16 %v1881, %v1877
        %v1918 = vpack.c.b16 %v1882, %v1878
        %v1919 = vpack.c.b16 %v1883, %v1879
        %v1920 = vpack.c.b16 %v1888, %v1884
        %v1921 = vpack.c.b16 %v1889, %v1885
        %v1922 = vpack.c.b16 %v1890, %v1886
        %v1923 = vpack.c.b16 %v1891, %v1887
        %1956 = vmatpush.bf16.msra.mxu0 %v1920
        %1957 = vmatpush.bf16.msra.mxu0 %v1916
        %1958 = vmatpush.bf16.msra.mxu0 %v1912
        %1959 = vmatpush.bf16.msra.mxu0 %v1908
        %1960 = vmatpush.bf16.msra.mxu0 %v1904
        %1961 = vmatpush.bf16.msra.mxu0 %v1900
        %1962 = vmatpush.bf16.msra.mxu0 %v1896
        %1963 = vmatpush.bf16.msra.mxu0 %v1892
        %1964 = vmatmul.bf16.gmra.mxu0 %v1763
        %v1965 = vpop.f32.mrf.mxu0
        %v1966 = vadd.f32 0.0, %v1965
        %v1967 = vpop.f32.mrf.mxu0
        %1968 = vdwg.mxu0
        %1969 = vmatpush.bf16.msra.mxu0 %v1921
        %1970 = vmatpush.bf16.msra.mxu0 %v1917
        %1971 = vmatpush.bf16.msra.mxu0 %v1913
        %1972 = vmatpush.bf16.msra.mxu0 %v1909
        %1973 = vmatpush.bf16.msra.mxu0 %v1905
        %1974 = vmatpush.bf16.msra.mxu0 %v1901
        %1975 = vmatpush.bf16.msra.mxu0 %v1897
        %1976 = vmatpush.bf16.msra.mxu0 %v1893
        %1977 = vmatmul.bf16.gmra.mxu0 %v1763
        %v1978 = vpop.f32.mrf.mxu0
        %v1979 = vadd.f32 0.0, %v1978
        %v1980 = vpop.f32.mrf.mxu0
        %1981 = vdwg.mxu0
        %1982 = vmatpush.bf16.msra.mxu0 %v1922
        %1983 = vmatpush.bf16.msra.mxu0 %v1918
        %1984 = vmatpush.bf16.msra.mxu0 %v1914
        %1985 = vmatpush.bf16.msra.mxu0 %v1910
        %1986 = vmatpush.bf16.msra.mxu0 %v1906
        %1987 = vmatpush.bf16.msra.mxu0 %v1902
        %1988 = vmatpush.bf16.msra.mxu0 %v1898
        %1989 = vmatpush.bf16.msra.mxu0 %v1894
        %1990 = vmatmul.bf16.gmra.mxu0 %v1763
        %v1991 = vpop.f32.mrf.mxu0
        %v1992 = vadd.f32 0.0, %v1991
        %v1993 = vpop.f32.mrf.mxu0
        %1994 = vdwg.mxu0
        %1995 = vmatpush.bf16.msra.mxu0 %v1923
        %1996 = vmatpush.bf16.msra.mxu0 %v1919
        %1997 = vmatpush.bf16.msra.mxu0 %v1915
        %1998 = vmatpush.bf16.msra.mxu0 %v1911
        %1999 = vmatpush.bf16.msra.mxu0 %v1907
        %2000 = vmatpush.bf16.msra.mxu0 %v1903
        %2001 = vmatpush.bf16.msra.mxu0 %v1899
        %2002 = vmatpush.bf16.msra.mxu0 %v1895
        %2003 = vmatmul.bf16.gmra.mxu0 %v1763
        %v2004 = vpop.f32.mrf.mxu0
        %v2005 = vadd.f32 0.0, %v2004
        %v2006 = vpop.f32.mrf.mxu0
        %2007 = vdwg.mxu0
        %v2008 = vadd.f32 %v1759, %v1966
        %v2009 = vadd.f32 %v1760, %v1979
        %v2010 = vadd.f32 %v1761, %v1992
        %v2011 = vadd.f32 %v1762, %v2005
        %v2012 = vmul.f32 %v2008, 0.5
        %v2013 = vtanh.pop %v2012
        %v2014 = vmul.f32 %v2013, 0.5
        %v2015 = vadd.f32 %v2014, 0.5
        %v2016 = vmul.f32 %v2009, 0.5
        %v2017 = vtanh.pop %v2016
        %v2018 = vmul.f32 %v2017, 0.5
        %v2019 = vadd.f32 %v2018, 0.5
        %v2020 = vtanh.pop %v2010
        %v2021 = vmul.f32 %v2011, 0.5
        %v2022 = vtanh.pop %v2021
        %v2023 = vmul.f32 %v2022, 0.5
        %v2024 = vadd.f32 %v2023, 0.5
        %v2025 = vmul.f32 %v2019, %v1749
        %v2026 = vmul.f32 %v2015, %v2020
        %v2027 = vadd.f32 %v2025, %v2026
        %v2028 = vtanh.pop %v2027
        %v2029 = vmul.f32 %v2024, %v2028
        %s2030 = scalar_lea.vmem [#allocation2], 32
        %2031 = vst [vmem:[%s2030] sm:$0xff] %v2029
        %s2032 = scalar_lea.vmem %s4, 32
        %2033 = vst [vmem:[%s2032] sm:$0xff] %v2029
        %s2034 = smul.u32 5, 4
        %s2035 = smul.addr %s2034, 8
        %s2036 = scalar_lea.vmem [#allocation3], %s2035
        %v2037 = vld [vmem:[%s2036] sm:$0xff]
        %v2038 = vld [vmem:[%s2036 + $0x8] sm:$0xff]
        %v2039 = vld [vmem:[%s2036 + $0x10] sm:$0xff]
        %v2040 = vld [vmem:[%s2036 + $0x18] sm:$0xff]
        %v2041 = vpack.c.bf16 %v2029, %v2029
        %v2042 = vld [vmem:[%s230] sm:$0xff]
        %v2043 = vld [vmem:[%s230 + $0x8] sm:$0xff]
        %v2044 = vld [vmem:[%s230 + $0x10] sm:$0xff]
        %v2045 = vld [vmem:[%s230 + $0x18] sm:$0xff]
        %v2046 = vld [vmem:[%s230 + $0x20] sm:$0xff]
        %v2047 = vld [vmem:[%s230 + $0x28] sm:$0xff]
        %v2048 = vld [vmem:[%s230 + $0x30] sm:$0xff]
        %v2049 = vld [vmem:[%s230 + $0x38] sm:$0xff]
        %v2050 = vld [vmem:[%s230 + $0x40] sm:$0xff]
        %v2051 = vld [vmem:[%s230 + $0x48] sm:$0xff]
        %v2052 = vld [vmem:[%s230 + $0x50] sm:$0xff]
        %v2053 = vld [vmem:[%s230 + $0x58] sm:$0xff]
        %v2054 = vld [vmem:[%s230 + $0x60] sm:$0xff]
        %v2055 = vld [vmem:[%s230 + $0x68] sm:$0xff]
        %v2056 = vld [vmem:[%s230 + $0x70] sm:$0xff]
        %v2057 = vld [vmem:[%s230 + $0x78] sm:$0xff]
        %v2058 = vld [vmem:[%s230 + $0x80] sm:$0xff]
        %v2059 = vld [vmem:[%s230 + $0x88] sm:$0xff]
        %v2060 = vld [vmem:[%s230 + $0x90] sm:$0xff]
        %v2061 = vld [vmem:[%s230 + $0x98] sm:$0xff]
        %v2062 = vld [vmem:[%s230 + $0xa0] sm:$0xff]
        %v2063 = vld [vmem:[%s230 + $0xa8] sm:$0xff]
        %v2064 = vld [vmem:[%s230 + $0xb0] sm:$0xff]
        %v2065 = vld [vmem:[%s230 + $0xb8] sm:$0xff]
        %v2066 = vld [vmem:[%s230 + $0xc0] sm:$0xff]
        %v2067 = vld [vmem:[%s230 + $0xc8] sm:$0xff]
        %v2068 = vld [vmem:[%s230 + $0xd0] sm:$0xff]
        %v2069 = vld [vmem:[%s230 + $0xd8] sm:$0xff]
        %v2070 = vld [vmem:[%s230 + $0xe0] sm:$0xff]
        %v2071 = vld [vmem:[%s230 + $0xe8] sm:$0xff]
        %v2072 = vld [vmem:[%s230 + $0xf0] sm:$0xff]
        %v2073 = vld [vmem:[%s230 + $0xf8] sm:$0xff]
        %v2106 = vunpack.c.l.b16 %v2042
        %v2107 = vunpack.c.h.b16 %v2042
        %v2108 = vunpack.c.l.b16 %v2043
        %v2109 = vunpack.c.h.b16 %v2043
        %v2110 = vunpack.c.l.b16 %v2044
        %v2111 = vunpack.c.h.b16 %v2044
        %v2112 = vunpack.c.l.b16 %v2045
        %v2113 = vunpack.c.h.b16 %v2045
        %v2114 = vunpack.c.l.b16 %v2046
        %v2115 = vunpack.c.h.b16 %v2046
        %v2116 = vunpack.c.l.b16 %v2047
        %v2117 = vunpack.c.h.b16 %v2047
        %v2118 = vunpack.c.l.b16 %v2048
        %v2119 = vunpack.c.h.b16 %v2048
        %v2120 = vunpack.c.l.b16 %v2049
        %v2121 = vunpack.c.h.b16 %v2049
        %v2122 = vunpack.c.l.b16 %v2050
        %v2123 = vunpack.c.h.b16 %v2050
        %v2124 = vunpack.c.l.b16 %v2051
        %v2125 = vunpack.c.h.b16 %v2051
        %v2126 = vunpack.c.l.b16 %v2052
        %v2127 = vunpack.c.h.b16 %v2052
        %v2128 = vunpack.c.l.b16 %v2053
        %v2129 = vunpack.c.h.b16 %v2053
        %v2130 = vunpack.c.l.b16 %v2054
        %v2131 = vunpack.c.h.b16 %v2054
        %v2132 = vunpack.c.l.b16 %v2055
        %v2133 = vunpack.c.h.b16 %v2055
        %v2134 = vunpack.c.l.b16 %v2056
        %v2135 = vunpack.c.h.b16 %v2056
        %v2136 = vunpack.c.l.b16 %v2057
        %v2137 = vunpack.c.h.b16 %v2057
        %v2138 = vunpack.c.l.b16 %v2058
        %v2139 = vunpack.c.h.b16 %v2058
        %v2140 = vunpack.c.l.b16 %v2059
        %v2141 = vunpack.c.h.b16 %v2059
        %v2142 = vunpack.c.l.b16 %v2060
        %v2143 = vunpack.c.h.b16 %v2060
        %v2144 = vunpack.c.l.b16 %v2061
        %v2145 = vunpack.c.h.b16 %v2061
        %v2146 = vunpack.c.l.b16 %v2062
        %v2147 = vunpack.c.h.b16 %v2062
        %v2148 = vunpack.c.l.b16 %v2063
        %v2149 = vunpack.c.h.b16 %v2063
        %v2150 = vunpack.c.l.b16 %v2064
        %v2151 = vunpack.c.h.b16 %v2064
        %v2152 = vunpack.c.l.b16 %v2065
        %v2153 = vunpack.c.h.b16 %v2065
        %v2154 = vunpack.c.l.b16 %v2066
        %v2155 = vunpack.c.h.b16 %v2066
        %v2156 = vunpack.c.l.b16 %v2067
        %v2157 = vunpack.c.h.b16 %v2067
        %v2158 = vunpack.c.l.b16 %v2068
        %v2159 = vunpack.c.h.b16 %v2068
        %v2160 = vunpack.c.l.b16 %v2069
        %v2161 = vunpack.c.h.b16 %v2069
        %v2162 = vunpack.c.l.b16 %v2070
        %v2163 = vunpack.c.h.b16 %v2070
        %v2164 = vunpack.c.l.b16 %v2071
        %v2165 = vunpack.c.h.b16 %v2071
        %v2166 = vunpack.c.l.b16 %v2072
        %v2167 = vunpack.c.h.b16 %v2072
        %v2168 = vunpack.c.l.b16 %v2073
        %v2169 = vunpack.c.h.b16 %v2073
        %v2170 = vpack.c.b16 %v2110, %v2106
        %v2171 = vpack.c.b16 %v2111, %v2107
        %v2172 = vpack.c.b16 %v2112, %v2108
        %v2173 = vpack.c.b16 %v2113, %v2109
        %v2174 = vpack.c.b16 %v2118, %v2114
        %v2175 = vpack.c.b16 %v2119, %v2115
        %v2176 = vpack.c.b16 %v2120, %v2116
        %v2177 = vpack.c.b16 %v2121, %v2117
        %v2178 = vpack.c.b16 %v2126, %v2122
        %v2179 = vpack.c.b16 %v2127, %v2123
        %v2180 = vpack.c.b16 %v2128, %v2124
        %v2181 = vpack.c.b16 %v2129, %v2125
        %v2182 = vpack.c.b16 %v2134, %v2130
        %v2183 = vpack.c.b16 %v2135, %v2131
        %v2184 = vpack.c.b16 %v2136, %v2132
        %v2185 = vpack.c.b16 %v2137, %v2133
        %v2186 = vpack.c.b16 %v2142, %v2138
        %v2187 = vpack.c.b16 %v2143, %v2139
        %v2188 = vpack.c.b16 %v2144, %v2140
        %v2189 = vpack.c.b16 %v2145, %v2141
        %v2190 = vpack.c.b16 %v2150, %v2146
        %v2191 = vpack.c.b16 %v2151, %v2147
        %v2192 = vpack.c.b16 %v2152, %v2148
        %v2193 = vpack.c.b16 %v2153, %v2149
        %v2194 = vpack.c.b16 %v2158, %v2154
        %v2195 = vpack.c.b16 %v2159, %v2155
        %v2196 = vpack.c.b16 %v2160, %v2156
        %v2197 = vpack.c.b16 %v2161, %v2157
        %v2198 = vpack.c.b16 %v2166, %v2162
        %v2199 = vpack.c.b16 %v2167, %v2163
        %v2200 = vpack.c.b16 %v2168, %v2164
        %v2201 = vpack.c.b16 %v2169, %v2165
        %2234 = vmatpush.bf16.msra.mxu0 %v2198
        %2235 = vmatpush.bf16.msra.mxu0 %v2194
        %2236 = vmatpush.bf16.msra.mxu0 %v2190
        %2237 = vmatpush.bf16.msra.mxu0 %v2186
        %2238 = vmatpush.bf16.msra.mxu0 %v2182
        %2239 = vmatpush.bf16.msra.mxu0 %v2178
        %2240 = vmatpush.bf16.msra.mxu0 %v2174
        %2241 = vmatpush.bf16.msra.mxu0 %v2170
        %2242 = vmatmul.bf16.gmra.mxu0 %v2041
        %v2243 = vpop.f32.mrf.mxu0
        %v2244 = vadd.f32 0.0, %v2243
        %v2245 = vpop.f32.mrf.mxu0
        %2246 = vdwg.mxu0
        %2247 = vmatpush.bf16.msra.mxu0 %v2199
        %2248 = vmatpush.bf16.msra.mxu0 %v2195
        %2249 = vmatpush.bf16.msra.mxu0 %v2191
        %2250 = vmatpush.bf16.msra.mxu0 %v2187
        %2251 = vmatpush.bf16.msra.mxu0 %v2183
        %2252 = vmatpush.bf16.msra.mxu0 %v2179
        %2253 = vmatpush.bf16.msra.mxu0 %v2175
        %2254 = vmatpush.bf16.msra.mxu0 %v2171
        %2255 = vmatmul.bf16.gmra.mxu0 %v2041
        %v2256 = vpop.f32.mrf.mxu0
        %v2257 = vadd.f32 0.0, %v2256
        %v2258 = vpop.f32.mrf.mxu0
        %2259 = vdwg.mxu0
        %2260 = vmatpush.bf16.msra.mxu0 %v2200
        %2261 = vmatpush.bf16.msra.mxu0 %v2196
        %2262 = vmatpush.bf16.msra.mxu0 %v2192
        %2263 = vmatpush.bf16.msra.mxu0 %v2188
        %2264 = vmatpush.bf16.msra.mxu0 %v2184
        %2265 = vmatpush.bf16.msra.mxu0 %v2180
        %2266 = vmatpush.bf16.msra.mxu0 %v2176
        %2267 = vmatpush.bf16.msra.mxu0 %v2172
        %2268 = vmatmul.bf16.gmra.mxu0 %v2041
        %v2269 = vpop.f32.mrf.mxu0
        %v2270 = vadd.f32 0.0, %v2269
        %v2271 = vpop.f32.mrf.mxu0
        %2272 = vdwg.mxu0
        %2273 = vmatpush.bf16.msra.mxu0 %v2201
        %2274 = vmatpush.bf16.msra.mxu0 %v2197
        %2275 = vmatpush.bf16.msra.mxu0 %v2193
        %2276 = vmatpush.bf16.msra.mxu0 %v2189
        %2277 = vmatpush.bf16.msra.mxu0 %v2185
        %2278 = vmatpush.bf16.msra.mxu0 %v2181
        %2279 = vmatpush.bf16.msra.mxu0 %v2177
        %2280 = vmatpush.bf16.msra.mxu0 %v2173
        %2281 = vmatmul.bf16.gmra.mxu0 %v2041
        %v2282 = vpop.f32.mrf.mxu0
        %v2283 = vadd.f32 0.0, %v2282
        %v2284 = vpop.f32.mrf.mxu0
        %2285 = vdwg.mxu0
        %v2286 = vadd.f32 %v2037, %v2244
        %v2287 = vadd.f32 %v2038, %v2257
        %v2288 = vadd.f32 %v2039, %v2270
        %v2289 = vadd.f32 %v2040, %v2283
        %v2290 = vmul.f32 %v2286, 0.5
        %v2291 = vtanh.pop %v2290
        %v2292 = vmul.f32 %v2291, 0.5
        %v2293 = vadd.f32 %v2292, 0.5
        %v2294 = vmul.f32 %v2287, 0.5
        %v2295 = vtanh.pop %v2294
        %v2296 = vmul.f32 %v2295, 0.5
        %v2297 = vadd.f32 %v2296, 0.5
        %v2298 = vtanh.pop %v2288
        %v2299 = vmul.f32 %v2289, 0.5
        %v2300 = vtanh.pop %v2299
        %v2301 = vmul.f32 %v2300, 0.5
        %v2302 = vadd.f32 %v2301, 0.5
        %v2303 = vmul.f32 %v2297, %v2027
        %v2304 = vmul.f32 %v2293, %v2298
        %v2305 = vadd.f32 %v2303, %v2304
        %v2306 = vtanh.pop %v2305
        %v2307 = vmul.f32 %v2302, %v2306
        %s2308 = scalar_lea.vmem [#allocation2], 40
        %2309 = vst [vmem:[%s2308] sm:$0xff] %v2307
        %s2310 = scalar_lea.vmem %s4, 40
        %2311 = vst [vmem:[%s2310] sm:$0xff] %v2307
        %s2312 = smul.u32 6, 4
        %s2313 = smul.addr %s2312, 8
        %s2314 = scalar_lea.vmem [#allocation3], %s2313
        %v2315 = vld [vmem:[%s2314] sm:$0xff]
        %v2316 = vld [vmem:[%s2314 + $0x8] sm:$0xff]
        %v2317 = vld [vmem:[%s2314 + $0x10] sm:$0xff]
        %v2318 = vld [vmem:[%s2314 + $0x18] sm:$0xff]
        %v2319 = vpack.c.bf16 %v2307, %v2307
        %v2320 = vld [vmem:[%s230] sm:$0xff]
        %v2321 = vld [vmem:[%s230 + $0x8] sm:$0xff]
        %v2322 = vld [vmem:[%s230 + $0x10] sm:$0xff]
        %v2323 = vld [vmem:[%s230 + $0x18] sm:$0xff]
        %v2324 = vld [vmem:[%s230 + $0x20] sm:$0xff]
        %v2325 = vld [vmem:[%s230 + $0x28] sm:$0xff]
        %v2326 = vld [vmem:[%s230 + $0x30] sm:$0xff]
        %v2327 = vld [vmem:[%s230 + $0x38] sm:$0xff]
        %v2328 = vld [vmem:[%s230 + $0x40] sm:$0xff]
        %v2329 = vld [vmem:[%s230 + $0x48] sm:$0xff]
        %v2330 = vld [vmem:[%s230 + $0x50] sm:$0xff]
        %v2331 = vld [vmem:[%s230 + $0x58] sm:$0xff]
        %v2332 = vld [vmem:[%s230 + $0x60] sm:$0xff]
        %v2333 = vld [vmem:[%s230 + $0x68] sm:$0xff]
        %v2334 = vld [vmem:[%s230 + $0x70] sm:$0xff]
        %v2335 = vld [vmem:[%s230 + $0x78] sm:$0xff]
        %v2336 = vld [vmem:[%s230 + $0x80] sm:$0xff]
        %v2337 = vld [vmem:[%s230 + $0x88] sm:$0xff]
        %v2338 = vld [vmem:[%s230 + $0x90] sm:$0xff]
        %v2339 = vld [vmem:[%s230 + $0x98] sm:$0xff]
        %v2340 = vld [vmem:[%s230 + $0xa0] sm:$0xff]
        %v2341 = vld [vmem:[%s230 + $0xa8] sm:$0xff]
        %v2342 = vld [vmem:[%s230 + $0xb0] sm:$0xff]
        %v2343 = vld [vmem:[%s230 + $0xb8] sm:$0xff]
        %v2344 = vld [vmem:[%s230 + $0xc0] sm:$0xff]
        %v2345 = vld [vmem:[%s230 + $0xc8] sm:$0xff]
        %v2346 = vld [vmem:[%s230 + $0xd0] sm:$0xff]
        %v2347 = vld [vmem:[%s230 + $0xd8] sm:$0xff]
        %v2348 = vld [vmem:[%s230 + $0xe0] sm:$0xff]
        %v2349 = vld [vmem:[%s230 + $0xe8] sm:$0xff]
        %v2350 = vld [vmem:[%s230 + $0xf0] sm:$0xff]
        %v2351 = vld [vmem:[%s230 + $0xf8] sm:$0xff]
        %v2384 = vunpack.c.l.b16 %v2320
        %v2385 = vunpack.c.h.b16 %v2320
        %v2386 = vunpack.c.l.b16 %v2321
        %v2387 = vunpack.c.h.b16 %v2321
        %v2388 = vunpack.c.l.b16 %v2322
        %v2389 = vunpack.c.h.b16 %v2322
        %v2390 = vunpack.c.l.b16 %v2323
        %v2391 = vunpack.c.h.b16 %v2323
        %v2392 = vunpack.c.l.b16 %v2324
        %v2393 = vunpack.c.h.b16 %v2324
        %v2394 = vunpack.c.l.b16 %v2325
        %v2395 = vunpack.c.h.b16 %v2325
        %v2396 = vunpack.c.l.b16 %v2326
        %v2397 = vunpack.c.h.b16 %v2326
        %v2398 = vunpack.c.l.b16 %v2327
        %v2399 = vunpack.c.h.b16 %v2327
        %v2400 = vunpack.c.l.b16 %v2328
        %v2401 = vunpack.c.h.b16 %v2328
        %v2402 = vunpack.c.l.b16 %v2329
        %v2403 = vunpack.c.h.b16 %v2329
        %v2404 = vunpack.c.l.b16 %v2330
        %v2405 = vunpack.c.h.b16 %v2330
        %v2406 = vunpack.c.l.b16 %v2331
        %v2407 = vunpack.c.h.b16 %v2331
        %v2408 = vunpack.c.l.b16 %v2332
        %v2409 = vunpack.c.h.b16 %v2332
        %v2410 = vunpack.c.l.b16 %v2333
        %v2411 = vunpack.c.h.b16 %v2333
        %v2412 = vunpack.c.l.b16 %v2334
        %v2413 = vunpack.c.h.b16 %v2334
        %v2414 = vunpack.c.l.b16 %v2335
        %v2415 = vunpack.c.h.b16 %v2335
        %v2416 = vunpack.c.l.b16 %v2336
        %v2417 = vunpack.c.h.b16 %v2336
        %v2418 = vunpack.c.l.b16 %v2337
        %v2419 = vunpack.c.h.b16 %v2337
        %v2420 = vunpack.c.l.b16 %v2338
        %v2421 = vunpack.c.h.b16 %v2338
        %v2422 = vunpack.c.l.b16 %v2339
        %v2423 = vunpack.c.h.b16 %v2339
        %v2424 = vunpack.c.l.b16 %v2340
        %v2425 = vunpack.c.h.b16 %v2340
        %v2426 = vunpack.c.l.b16 %v2341
        %v2427 = vunpack.c.h.b16 %v2341
        %v2428 = vunpack.c.l.b16 %v2342
        %v2429 = vunpack.c.h.b16 %v2342
        %v2430 = vunpack.c.l.b16 %v2343
        %v2431 = vunpack.c.h.b16 %v2343
        %v2432 = vunpack.c.l.b16 %v2344
        %v2433 = vunpack.c.h.b16 %v2344
        %v2434 = vunpack.c.l.b16 %v2345
        %v2435 = vunpack.c.h.b16 %v2345
        %v2436 = vunpack.c.l.b16 %v2346
        %v2437 = vunpack.c.h.b16 %v2346
        %v2438 = vunpack.c.l.b16 %v2347
        %v2439 = vunpack.c.h.b16 %v2347
        %v2440 = vunpack.c.l.b16 %v2348
        %v2441 = vunpack.c.h.b16 %v2348
        %v2442 = vunpack.c.l.b16 %v2349
        %v2443 = vunpack.c.h.b16 %v2349
        %v2444 = vunpack.c.l.b16 %v2350
        %v2445 = vunpack.c.h.b16 %v2350
        %v2446 = vunpack.c.l.b16 %v2351
        %v2447 = vunpack.c.h.b16 %v2351
        %v2448 = vpack.c.b16 %v2388, %v2384
        %v2449 = vpack.c.b16 %v2389, %v2385
        %v2450 = vpack.c.b16 %v2390, %v2386
        %v2451 = vpack.c.b16 %v2391, %v2387
        %v2452 = vpack.c.b16 %v2396, %v2392
        %v2453 = vpack.c.b16 %v2397, %v2393
        %v2454 = vpack.c.b16 %v2398, %v2394
        %v2455 = vpack.c.b16 %v2399, %v2395
        %v2456 = vpack.c.b16 %v2404, %v2400
        %v2457 = vpack.c.b16 %v2405, %v2401
        %v2458 = vpack.c.b16 %v2406, %v2402
        %v2459 = vpack.c.b16 %v2407, %v2403
        %v2460 = vpack.c.b16 %v2412, %v2408
        %v2461 = vpack.c.b16 %v2413, %v2409
        %v2462 = vpack.c.b16 %v2414, %v2410
        %v2463 = vpack.c.b16 %v2415, %v2411
        %v2464 = vpack.c.b16 %v2420, %v2416
        %v2465 = vpack.c.b16 %v2421, %v2417
        %v2466 = vpack.c.b16 %v2422, %v2418
        %v2467 = vpack.c.b16 %v2423, %v2419
        %v2468 = vpack.c.b16 %v2428, %v2424
        %v2469 = vpack.c.b16 %v2429, %v2425
        %v2470 = vpack.c.b16 %v2430, %v2426
        %v2471 = vpack.c.b16 %v2431, %v2427
        %v2472 = vpack.c.b16 %v2436, %v2432
        %v2473 = vpack.c.b16 %v2437, %v2433
        %v2474 = vpack.c.b16 %v2438, %v2434
        %v2475 = vpack.c.b16 %v2439, %v2435
        %v2476 = vpack.c.b16 %v2444, %v2440
        %v2477 = vpack.c.b16 %v2445, %v2441
        %v2478 = vpack.c.b16 %v2446, %v2442
        %v2479 = vpack.c.b16 %v2447, %v2443
        %2512 = vmatpush.bf16.msra.mxu0 %v2476
        %2513 = vmatpush.bf16.msra.mxu0 %v2472
        %2514 = vmatpush.bf16.msra.mxu0 %v2468
        %2515 = vmatpush.bf16.msra.mxu0 %v2464
        %2516 = vmatpush.bf16.msra.mxu0 %v2460
        %2517 = vmatpush.bf16.msra.mxu0 %v2456
        %2518 = vmatpush.bf16.msra.mxu0 %v2452
        %2519 = vmatpush.bf16.msra.mxu0 %v2448
        %2520 = vmatmul.bf16.gmra.mxu0 %v2319
        %v2521 = vpop.f32.mrf.mxu0
        %v2522 = vadd.f32 0.0, %v2521
        %v2523 = vpop.f32.mrf.mxu0
        %2524 = vdwg.mxu0
        %2525 = vmatpush.bf16.msra.mxu0 %v2477
        %2526 = vmatpush.bf16.msra.mxu0 %v2473
        %2527 = vmatpush.bf16.msra.mxu0 %v2469
        %2528 = vmatpush.bf16.msra.mxu0 %v2465
        %2529 = vmatpush.bf16.msra.mxu0 %v2461
        %2530 = vmatpush.bf16.msra.mxu0 %v2457
        %2531 = vmatpush.bf16.msra.mxu0 %v2453
        %2532 = vmatpush.bf16.msra.mxu0 %v2449
        %2533 = vmatmul.bf16.gmra.mxu0 %v2319
        %v2534 = vpop.f32.mrf.mxu0
        %v2535 = vadd.f32 0.0, %v2534
        %v2536 = vpop.f32.mrf.mxu0
        %2537 = vdwg.mxu0
        %2538 = vmatpush.bf16.msra.mxu0 %v2478
        %2539 = vmatpush.bf16.msra.mxu0 %v2474
        %2540 = vmatpush.bf16.msra.mxu0 %v2470
        %2541 = vmatpush.bf16.msra.mxu0 %v2466
        %2542 = vmatpush.bf16.msra.mxu0 %v2462
        %2543 = vmatpush.bf16.msra.mxu0 %v2458
        %2544 = vmatpush.bf16.msra.mxu0 %v2454
        %2545 = vmatpush.bf16.msra.mxu0 %v2450
        %2546 = vmatmul.bf16.gmra.mxu0 %v2319
        %v2547 = vpop.f32.mrf.mxu0
        %v2548 = vadd.f32 0.0, %v2547
        %v2549 = vpop.f32.mrf.mxu0
        %2550 = vdwg.mxu0
        %2551 = vmatpush.bf16.msra.mxu0 %v2479
        %2552 = vmatpush.bf16.msra.mxu0 %v2475
        %2553 = vmatpush.bf16.msra.mxu0 %v2471
        %2554 = vmatpush.bf16.msra.mxu0 %v2467
        %2555 = vmatpush.bf16.msra.mxu0 %v2463
        %2556 = vmatpush.bf16.msra.mxu0 %v2459
        %2557 = vmatpush.bf16.msra.mxu0 %v2455
        %2558 = vmatpush.bf16.msra.mxu0 %v2451
        %2559 = vmatmul.bf16.gmra.mxu0 %v2319
        %v2560 = vpop.f32.mrf.mxu0
        %v2561 = vadd.f32 0.0, %v2560
        %v2562 = vpop.f32.mrf.mxu0
        %2563 = vdwg.mxu0
        %v2564 = vadd.f32 %v2315, %v2522
        %v2565 = vadd.f32 %v2316, %v2535
        %v2566 = vadd.f32 %v2317, %v2548
        %v2567 = vadd.f32 %v2318, %v2561
        %v2568 = vmul.f32 %v2564, 0.5
        %v2569 = vtanh.pop %v2568
        %v2570 = vmul.f32 %v2569, 0.5
        %v2571 = vadd.f32 %v2570, 0.5
        %v2572 = vmul.f32 %v2565, 0.5
        %v2573 = vtanh.pop %v2572
        %v2574 = vmul.f32 %v2573, 0.5
        %v2575 = vadd.f32 %v2574, 0.5
        %v2576 = vtanh.pop %v2566
        %v2577 = vmul.f32 %v2567, 0.5
        %v2578 = vtanh.pop %v2577
        %v2579 = vmul.f32 %v2578, 0.5
        %v2580 = vadd.f32 %v2579, 0.5
        %v2581 = vmul.f32 %v2575, %v2305
        %v2582 = vmul.f32 %v2571, %v2576
        %v2583 = vadd.f32 %v2581, %v2582
        %v2584 = vtanh.pop %v2583
        %v2585 = vmul.f32 %v2580, %v2584
        %s2586 = scalar_lea.vmem [#allocation2], 48
        %2587 = vst [vmem:[%s2586] sm:$0xff] %v2585
        %s2588 = scalar_lea.vmem %s4, 48
        %2589 = vst [vmem:[%s2588] sm:$0xff] %v2585
        %s2590 = smul.u32 7, 4
        %s2591 = smul.addr %s2590, 8
        %s2592 = scalar_lea.vmem [#allocation3], %s2591
        %v2593 = vld [vmem:[%s2592] sm:$0xff]
        %v2594 = vld [vmem:[%s2592 + $0x8] sm:$0xff]
        %v2595 = vld [vmem:[%s2592 + $0x10] sm:$0xff]
        %v2596 = vld [vmem:[%s2592 + $0x18] sm:$0xff]
        %v2597 = vpack.c.bf16 %v2585, %v2585
        %v2598 = vld [vmem:[%s230] sm:$0xff]
        %v2599 = vld [vmem:[%s230 + $0x8] sm:$0xff]
        %v2600 = vld [vmem:[%s230 + $0x10] sm:$0xff]
        %v2601 = vld [vmem:[%s230 + $0x18] sm:$0xff]
        %v2602 = vld [vmem:[%s230 + $0x20] sm:$0xff]
        %v2603 = vld [vmem:[%s230 + $0x28] sm:$0xff]
        %v2604 = vld [vmem:[%s230 + $0x30] sm:$0xff]
        %v2605 = vld [vmem:[%s230 + $0x38] sm:$0xff]
        %v2606 = vld [vmem:[%s230 + $0x40] sm:$0xff]
        %v2607 = vld [vmem:[%s230 + $0x48] sm:$0xff]
        %v2608 = vld [vmem:[%s230 + $0x50] sm:$0xff]
        %v2609 = vld [vmem:[%s230 + $0x58] sm:$0xff]
        %v2610 = vld [vmem:[%s230 + $0x60] sm:$0xff]
        %v2611 = vld [vmem:[%s230 + $0x68] sm:$0xff]
        %v2612 = vld [vmem:[%s230 + $0x70] sm:$0xff]
        %v2613 = vld [vmem:[%s230 + $0x78] sm:$0xff]
        %v2614 = vld [vmem:[%s230 + $0x80] sm:$0xff]
        %v2615 = vld [vmem:[%s230 + $0x88] sm:$0xff]
        %v2616 = vld [vmem:[%s230 + $0x90] sm:$0xff]
        %v2617 = vld [vmem:[%s230 + $0x98] sm:$0xff]
        %v2618 = vld [vmem:[%s230 + $0xa0] sm:$0xff]
        %v2619 = vld [vmem:[%s230 + $0xa8] sm:$0xff]
        %v2620 = vld [vmem:[%s230 + $0xb0] sm:$0xff]
        %v2621 = vld [vmem:[%s230 + $0xb8] sm:$0xff]
        %v2622 = vld [vmem:[%s230 + $0xc0] sm:$0xff]
        %v2623 = vld [vmem:[%s230 + $0xc8] sm:$0xff]
        %v2624 = vld [vmem:[%s230 + $0xd0] sm:$0xff]
        %v2625 = vld [vmem:[%s230 + $0xd8] sm:$0xff]
        %v2626 = vld [vmem:[%s230 + $0xe0] sm:$0xff]
        %v2627 = vld [vmem:[%s230 + $0xe8] sm:$0xff]
        %v2628 = vld [vmem:[%s230 + $0xf0] sm:$0xff]
        %v2629 = vld [vmem:[%s230 + $0xf8] sm:$0xff]
        %v2662 = vunpack.c.l.b16 %v2598
        %v2663 = vunpack.c.h.b16 %v2598
        %v2664 = vunpack.c.l.b16 %v2599
        %v2665 = vunpack.c.h.b16 %v2599
        %v2666 = vunpack.c.l.b16 %v2600
        %v2667 = vunpack.c.h.b16 %v2600
        %v2668 = vunpack.c.l.b16 %v2601
        %v2669 = vunpack.c.h.b16 %v2601
        %v2670 = vunpack.c.l.b16 %v2602
        %v2671 = vunpack.c.h.b16 %v2602
        %v2672 = vunpack.c.l.b16 %v2603
        %v2673 = vunpack.c.h.b16 %v2603
        %v2674 = vunpack.c.l.b16 %v2604
        %v2675 = vunpack.c.h.b16 %v2604
        %v2676 = vunpack.c.l.b16 %v2605
        %v2677 = vunpack.c.h.b16 %v2605
        %v2678 = vunpack.c.l.b16 %v2606
        %v2679 = vunpack.c.h.b16 %v2606
        %v2680 = vunpack.c.l.b16 %v2607
        %v2681 = vunpack.c.h.b16 %v2607
        %v2682 = vunpack.c.l.b16 %v2608
        %v2683 = vunpack.c.h.b16 %v2608
        %v2684 = vunpack.c.l.b16 %v2609
        %v2685 = vunpack.c.h.b16 %v2609
        %v2686 = vunpack.c.l.b16 %v2610
        %v2687 = vunpack.c.h.b16 %v2610
        %v2688 = vunpack.c.l.b16 %v2611
        %v2689 = vunpack.c.h.b16 %v2611
        %v2690 = vunpack.c.l.b16 %v2612
        %v2691 = vunpack.c.h.b16 %v2612
        %v2692 = vunpack.c.l.b16 %v2613
        %v2693 = vunpack.c.h.b16 %v2613
        %v2694 = vunpack.c.l.b16 %v2614
        %v2695 = vunpack.c.h.b16 %v2614
        %v2696 = vunpack.c.l.b16 %v2615
        %v2697 = vunpack.c.h.b16 %v2615
        %v2698 = vunpack.c.l.b16 %v2616
        %v2699 = vunpack.c.h.b16 %v2616
        %v2700 = vunpack.c.l.b16 %v2617
        %v2701 = vunpack.c.h.b16 %v2617
        %v2702 = vunpack.c.l.b16 %v2618
        %v2703 = vunpack.c.h.b16 %v2618
        %v2704 = vunpack.c.l.b16 %v2619
        %v2705 = vunpack.c.h.b16 %v2619
        %v2706 = vunpack.c.l.b16 %v2620
        %v2707 = vunpack.c.h.b16 %v2620
        %v2708 = vunpack.c.l.b16 %v2621
        %v2709 = vunpack.c.h.b16 %v2621
        %v2710 = vunpack.c.l.b16 %v2622
        %v2711 = vunpack.c.h.b16 %v2622
        %v2712 = vunpack.c.l.b16 %v2623
        %v2713 = vunpack.c.h.b16 %v2623
        %v2714 = vunpack.c.l.b16 %v2624
        %v2715 = vunpack.c.h.b16 %v2624
        %v2716 = vunpack.c.l.b16 %v2625
        %v2717 = vunpack.c.h.b16 %v2625
        %v2718 = vunpack.c.l.b16 %v2626
        %v2719 = vunpack.c.h.b16 %v2626
        %v2720 = vunpack.c.l.b16 %v2627
        %v2721 = vunpack.c.h.b16 %v2627
        %v2722 = vunpack.c.l.b16 %v2628
        %v2723 = vunpack.c.h.b16 %v2628
        %v2724 = vunpack.c.l.b16 %v2629
        %v2725 = vunpack.c.h.b16 %v2629
        %v2726 = vpack.c.b16 %v2666, %v2662
        %v2727 = vpack.c.b16 %v2667, %v2663
        %v2728 = vpack.c.b16 %v2668, %v2664
        %v2729 = vpack.c.b16 %v2669, %v2665
        %v2730 = vpack.c.b16 %v2674, %v2670
        %v2731 = vpack.c.b16 %v2675, %v2671
        %v2732 = vpack.c.b16 %v2676, %v2672
        %v2733 = vpack.c.b16 %v2677, %v2673
        %v2734 = vpack.c.b16 %v2682, %v2678
        %v2735 = vpack.c.b16 %v2683, %v2679
        %v2736 = vpack.c.b16 %v2684, %v2680
        %v2737 = vpack.c.b16 %v2685, %v2681
        %v2738 = vpack.c.b16 %v2690, %v2686
        %v2739 = vpack.c.b16 %v2691, %v2687
        %v2740 = vpack.c.b16 %v2692, %v2688
        %v2741 = vpack.c.b16 %v2693, %v2689
        %v2742 = vpack.c.b16 %v2698, %v2694
        %v2743 = vpack.c.b16 %v2699, %v2695
        %v2744 = vpack.c.b16 %v2700, %v2696
        %v2745 = vpack.c.b16 %v2701, %v2697
        %v2746 = vpack.c.b16 %v2706, %v2702
        %v2747 = vpack.c.b16 %v2707, %v2703
        %v2748 = vpack.c.b16 %v2708, %v2704
        %v2749 = vpack.c.b16 %v2709, %v2705
        %v2750 = vpack.c.b16 %v2714, %v2710
        %v2751 = vpack.c.b16 %v2715, %v2711
        %v2752 = vpack.c.b16 %v2716, %v2712
        %v2753 = vpack.c.b16 %v2717, %v2713
        %v2754 = vpack.c.b16 %v2722, %v2718
        %v2755 = vpack.c.b16 %v2723, %v2719
        %v2756 = vpack.c.b16 %v2724, %v2720
        %v2757 = vpack.c.b16 %v2725, %v2721
        %2790 = vmatpush.bf16.msra.mxu0 %v2754
        %2791 = vmatpush.bf16.msra.mxu0 %v2750
        %2792 = vmatpush.bf16.msra.mxu0 %v2746
        %2793 = vmatpush.bf16.msra.mxu0 %v2742
        %2794 = vmatpush.bf16.msra.mxu0 %v2738
        %2795 = vmatpush.bf16.msra.mxu0 %v2734
        %2796 = vmatpush.bf16.msra.mxu0 %v2730
        %2797 = vmatpush.bf16.msra.mxu0 %v2726
        %2798 = vmatmul.bf16.gmra.mxu0 %v2597
        %v2799 = vpop.f32.mrf.mxu0
        %v2800 = vadd.f32 0.0, %v2799
        %v2801 = vpop.f32.mrf.mxu0
        %2802 = vdwg.mxu0
        %2803 = vmatpush.bf16.msra.mxu0 %v2755
        %2804 = vmatpush.bf16.msra.mxu0 %v2751
        %2805 = vmatpush.bf16.msra.mxu0 %v2747
        %2806 = vmatpush.bf16.msra.mxu0 %v2743
        %2807 = vmatpush.bf16.msra.mxu0 %v2739
        %2808 = vmatpush.bf16.msra.mxu0 %v2735
        %2809 = vmatpush.bf16.msra.mxu0 %v2731
        %2810 = vmatpush.bf16.msra.mxu0 %v2727
        %2811 = vmatmul.bf16.gmra.mxu0 %v2597
        %v2812 = vpop.f32.mrf.mxu0
        %v2813 = vadd.f32 0.0, %v2812
        %v2814 = vpop.f32.mrf.mxu0
        %2815 = vdwg.mxu0
        %2816 = vmatpush.bf16.msra.mxu0 %v2756
        %2817 = vmatpush.bf16.msra.mxu0 %v2752
        %2818 = vmatpush.bf16.msra.mxu0 %v2748
        %2819 = vmatpush.bf16.msra.mxu0 %v2744
        %2820 = vmatpush.bf16.msra.mxu0 %v2740
        %2821 = vmatpush.bf16.msra.mxu0 %v2736
        %2822 = vmatpush.bf16.msra.mxu0 %v2732
        %2823 = vmatpush.bf16.msra.mxu0 %v2728
        %2824 = vmatmul.bf16.gmra.mxu0 %v2597
        %v2825 = vpop.f32.mrf.mxu0
        %v2826 = vadd.f32 0.0, %v2825
        %v2827 = vpop.f32.mrf.mxu0
        %2828 = vdwg.mxu0
        %2829 = vmatpush.bf16.msra.mxu0 %v2757
        %2830 = vmatpush.bf16.msra.mxu0 %v2753
        %2831 = vmatpush.bf16.msra.mxu0 %v2749
        %2832 = vmatpush.bf16.msra.mxu0 %v2745
        %2833 = vmatpush.bf16.msra.mxu0 %v2741
        %2834 = vmatpush.bf16.msra.mxu0 %v2737
        %2835 = vmatpush.bf16.msra.mxu0 %v2733
        %2836 = vmatpush.bf16.msra.mxu0 %v2729
        %2837 = vmatmul.bf16.gmra.mxu0 %v2597
        %v2838 = vpop.f32.mrf.mxu0
        %v2839 = vadd.f32 0.0, %v2838
        %v2840 = vpop.f32.mrf.mxu0
        %2841 = vdwg.mxu0
        %v2842 = vadd.f32 %v2593, %v2800
        %v2843 = vadd.f32 %v2594, %v2813
        %v2844 = vadd.f32 %v2595, %v2826
        %v2845 = vadd.f32 %v2596, %v2839
        %v2846 = vmul.f32 %v2842, 0.5
        %v2847 = vtanh.pop %v2846
        %v2848 = vmul.f32 %v2847, 0.5
        %v2849 = vadd.f32 %v2848, 0.5
        %v2850 = vmul.f32 %v2843, 0.5
        %v2851 = vtanh.pop %v2850
        %v2852 = vmul.f32 %v2851, 0.5
        %v2853 = vadd.f32 %v2852, 0.5
        %v2854 = vtanh.pop %v2844
        %v2855 = vmul.f32 %v2845, 0.5
        %v2856 = vtanh.pop %v2855
        %v2857 = vmul.f32 %v2856, 0.5
        %v2858 = vadd.f32 %v2857, 0.5
        %v2859 = vmul.f32 %v2853, %v2583
        %v2860 = vmul.f32 %v2849, %v2854
        %v2861 = vadd.f32 %v2859, %v2860
        %v2862 = vtanh.pop %v2861
        %v2863 = vmul.f32 %v2858, %v2862
        %s2864 = scalar_lea.vmem [#allocation2], 56
        %2865 = vst [vmem:[%s2864] sm:$0xff] %v2863
        %s2866 = scalar_lea.vmem %s4, 56
        %2867 = vst [vmem:[%s2866] sm:$0xff] %v2863
        %p2868 = scmp.eq.s32.totalorder %s21, 1
        // Predicated region
        $region49: #{lstm_autoencoder_forward.1} parent=35 // pred_check
          %p2869 = pneg %p2868
        $region50: #{lstm_autoencoder_forward.1} parent=35 // pred_check_branch
          %2871 = sbr.rel (%p2869) target = $region52
        $region51: #{lstm_autoencoder_forward.1} parent=35 // pred_region
          %v2872 = vld [vmem:[#allocation2] sm:$0xff]
          %v2873 = vld [vmem:[#allocation2 + $0x8] sm:$0xff]
          %v2874 = vld [vmem:[#allocation2 + $0x10] sm:$0xff]
          %v2875 = vld [vmem:[#allocation2 + $0x18] sm:$0xff]
          %v2876 = vld [vmem:[#allocation2 + $0x20] sm:$0xff]
          %v2877 = vld [vmem:[#allocation2 + $0x28] sm:$0xff]
          %v2878 = vld [vmem:[#allocation2 + $0x30] sm:$0xff]
          %v2879 = vld [vmem:[#allocation2 + $0x38] sm:$0xff]
          %v2880 = vtanh.pop %v2872
          %v2881 = vtanh.pop %v2873
          %v2882 = vtanh.pop %v2874
          %v2883 = vtanh.pop %v2875
          %v2884 = vtanh.pop %v2876
          %v2885 = vtanh.pop %v2877
          %v2886 = vtanh.pop %v2878
          %v2887 = vtanh.pop %v2879
          %2888 = vst [vmem:[#allocation2] sm:$0xff] %v2880
          %2889 = vst [vmem:[#allocation2 + $0x8] sm:$0xff] %v2881
          %2890 = vst [vmem:[#allocation2 + $0x10] sm:$0xff] %v2882
          %2891 = vst [vmem:[#allocation2 + $0x18] sm:$0xff] %v2883
          %2892 = vst [vmem:[#allocation2 + $0x20] sm:$0xff] %v2884
          %2893 = vst [vmem:[#allocation2 + $0x28] sm:$0xff] %v2885
          %2894 = vst [vmem:[#allocation2 + $0x30] sm:$0xff] %v2886
          %2895 = vst [vmem:[#allocation2 + $0x38] sm:$0xff] %v2887
        $region52: #{lstm_autoencoder_forward.1} parent=35 // pred_fallthru
          _
        // Predicated region
        $region53: #{lstm_autoencoder_forward.1} parent=35 // pred_check
          %p2896 = pneg %p133
        $region54: #{lstm_autoencoder_forward.1} parent=35 // pred_check_branch
          %2898 = sbr.rel (%p2896) target = $region56
        $region55: #{lstm_autoencoder_forward.1} parent=35 // pred_region
          _
        $region56: #{lstm_autoencoder_forward.1} parent=35 // pred_fallthru
          _
        // Predicated region
        $region57: #{lstm_autoencoder_forward.1} parent=35 // pred_check
          %p2899 = pneg %p133
        $region58: #{lstm_autoencoder_forward.1} parent=35 // pred_check_branch
          %2901 = sbr.rel (%p2899) target = $region60
        $region59: #{lstm_autoencoder_forward.1} parent=35 // pred_region
          _
        $region60: #{lstm_autoencoder_forward.1} parent=35 // pred_fallthru
          _
      $region36: #{lstm_autoencoder_forward.1} parent=5 // pred_fallthru
        _
      %p2902 = scmp.le.s32.totalorder 2, %s16
      // Predicated region
      $region61: #{lstm_autoencoder_forward.1} parent=5 // pred_check
        %p2903 = pneg %p2902
      $region62: #{lstm_autoencoder_forward.1} parent=5 // pred_check_branch
        %2905 = sbr.rel (%p2903) target = $region64
      $region63: #{lstm_autoencoder_forward.1} parent=5 // pred_region
        %s2906 = ssub.s32 %s16, 2
      $region64: #{lstm_autoencoder_forward.1} parent=5 // pred_fallthru
        _
    $region6: #{lstm_autoencoder_forward.1} parent=1 // loop_footer
      %s20 = sadd.s32 1, %s16
    $region7: #{lstm_autoencoder_forward.1} parent=1 // loop_footer_branch
      %15 = sbr.rel target = $region3
    $region8: #{lstm_autoencoder_forward.1} parent=1 // loop_exit
      _
    %2907 = vsyncpa [#allocation5], 1
    %s2908 = scalar_lea.sflag [#allocation5], 1
    %2909 = vsyncpa %s2908, 1
    %2910 = vsyncpa [#allocation7], 1
    %s2911 = scalar_lea.sflag [#allocation7], 1
    %2912 = vsyncpa %s2911, 1

</llo_original>
